<compile_context>
chip_gen: v7x
topology: tpu7x:2x2x1
jax: 0.10.0
libtpu: 0.0.40
codegen_flags: <defaults>
</compile_context>

<pallas_src>
import jax
import jax.numpy as jnp
from jax import lax
from jax.experimental import pallas as pl
from jax.experimental.pallas import tpu as pltpu

LANE = 128      # lane width; padded feature dims are multiples of this
SUBLANE = 8     # sublane width; padded batch is a multiple of this
MASK_NEG = -1e30


def _round_up(n, m):
    return ((n + m - 1) // m) * m


# ----------------------------------------------------------------------------- params
def init_params(key, input_size, hidden_size, output_size):
    """PyTorch-style nn.Linear init: U(-1/sqrt(fan_in), 1/sqrt(fan_in)).
    Weights stored transposed: [in_features, out_features] (so x @ W == torch x @ W.T)."""
    def linear(k, fan_in, fan_out):
        kw, kb = jax.random.split(k)
        bound = 1.0 / jnp.sqrt(fan_in)
        w_t = jax.random.uniform(kw, (fan_in, fan_out), jnp.float32, -bound, bound)
        b = jax.random.uniform(kb, (1, fan_out), jnp.float32, -bound, bound)
        return w_t, b

    k1, k2, k3 = jax.random.split(key, 3)
    w_i2h, b_i2h = linear(k1, input_size + hidden_size, hidden_size)
    w_i2o, b_i2o = linear(k2, input_size + hidden_size, output_size)
    w_o2o, b_o2o = linear(k3, hidden_size + output_size, output_size)
    return (w_i2h, b_i2h, w_i2o, b_i2o, w_o2o, b_o2o)


def pack_params(raw, input_size, hidden_size, output_size):
    """Host-side, one-time weight packing:
      - split the concatenated-input weights into per-source blocks (no in-kernel cat),
      - fuse i2h/i2o along the output axis: W1x [I, H|O], W1h [H, H|O], b1 [1, H|O],
      - stack o2o vertically so it consumes the fused [hidden|output] slab: W2 [(H|O), O],
      - zero-pad to lane-aligned shapes; bake the pad-column log-softmax mask into b2,
      - store the weight matrices as bf16 (biases stay f32; dots accumulate in f32).
    Fused-slab layout (padded): columns [0, H_pad) = hidden, [H_pad, H_pad+O_pad) = output.
    """
    (w_i2h, b_i2h, w_i2o, b_i2o, w_o2o, b_o2o) = raw
    I, H, O = input_size, hidden_size, output_size
    I_pad, H_pad, O_pad = _round_up(I, LANE), _round_up(H, LANE), _round_up(O, LANE)
    HO_pad = H_pad + O_pad

    wih_x, wih_h = w_i2h[:I], w_i2h[I:]
    wio_x, wio_h = w_i2o[:I], w_i2o[I:]
    woo_h, woo_o = w_o2o[:H], w_o2o[H:]

    W1x = jnp.zeros((I_pad, HO_pad), jnp.float32)
    W1x = W1x.at[:I, :H].set(wih_x).at[:I, H_pad:H_pad + O].set(wio_x)

    W1h = jnp.zeros((H_pad, HO_pad), jnp.float32)
    W1h = W1h.at[:H, :H].set(wih_h).at[:H, H_pad:H_pad + O].set(wio_h)

    b1 = jnp.zeros((1, HO_pad), jnp.float32)
    b1 = b1.at[:, :H].set(b_i2h).at[:, H_pad:H_pad + O].set(b_i2o)

    W2 = jnp.zeros((HO_pad, O_pad), jnp.float32)
    W2 = W2.at[:H, :O].set(woo_h).at[H_pad:H_pad + O, :O].set(woo_o)

    # Pad-column mask baked into the bias: padded logits become -1e30 so they exp() to 0
    # inside the log-softmax with no per-step iota/compare/select in the kernel.
    b2 = jnp.zeros((1, O_pad), jnp.float32)
    b2 = b2.at[:, :O].set(b_o2o).at[:, O:].set(MASK_NEG)

    # bf16 weight storage: 2x MXU throughput (v5e/v6e/v7x) + half resident-weight VMEM
    # (matters most on v7x's 64 MiB VMEM); f32 accumulation preserves accuracy.
    W1x = W1x.astype(jnp.bfloat16)
    W1h = W1h.astype(jnp.bfloat16)
    W2 = W2.astype(jnp.bfloat16)

    dims = dict(I=I, H=H, O=O, I_pad=I_pad, H_pad=H_pad, O_pad=O_pad, HO_pad=HO_pad)
    return (W1x, W1h, b1, W2, b2), dims


# ----------------------------------------------------------------------------- kernel
def rnn_forward_sequence(xs, h0, packed, dims, time_chunk=32):
    """xs: [T, B, I], h0: [B, H] -> (log_probs [T, B, O], final hidden [B, H]).
    Whole recurrence in a single pallas_call; grid iterates over time CHUNKS of TC steps."""
    (W1x, W1h, b1, W2, b2) = packed
    T, B, I = xs.shape
    H, O = dims["H"], dims["O"]
    I_pad, H_pad, O_pad, HO_pad = dims["I_pad"], dims["H_pad"], dims["O_pad"], dims["HO_pad"]
    Bp = _round_up(B, SUBLANE)

    TC = max(1, min(time_chunk, T))          # steps per grid iteration
    T_pad = _round_up(T, TC)
    n_chunks = T_pad // TC

    xs_p = jnp.zeros((T_pad, Bp, I_pad), jnp.float32).at[:T, :B, :I].set(xs)
    h0_p = jnp.zeros((Bp, H_pad), jnp.float32).at[:B, :H].set(h0)

    # Hoisted time-parallel input projection: one well-shaped matmul over the whole
    # sequence (bf16 operands, f32 accumulate) instead of a tiny M=Bp dot per step.
    xproj = (jnp.dot(xs_p.reshape(T_pad * Bp, I_pad).astype(jnp.bfloat16), W1x,
                     preferred_element_type=jnp.float32)
             + b1).reshape(T_pad, Bp, HO_pad)

    def kernel(xp_ref, h0_ref, w1h_ref, w2_ref, b2_ref, out_ref, hid_ref, h_scr):
        # load the initial hidden state into the VMEM scratch carry on the first chunk
        @pl.when(pl.program_id(0) == 0)
        def _():
            h_scr[...] = h0_ref[...]

        chunk_base = pl.program_id(0) * TC

        def step(s, h):
            # fused i2h + i2o: slab = [hidden | output]; x-projection was precomputed
            slab = xp_ref[s] + jnp.dot(h.astype(jnp.bfloat16), w1h_ref[...],
                                       preferred_element_type=jnp.float32)
            hidden = slab[:, :H_pad]                           # lane-aligned slice

            # o2o consumes the fused slab directly (padded rows of W2 are zero);
            # b2 already carries the -1e30 pad-column mask.
            out2 = jnp.dot(slab.astype(jnp.bfloat16), w2_ref[...],
                           preferred_element_type=jnp.float32) + b2_ref[...]

            # Dropout: identity in eval mode (deterministic forward).
            # LogSoftmax over dim=1 in f32 (pad columns exp() to 0 via the baked mask).
            m = jnp.max(out2, axis=1, keepdims=True)
            shifted = out2 - m
            lse = jnp.log(jnp.sum(jnp.exp(shifted), axis=1, keepdims=True))
            out_ref[s] = shifted - lse

            if T_pad == T:
                return hidden
            # freeze the carry on zero-padded tail steps (their outputs are sliced off)
            return jnp.where(chunk_base + s < T, hidden, h)

        h_fin = lax.fori_loop(0, TC, step, h_scr[...], unroll=True)
        h_scr[...] = h_fin                                     # carry across chunks

        # final-hidden store gated to the last grid step (constant-index output block)
        @pl.when(pl.program_id(0) == pl.num_programs(0) - 1)
        def _():
            hid_ref[...] = h_fin

    out_p, hid_p = pl.pallas_call(
        kernel,
        grid=(n_chunks,),
        in_specs=[
            pl.BlockSpec((TC, Bp, HO_pad), lambda i: (i, 0, 0)),   # xproj chunk (streamed)
            pl.BlockSpec((Bp, H_pad), lambda i: (0, 0)),           # h0 (read at chunk 0)
            pl.BlockSpec((H_pad, HO_pad), lambda i: (0, 0)),       # W1h bf16 (VMEM-resident)
            pl.BlockSpec((HO_pad, O_pad), lambda i: (0, 0)),       # W2  bf16 (VMEM-resident)
            pl.BlockSpec((1, O_pad), lambda i: (0, 0)),            # b2 f32 (mask baked in)
        ],
        out_specs=[
            pl.BlockSpec((TC, Bp, O_pad), lambda i: (i, 0, 0)),    # per-chunk log-probs
            pl.BlockSpec((Bp, H_pad), lambda i: (0, 0)),           # final hidden
        ],
        out_shape=(
            jax.ShapeDtypeStruct((T_pad, Bp, O_pad), jnp.float32),
            jax.ShapeDtypeStruct((Bp, H_pad), jnp.float32),
        ),
        scratch_shapes=[pltpu.VMEM((Bp, H_pad), jnp.float32)],     # hidden-state carry
        compiler_params=pltpu.CompilerParams(
            dimension_semantics=("arbitrary",),                    # time axis = recurrence
            vmem_limit_bytes=32 * 1024 * 1024,                     # headroom for bigger TC
        ),
    )(xproj, h0_p, W1h, W2, b2)

    return out_p[:T, :B, :O], hid_p[:B, :H]


def rnn_forward(x, h, packed, dims):
    """Single-step forward matching the PyTorch module signature: (x, h) -> (log_probs, hidden)."""
    out_seq, h_next = rnn_forward_sequence(x[None], h, packed, dims, time_chunk=1)
    return out_seq[0], h_next


# ----------------------------------------------------------------------------- main
if __name__ == "__main__":
    input_size, hidden_size, output_size = 16, 32, 8
    batch, seq_len = 2, 10

    key = jax.random.PRNGKey(0)
    kx, kp = jax.random.split(key)
    xs = jax.random.normal(kx, (seq_len, batch, input_size), jnp.float32)
    h0 = jnp.zeros((batch, hidden_size), jnp.float32)   # init_hidden(), broadcast to batch

    raw = init_params(kp, input_size, hidden_size, output_size)
    packed, dims = pack_params(raw, input_size, hidden_size, output_size)

    # time_chunk=8 so the demo exercises multi-chunk carry (grid=(2,)) AND the pad-step guard.
    out_seq, h_final = rnn_forward_sequence(xs, h0, packed, dims, time_chunk=8)
    jax.block_until_ready((out_seq, h_final))

    # --- Reference 1: pure-f32 module forward (PyTorch semantics; eval-mode dropout = identity).
    (w_i2h, b_i2h, w_i2o, b_i2o, w_o2o, b_o2o) = raw

    def ref_step(h, x):
        comb = jnp.concatenate([x, h], axis=1)
        hidden = comb @ w_i2h + b_i2h
        output = comb @ w_i2o + b_i2o
        comb2 = jnp.concatenate([hidden, output], axis=1)
        o = comb2 @ w_o2o + b_o2o
        return hidden, jax.nn.log_softmax(o, axis=1)

    h_ref = h0
    outs_ref = []
    for t in range(seq_len):
        h_ref, o_t = ref_step(h_ref, xs[t])
        outs_ref.append(o_t)
    outs_ref = jnp.stack(outs_ref)

    # bf16 matmul operands (f32 accumulate) => looser tolerance vs the pure-f32 reference.
    assert jnp.allclose(out_seq, outs_ref, atol=5e-2), "sequence output mismatch vs f32 reference"
    assert jnp.allclose(h_final, h_ref, atol=5e-2), "final hidden mismatch vs f32 reference"

    # --- Reference 2: emulate the kernel's bf16-operand math exactly (tight tolerance,
    #     validates BlockSpec/indexing/carry structure independent of bf16 rounding).
    (W1x, W1h, b1, W2, b2) = packed
    H_pad, I_pad = dims["H_pad"], dims["I_pad"]

    def ref_step_bf16(h_pad, x_pad):
        xp = jnp.dot(x_pad.astype(jnp.bfloat16), W1x, preferred_element_type=jnp.float32) + b1
        slab = xp + jnp.dot(h_pad.astype(jnp.bfloat16), W1h, preferred_element_type=jnp.float32)
        hidden = slab[:, :H_pad]
        o = jnp.dot(slab.astype(jnp.bfloat16), W2, preferred_element_type=jnp.float32) + b2
        return hidden, jax.nn.log_softmax(o, axis=1)

    hb = jnp.zeros((batch, H_pad), jnp.float32).at[:, :hidden_size].set(h0)
    outs_bf = []
    for t in range(seq_len):
        x_pad = jnp.zeros((batch, I_pad), jnp.float32).at[:, :input_size].set(xs[t])
        hb, o_t = ref_step_bf16(hb, x_pad)
        outs_bf.append(o_t[:, :output_size])
    outs_bf = jnp.stack(outs_bf)

    assert jnp.allclose(out_seq, outs_bf, atol=1e-3), "kernel mismatch vs bf16-exact reference"
    assert jnp.allclose(h_final, hb[:, :hidden_size], atol=1e-3), "hidden mismatch vs bf16 reference"

    # Single-step API (original module signature) sanity check.
    out1, h1 = rnn_forward(xs[0], h0, packed, dims)
    h1_ref, o1_ref = ref_step(h0, xs[0])
    assert jnp.allclose(out1, o1_ref, atol=5e-2), "single-step output mismatch"
    assert jnp.allclose(h1, h1_ref, atol=5e-2), "single-step hidden mismatch"

    print("KERNEL_OK")
</pallas_src>

<mosaic_0001>
module attributes {stable_mosaic.version = 11 : i64} {
  func.func @kernel(%arg0: i32, %arg1: memref<8x8x256xf32, #tpu.memory_space<vmem>>, %arg2: memref<8x128xf32, #tpu.memory_space<vmem>>, %arg3: memref<128x256xbf16, #tpu.memory_space<vmem>>, %arg4: memref<256x128xbf16, #tpu.memory_space<vmem>>, %arg5: memref<1x128xf32, #tpu.memory_space<vmem>>, %arg6: memref<8x8x128xf32, #tpu.memory_space<vmem>>, %arg7: memref<8x128xf32, #tpu.memory_space<vmem>>, %arg8: memref<8x128xf32, #tpu.memory_space<vmem>>) attributes {dimension_semantics = [#tpu.dimension_semantics<arbitrary>], iteration_bounds = array<i64: 2>, scalar_prefetch = 0 : i64, scratch_operands = 1 : i64, tpu.core_type = #tpu.core_type<tc>, window_params = [{transform_indices = @transform_0, window_bounds = array<i64: 8, 8, 256>}, {pipeline_mode = #tpu.pipeline_mode<synchronous>, transform_indices = @transform_1, window_bounds = array<i64: 8, 128>}, {pipeline_mode = #tpu.pipeline_mode<synchronous>, transform_indices = @transform_2, window_bounds = array<i64: 128, 256>}, {pipeline_mode = #tpu.pipeline_mode<synchronous>, transform_indices = @transform_3, window_bounds = array<i64: 256, 128>}, {pipeline_mode = #tpu.pipeline_mode<synchronous>, transform_indices = @transform_4, window_bounds = array<i64: 1, 128>}, {transform_indices = @transform_5, window_bounds = array<i64: 8, 8, 128>}, {pipeline_mode = #tpu.pipeline_mode<synchronous>, transform_indices = @transform_6, window_bounds = array<i64: 8, 128>}]} {
    %c0_i32 = arith.constant 0 : i32
    %0 = arith.cmpi eq, %arg0, %c0_i32 : i32
    %1 = arith.extui %0 : i1 to i32
    %c0_i32_0 = arith.constant 0 : i32
    %2 = arith.cmpi ne, %1, %c0_i32_0 : i32
    scf.if %2 {
      %c0_126 = arith.constant 0 : index
      %c0_127 = arith.constant 0 : index
      %257 = vector.load %arg2[%c0_126, %c0_127] : memref<8x128xf32, #tpu.memory_space<vmem>>, vector<8x128xf32>
      %c0_128 = arith.constant 0 : index
      %c0_129 = arith.constant 0 : index
      %258 = vector.load %arg8[%c0_128, %c0_129] : memref<8x128xf32, #tpu.memory_space<vmem>>, vector<8x128xf32>
      tpu.vector_store %arg8[%c0_128, %c0_129], %257 {strides = array<i32>} : memref<8x128xf32, #tpu.memory_space<vmem>>, vector<8x128xf32>,
    } else {
    }
    %c8_i32 = arith.constant 8 : i32
    %3 = arith.muli %arg0, %c8_i32 : i32
    %c0 = arith.constant 0 : index
    %c0_1 = arith.constant 0 : index
    %4 = vector.load %arg8[%c0, %c0_1] : memref<8x128xf32, #tpu.memory_space<vmem>>, vector<8x128xf32>
    %c0_i32_2 = arith.constant 0 : i32
    %5 = arith.index_cast %c0_i32_2 : i32 to index
    %c0_3 = arith.constant 0 : index
    %c0_4 = arith.constant 0 : index
    %6 = vector.load %arg1[%5, %c0_3, %c0_4] : memref<8x8x256xf32, #tpu.memory_space<vmem>>, vector<1x8x256xf32>
    %7 = vector.shape_cast %6 : vector<1x8x256xf32> to vector<8x256xf32>
    %8 = arith.truncf %4 : vector<8x128xf32> to vector<8x128xbf16>
    %c0_5 = arith.constant 0 : index
    %c0_6 = arith.constant 0 : index
    %9 = vector.load %arg3[%c0_5, %c0_6] : memref<128x256xbf16, #tpu.memory_space<vmem>>, vector<128x256xbf16>
    %cst = arith.constant dense<0.000000e+00> : vector<8x256xf32>
    %10 = tpu.matmul %8, %9, %cst {dimension_numbers = #tpu.dot_dimension_numbers<[1], [0], [0], [1], [0, 0, 1, 1], [], []>} : vector<8x128xbf16>, vector<128x256xbf16>, vector<8x256xf32> -> vector<8x256xf32>
    %11 = arith.addf %7, %10 : vector<8x256xf32>
    %12 = vector.extract_strided_slice %11 {offsets = [0, 0], sizes = [8, 128], strides = [1, 1]} : vector<8x256xf32> to vector<8x128xf32>
    %13 = arith.truncf %11 : vector<8x256xf32> to vector<8x256xbf16>
    %c0_7 = arith.constant 0 : index
    %c0_8 = arith.constant 0 : index
    %14 = vector.load %arg4[%c0_7, %c0_8] : memref<256x128xbf16, #tpu.memory_space<vmem>>, vector<256x128xbf16>
    %cst_9 = arith.constant dense<0.000000e+00> : vector<8x128xf32>
    %15 = tpu.matmul %13, %14, %cst_9 {dimension_numbers = #tpu.dot_dimension_numbers<[1], [0], [0], [1], [0, 0, 1, 1], [], []>} : vector<8x256xbf16>, vector<256x128xbf16>, vector<8x128xf32> -> vector<8x128xf32>
    %c0_10 = arith.constant 0 : index
    %c0_11 = arith.constant 0 : index
    %16 = vector.load %arg5[%c0_10, %c0_11] : memref<1x128xf32, #tpu.memory_space<vmem>>, vector<1x128xf32>
    %17 = vector.broadcast %16 : vector<1x128xf32> to vector<8x128xf32>
    %18 = arith.addf %15, %17 : vector<8x128xf32>
    %cst_12 = arith.constant dense<0xFF800000> : vector<8xf32>
    %19 = vector.multi_reduction <maximumf>, %18, %cst_12 [1] : vector<8x128xf32> to vector<8xf32>
    %20 = vector.shape_cast %19 : vector<8xf32> to vector<8x1xf32>
    %21 = vector.broadcast %20 : vector<8x1xf32> to vector<8x128xf32>
    %22 = arith.subf %18, %21 : vector<8x128xf32>
    %23 = math.exp %22 : vector<8x128xf32>
    %cst_13 = arith.constant dense<0.000000e+00> : vector<8xf32>
    %24 = vector.multi_reduction <add>, %23, %cst_13 [1] : vector<8x128xf32> to vector<8xf32>
    %25 = vector.shape_cast %24 : vector<8xf32> to vector<8x1xf32>
    %26 = math.log %25 : vector<8x1xf32>
    %27 = vector.broadcast %26 : vector<8x1xf32> to vector<8x128xf32>
    %28 = arith.subf %22, %27 : vector<8x128xf32>
    %29 = arith.index_cast %c0_i32_2 : i32 to index
    %c0_14 = arith.constant 0 : index
    %c0_15 = arith.constant 0 : index
    %30 = vector.load %arg6[%29, %c0_14, %c0_15] : memref<8x8x128xf32, #tpu.memory_space<vmem>>, vector<1x8x128xf32>
    %31 = vector.shape_cast %30 : vector<1x8x128xf32> to vector<8x128xf32>
    %32 = vector.shape_cast %28 : vector<8x128xf32> to vector<1x8x128xf32>
    tpu.vector_store %arg6[%29, %c0_14, %c0_15], %32 {strides = array<i32>} : memref<8x8x128xf32, #tpu.memory_space<vmem>>, vector<1x8x128xf32>,
    %33 = arith.addi %3, %c0_i32_2 : i32
    %c10_i32 = arith.constant 10 : i32
    %34 = arith.cmpi slt, %33, %c10_i32 : i32
    %35 = arith.select %34, %12, %4 : vector<8x128xf32>
    %c1_i32 = arith.constant 1 : i32
    %36 = arith.index_cast %c1_i32 : i32 to index
    %c0_16 = arith.constant 0 : index
    %c0_17 = arith.constant 0 : index
    %37 = vector.load %arg1[%36, %c0_16, %c0_17] : memref<8x8x256xf32, #tpu.memory_space<vmem>>, vector<1x8x256xf32>
    %38 = vector.shape_cast %37 : vector<1x8x256xf32> to vector<8x256xf32>
    %39 = arith.truncf %35 : vector<8x128xf32> to vector<8x128xbf16>
    %c0_18 = arith.constant 0 : index
    %c0_19 = arith.constant 0 : index
    %40 = vector.load %arg3[%c0_18, %c0_19] : memref<128x256xbf16, #tpu.memory_space<vmem>>, vector<128x256xbf16>
    %cst_20 = arith.constant dense<0.000000e+00> : vector<8x256xf32>
    %41 = tpu.matmul %39, %40, %cst_20 {dimension_numbers = #tpu.dot_dimension_numbers<[1], [0], [0], [1], [0, 0, 1, 1], [], []>} : vector<8x128xbf16>, vector<128x256xbf16>, vector<8x256xf32> -> vector<8x256xf32>
    %42 = arith.addf %38, %41 : vector<8x256xf32>
    %43 = vector.extract_strided_slice %42 {offsets = [0, 0], sizes = [8, 128], strides = [1, 1]} : vector<8x256xf32> to vector<8x128xf32>
    %44 = arith.truncf %42 : vector<8x256xf32> to vector<8x256xbf16>
    %c0_21 = arith.constant 0 : index
    %c0_22 = arith.constant 0 : index
    %45 = vector.load %arg4[%c0_21, %c0_22] : memref<256x128xbf16, #tpu.memory_space<vmem>>, vector<256x128xbf16>
    %cst_23 = arith.constant dense<0.000000e+00> : vector<8x128xf32>
    %46 = tpu.matmul %44, %45, %cst_23 {dimension_numbers = #tpu.dot_dimension_numbers<[1], [0], [0], [1], [0, 0, 1, 1], [], []>} : vector<8x256xbf16>, vector<256x128xbf16>, vector<8x128xf32> -> vector<8x128xf32>
    %c0_24 = arith.constant 0 : index
    %c0_25 = arith.constant 0 : index
    %47 = vector.load %arg5[%c0_24, %c0_25] : memref<1x128xf32, #tpu.memory_space<vmem>>, vector<1x128xf32>
    %48 = vector.broadcast %47 : vector<1x128xf32> to vector<8x128xf32>
    %49 = arith.addf %46, %48 : vector<8x128xf32>
    %cst_26 = arith.constant dense<0xFF800000> : vector<8xf32>
    %50 = vector.multi_reduction <maximumf>, %49, %cst_26 [1] : vector<8x128xf32> to vector<8xf32>
    %51 = vector.shape_cast %50 : vector<8xf32> to vector<8x1xf32>
    %52 = vector.broadcast %51 : vector<8x1xf32> to vector<8x128xf32>
    %53 = arith.subf %49, %52 : vector<8x128xf32>
    %54 = math.exp %53 : vector<8x128xf32>
    %cst_27 = arith.constant dense<0.000000e+00> : vector<8xf32>
    %55 = vector.multi_reduction <add>, %54, %cst_27 [1] : vector<8x128xf32> to vector<8xf32>
    %56 = vector.shape_cast %55 : vector<8xf32> to vector<8x1xf32>
    %57 = math.log %56 : vector<8x1xf32>
    %58 = vector.broadcast %57 : vector<8x1xf32> to vector<8x128xf32>
    %59 = arith.subf %53, %58 : vector<8x128xf32>
    %60 = arith.index_cast %c1_i32 : i32 to index
    %c0_28 = arith.constant 0 : index
    %c0_29 = arith.constant 0 : index
    %61 = vector.load %arg6[%60, %c0_28, %c0_29] : memref<8x8x128xf32, #tpu.memory_space<vmem>>, vector<1x8x128xf32>
    %62 = vector.shape_cast %61 : vector<1x8x128xf32> to vector<8x128xf32>
    %63 = vector.shape_cast %59 : vector<8x128xf32> to vector<1x8x128xf32>
    tpu.vector_store %arg6[%60, %c0_28, %c0_29], %63 {strides = array<i32>} : memref<8x8x128xf32, #tpu.memory_space<vmem>>, vector<1x8x128xf32>,
    %64 = arith.addi %3, %c1_i32 : i32
    %c10_i32_30 = arith.constant 10 : i32
    %65 = arith.cmpi slt, %64, %c10_i32_30 : i32
    %66 = arith.select %65, %43, %35 : vector<8x128xf32>
    %c2_i32 = arith.constant 2 : i32
    %67 = arith.index_cast %c2_i32 : i32 to index
    %c0_31 = arith.constant 0 : index
    %c0_32 = arith.constant 0 : index
    %68 = vector.load %arg1[%67, %c0_31, %c0_32] : memref<8x8x256xf32, #tpu.memory_space<vmem>>, vector<1x8x256xf32>
    %69 = vector.shape_cast %68 : vector<1x8x256xf32> to vector<8x256xf32>
    %70 = arith.truncf %66 : vector<8x128xf32> to vector<8x128xbf16>
    %c0_33 = arith.constant 0 : index
    %c0_34 = arith.constant 0 : index
    %71 = vector.load %arg3[%c0_33, %c0_34] : memref<128x256xbf16, #tpu.memory_space<vmem>>, vector<128x256xbf16>
    %cst_35 = arith.constant dense<0.000000e+00> : vector<8x256xf32>
    %72 = tpu.matmul %70, %71, %cst_35 {dimension_numbers = #tpu.dot_dimension_numbers<[1], [0], [0], [1], [0, 0, 1, 1], [], []>} : vector<8x128xbf16>, vector<128x256xbf16>, vector<8x256xf32> -> vector<8x256xf32>
    %73 = arith.addf %69, %72 : vector<8x256xf32>
    %74 = vector.extract_strided_slice %73 {offsets = [0, 0], sizes = [8, 128], strides = [1, 1]} : vector<8x256xf32> to vector<8x128xf32>
    %75 = arith.truncf %73 : vector<8x256xf32> to vector<8x256xbf16>
    %c0_36 = arith.constant 0 : index
    %c0_37 = arith.constant 0 : index
    %76 = vector.load %arg4[%c0_36, %c0_37] : memref<256x128xbf16, #tpu.memory_space<vmem>>, vector<256x128xbf16>
    %cst_38 = arith.constant dense<0.000000e+00> : vector<8x128xf32>
    %77 = tpu.matmul %75, %76, %cst_38 {dimension_numbers = #tpu.dot_dimension_numbers<[1], [0], [0], [1], [0, 0, 1, 1], [], []>} : vector<8x256xbf16>, vector<256x128xbf16>, vector<8x128xf32> -> vector<8x128xf32>
    %c0_39 = arith.constant 0 : index
    %c0_40 = arith.constant 0 : index
    %78 = vector.load %arg5[%c0_39, %c0_40] : memref<1x128xf32, #tpu.memory_space<vmem>>, vector<1x128xf32>
    %79 = vector.broadcast %78 : vector<1x128xf32> to vector<8x128xf32>
    %80 = arith.addf %77, %79 : vector<8x128xf32>
    %cst_41 = arith.constant dense<0xFF800000> : vector<8xf32>
    %81 = vector.multi_reduction <maximumf>, %80, %cst_41 [1] : vector<8x128xf32> to vector<8xf32>
    %82 = vector.shape_cast %81 : vector<8xf32> to vector<8x1xf32>
    %83 = vector.broadcast %82 : vector<8x1xf32> to vector<8x128xf32>
    %84 = arith.subf %80, %83 : vector<8x128xf32>
    %85 = math.exp %84 : vector<8x128xf32>
    %cst_42 = arith.constant dense<0.000000e+00> : vector<8xf32>
    %86 = vector.multi_reduction <add>, %85, %cst_42 [1] : vector<8x128xf32> to vector<8xf32>
    %87 = vector.shape_cast %86 : vector<8xf32> to vector<8x1xf32>
    %88 = math.log %87 : vector<8x1xf32>
    %89 = vector.broadcast %88 : vector<8x1xf32> to vector<8x128xf32>
    %90 = arith.subf %84, %89 : vector<8x128xf32>
    %91 = arith.index_cast %c2_i32 : i32 to index
    %c0_43 = arith.constant 0 : index
    %c0_44 = arith.constant 0 : index
    %92 = vector.load %arg6[%91, %c0_43, %c0_44] : memref<8x8x128xf32, #tpu.memory_space<vmem>>, vector<1x8x128xf32>
    %93 = vector.shape_cast %92 : vector<1x8x128xf32> to vector<8x128xf32>
    %94 = vector.shape_cast %90 : vector<8x128xf32> to vector<1x8x128xf32>
    tpu.vector_store %arg6[%91, %c0_43, %c0_44], %94 {strides = array<i32>} : memref<8x8x128xf32, #tpu.memory_space<vmem>>, vector<1x8x128xf32>,
    %95 = arith.addi %3, %c2_i32 : i32
    %c10_i32_45 = arith.constant 10 : i32
    %96 = arith.cmpi slt, %95, %c10_i32_45 : i32
    %97 = arith.select %96, %74, %66 : vector<8x128xf32>
    %c3_i32 = arith.constant 3 : i32
    %98 = arith.index_cast %c3_i32 : i32 to index
    %c0_46 = arith.constant 0 : index
    %c0_47 = arith.constant 0 : index
    %99 = vector.load %arg1[%98, %c0_46, %c0_47] : memref<8x8x256xf32, #tpu.memory_space<vmem>>, vector<1x8x256xf32>
    %100 = vector.shape_cast %99 : vector<1x8x256xf32> to vector<8x256xf32>
    %101 = arith.truncf %97 : vector<8x128xf32> to vector<8x128xbf16>
    %c0_48 = arith.constant 0 : index
    %c0_49 = arith.constant 0 : index
    %102 = vector.load %arg3[%c0_48, %c0_49] : memref<128x256xbf16, #tpu.memory_space<vmem>>, vector<128x256xbf16>
    %cst_50 = arith.constant dense<0.000000e+00> : vector<8x256xf32>
    %103 = tpu.matmul %101, %102, %cst_50 {dimension_numbers = #tpu.dot_dimension_numbers<[1], [0], [0], [1], [0, 0, 1, 1], [], []>} : vector<8x128xbf16>, vector<128x256xbf16>, vector<8x256xf32> -> vector<8x256xf32>
    %104 = arith.addf %100, %103 : vector<8x256xf32>
    %105 = vector.extract_strided_slice %104 {offsets = [0, 0], sizes = [8, 128], strides = [1, 1]} : vector<8x256xf32> to vector<8x128xf32>
    %106 = arith.truncf %104 : vector<8x256xf32> to vector<8x256xbf16>
    %c0_51 = arith.constant 0 : index
    %c0_52 = arith.constant 0 : index
    %107 = vector.load %arg4[%c0_51, %c0_52] : memref<256x128xbf16, #tpu.memory_space<vmem>>, vector<256x128xbf16>
    %cst_53 = arith.constant dense<0.000000e+00> : vector<8x128xf32>
    %108 = tpu.matmul %106, %107, %cst_53 {dimension_numbers = #tpu.dot_dimension_numbers<[1], [0], [0], [1], [0, 0, 1, 1], [], []>} : vector<8x256xbf16>, vector<256x128xbf16>, vector<8x128xf32> -> vector<8x128xf32>
    %c0_54 = arith.constant 0 : index
    %c0_55 = arith.constant 0 : index
    %109 = vector.load %arg5[%c0_54, %c0_55] : memref<1x128xf32, #tpu.memory_space<vmem>>, vector<1x128xf32>
    %110 = vector.broadcast %109 : vector<1x128xf32> to vector<8x128xf32>
    %111 = arith.addf %108, %110 : vector<8x128xf32>
    %cst_56 = arith.constant dense<0xFF800000> : vector<8xf32>
    %112 = vector.multi_reduction <maximumf>, %111, %cst_56 [1] : vector<8x128xf32> to vector<8xf32>
    %113 = vector.shape_cast %112 : vector<8xf32> to vector<8x1xf32>
    %114 = vector.broadcast %113 : vector<8x1xf32> to vector<8x128xf32>
    %115 = arith.subf %111, %114 : vector<8x128xf32>
    %116 = math.exp %115 : vector<8x128xf32>
    %cst_57 = arith.constant dense<0.000000e+00> : vector<8xf32>
    %117 = vector.multi_reduction <add>, %116, %cst_57 [1] : vector<8x128xf32> to vector<8xf32>
    %118 = vector.shape_cast %117 : vector<8xf32> to vector<8x1xf32>
    %119 = math.log %118 : vector<8x1xf32>
    %120 = vector.broadcast %119 : vector<8x1xf32> to vector<8x128xf32>
    %121 = arith.subf %115, %120 : vector<8x128xf32>
    %122 = arith.index_cast %c3_i32 : i32 to index
    %c0_58 = arith.constant 0 : index
    %c0_59 = arith.constant 0 : index
    %123 = vector.load %arg6[%122, %c0_58, %c0_59] : memref<8x8x128xf32, #tpu.memory_space<vmem>>, vector<1x8x128xf32>
    %124 = vector.shape_cast %123 : vector<1x8x128xf32> to vector<8x128xf32>
    %125 = vector.shape_cast %121 : vector<8x128xf32> to vector<1x8x128xf32>
    tpu.vector_store %arg6[%122, %c0_58, %c0_59], %125 {strides = array<i32>} : memref<8x8x128xf32, #tpu.memory_space<vmem>>, vector<1x8x128xf32>,
    %126 = arith.addi %3, %c3_i32 : i32
    %c10_i32_60 = arith.constant 10 : i32
    %127 = arith.cmpi slt, %126, %c10_i32_60 : i32
    %128 = arith.select %127, %105, %97 : vector<8x128xf32>
    %c4_i32 = arith.constant 4 : i32
    %129 = arith.index_cast %c4_i32 : i32 to index
    %c0_61 = arith.constant 0 : index
    %c0_62 = arith.constant 0 : index
    %130 = vector.load %arg1[%129, %c0_61, %c0_62] : memref<8x8x256xf32, #tpu.memory_space<vmem>>, vector<1x8x256xf32>
    %131 = vector.shape_cast %130 : vector<1x8x256xf32> to vector<8x256xf32>
    %132 = arith.truncf %128 : vector<8x128xf32> to vector<8x128xbf16>
    %c0_63 = arith.constant 0 : index
    %c0_64 = arith.constant 0 : index
    %133 = vector.load %arg3[%c0_63, %c0_64] : memref<128x256xbf16, #tpu.memory_space<vmem>>, vector<128x256xbf16>
    %cst_65 = arith.constant dense<0.000000e+00> : vector<8x256xf32>
    %134 = tpu.matmul %132, %133, %cst_65 {dimension_numbers = #tpu.dot_dimension_numbers<[1], [0], [0], [1], [0, 0, 1, 1], [], []>} : vector<8x128xbf16>, vector<128x256xbf16>, vector<8x256xf32> -> vector<8x256xf32>
    %135 = arith.addf %131, %134 : vector<8x256xf32>
    %136 = vector.extract_strided_slice %135 {offsets = [0, 0], sizes = [8, 128], strides = [1, 1]} : vector<8x256xf32> to vector<8x128xf32>
    %137 = arith.truncf %135 : vector<8x256xf32> to vector<8x256xbf16>
    %c0_66 = arith.constant 0 : index
    %c0_67 = arith.constant 0 : index
    %138 = vector.load %arg4[%c0_66, %c0_67] : memref<256x128xbf16, #tpu.memory_space<vmem>>, vector<256x128xbf16>
    %cst_68 = arith.constant dense<0.000000e+00> : vector<8x128xf32>
    %139 = tpu.matmul %137, %138, %cst_68 {dimension_numbers = #tpu.dot_dimension_numbers<[1], [0], [0], [1], [0, 0, 1, 1], [], []>} : vector<8x256xbf16>, vector<256x128xbf16>, vector<8x128xf32> -> vector<8x128xf32>
    %c0_69 = arith.constant 0 : index
    %c0_70 = arith.constant 0 : index
    %140 = vector.load %arg5[%c0_69, %c0_70] : memref<1x128xf32, #tpu.memory_space<vmem>>, vector<1x128xf32>
    %141 = vector.broadcast %140 : vector<1x128xf32> to vector<8x128xf32>
    %142 = arith.addf %139, %141 : vector<8x128xf32>
    %cst_71 = arith.constant dense<0xFF800000> : vector<8xf32>
    %143 = vector.multi_reduction <maximumf>, %142, %cst_71 [1] : vector<8x128xf32> to vector<8xf32>
    %144 = vector.shape_cast %143 : vector<8xf32> to vector<8x1xf32>
    %145 = vector.broadcast %144 : vector<8x1xf32> to vector<8x128xf32>
    %146 = arith.subf %142, %145 : vector<8x128xf32>
    %147 = math.exp %146 : vector<8x128xf32>
    %cst_72 = arith.constant dense<0.000000e+00> : vector<8xf32>
    %148 = vector.multi_reduction <add>, %147, %cst_72 [1] : vector<8x128xf32> to vector<8xf32>
    %149 = vector.shape_cast %148 : vector<8xf32> to vector<8x1xf32>
    %150 = math.log %149 : vector<8x1xf32>
    %151 = vector.broadcast %150 : vector<8x1xf32> to vector<8x128xf32>
    %152 = arith.subf %146, %151 : vector<8x128xf32>
    %153 = arith.index_cast %c4_i32 : i32 to index
    %c0_73 = arith.constant 0 : index
    %c0_74 = arith.constant 0 : index
    %154 = vector.load %arg6[%153, %c0_73, %c0_74] : memref<8x8x128xf32, #tpu.memory_space<vmem>>, vector<1x8x128xf32>
    %155 = vector.shape_cast %154 : vector<1x8x128xf32> to vector<8x128xf32>
    %156 = vector.shape_cast %152 : vector<8x128xf32> to vector<1x8x128xf32>
    tpu.vector_store %arg6[%153, %c0_73, %c0_74], %156 {strides = array<i32>} : memref<8x8x128xf32, #tpu.memory_space<vmem>>, vector<1x8x128xf32>,
    %157 = arith.addi %3, %c4_i32 : i32
    %c10_i32_75 = arith.constant 10 : i32
    %158 = arith.cmpi slt, %157, %c10_i32_75 : i32
    %159 = arith.select %158, %136, %128 : vector<8x128xf32>
    %c5_i32 = arith.constant 5 : i32
    %160 = arith.index_cast %c5_i32 : i32 to index
    %c0_76 = arith.constant 0 : index
    %c0_77 = arith.constant 0 : index
    %161 = vector.load %arg1[%160, %c0_76, %c0_77] : memref<8x8x256xf32, #tpu.memory_space<vmem>>, vector<1x8x256xf32>
    %162 = vector.shape_cast %161 : vector<1x8x256xf32> to vector<8x256xf32>
    %163 = arith.truncf %159 : vector<8x128xf32> to vector<8x128xbf16>
    %c0_78 = arith.constant 0 : index
    %c0_79 = arith.constant 0 : index
    %164 = vector.load %arg3[%c0_78, %c0_79] : memref<128x256xbf16, #tpu.memory_space<vmem>>, vector<128x256xbf16>
    %cst_80 = arith.constant dense<0.000000e+00> : vector<8x256xf32>
    %165 = tpu.matmul %163, %164, %cst_80 {dimension_numbers = #tpu.dot_dimension_numbers<[1], [0], [0], [1], [0, 0, 1, 1], [], []>} : vector<8x128xbf16>, vector<128x256xbf16>, vector<8x256xf32> -> vector<8x256xf32>
    %166 = arith.addf %162, %165 : vector<8x256xf32>
    %167 = vector.extract_strided_slice %166 {offsets = [0, 0], sizes = [8, 128], strides = [1, 1]} : vector<8x256xf32> to vector<8x128xf32>
    %168 = arith.truncf %166 : vector<8x256xf32> to vector<8x256xbf16>
    %c0_81 = arith.constant 0 : index
    %c0_82 = arith.constant 0 : index
    %169 = vector.load %arg4[%c0_81, %c0_82] : memref<256x128xbf16, #tpu.memory_space<vmem>>, vector<256x128xbf16>
    %cst_83 = arith.constant dense<0.000000e+00> : vector<8x128xf32>
    %170 = tpu.matmul %168, %169, %cst_83 {dimension_numbers = #tpu.dot_dimension_numbers<[1], [0], [0], [1], [0, 0, 1, 1], [], []>} : vector<8x256xbf16>, vector<256x128xbf16>, vector<8x128xf32> -> vector<8x128xf32>
    %c0_84 = arith.constant 0 : index
    %c0_85 = arith.constant 0 : index
    %171 = vector.load %arg5[%c0_84, %c0_85] : memref<1x128xf32, #tpu.memory_space<vmem>>, vector<1x128xf32>
    %172 = vector.broadcast %171 : vector<1x128xf32> to vector<8x128xf32>
    %173 = arith.addf %170, %172 : vector<8x128xf32>
    %cst_86 = arith.constant dense<0xFF800000> : vector<8xf32>
    %174 = vector.multi_reduction <maximumf>, %173, %cst_86 [1] : vector<8x128xf32> to vector<8xf32>
    %175 = vector.shape_cast %174 : vector<8xf32> to vector<8x1xf32>
    %176 = vector.broadcast %175 : vector<8x1xf32> to vector<8x128xf32>
    %177 = arith.subf %173, %176 : vector<8x128xf32>
    %178 = math.exp %177 : vector<8x128xf32>
    %cst_87 = arith.constant dense<0.000000e+00> : vector<8xf32>
    %179 = vector.multi_reduction <add>, %178, %cst_87 [1] : vector<8x128xf32> to vector<8xf32>
    %180 = vector.shape_cast %179 : vector<8xf32> to vector<8x1xf32>
    %181 = math.log %180 : vector<8x1xf32>
    %182 = vector.broadcast %181 : vector<8x1xf32> to vector<8x128xf32>
    %183 = arith.subf %177, %182 : vector<8x128xf32>
    %184 = arith.index_cast %c5_i32 : i32 to index
    %c0_88 = arith.constant 0 : index
    %c0_89 = arith.constant 0 : index
    %185 = vector.load %arg6[%184, %c0_88, %c0_89] : memref<8x8x128xf32, #tpu.memory_space<vmem>>, vector<1x8x128xf32>
    %186 = vector.shape_cast %185 : vector<1x8x128xf32> to vector<8x128xf32>
    %187 = vector.shape_cast %183 : vector<8x128xf32> to vector<1x8x128xf32>
    tpu.vector_store %arg6[%184, %c0_88, %c0_89], %187 {strides = array<i32>} : memref<8x8x128xf32, #tpu.memory_space<vmem>>, vector<1x8x128xf32>,
    %188 = arith.addi %3, %c5_i32 : i32
    %c10_i32_90 = arith.constant 10 : i32
    %189 = arith.cmpi slt, %188, %c10_i32_90 : i32
    %190 = arith.select %189, %167, %159 : vector<8x128xf32>
    %c6_i32 = arith.constant 6 : i32
    %191 = arith.index_cast %c6_i32 : i32 to index
    %c0_91 = arith.constant 0 : index
    %c0_92 = arith.constant 0 : index
    %192 = vector.load %arg1[%191, %c0_91, %c0_92] : memref<8x8x256xf32, #tpu.memory_space<vmem>>, vector<1x8x256xf32>
    %193 = vector.shape_cast %192 : vector<1x8x256xf32> to vector<8x256xf32>
    %194 = arith.truncf %190 : vector<8x128xf32> to vector<8x128xbf16>
    %c0_93 = arith.constant 0 : index
    %c0_94 = arith.constant 0 : index
    %195 = vector.load %arg3[%c0_93, %c0_94] : memref<128x256xbf16, #tpu.memory_space<vmem>>, vector<128x256xbf16>
    %cst_95 = arith.constant dense<0.000000e+00> : vector<8x256xf32>
    %196 = tpu.matmul %194, %195, %cst_95 {dimension_numbers = #tpu.dot_dimension_numbers<[1], [0], [0], [1], [0, 0, 1, 1], [], []>} : vector<8x128xbf16>, vector<128x256xbf16>, vector<8x256xf32> -> vector<8x256xf32>
    %197 = arith.addf %193, %196 : vector<8x256xf32>
    %198 = vector.extract_strided_slice %197 {offsets = [0, 0], sizes = [8, 128], strides = [1, 1]} : vector<8x256xf32> to vector<8x128xf32>
    %199 = arith.truncf %197 : vector<8x256xf32> to vector<8x256xbf16>
    %c0_96 = arith.constant 0 : index
    %c0_97 = arith.constant 0 : index
    %200 = vector.load %arg4[%c0_96, %c0_97] : memref<256x128xbf16, #tpu.memory_space<vmem>>, vector<256x128xbf16>
    %cst_98 = arith.constant dense<0.000000e+00> : vector<8x128xf32>
    %201 = tpu.matmul %199, %200, %cst_98 {dimension_numbers = #tpu.dot_dimension_numbers<[1], [0], [0], [1], [0, 0, 1, 1], [], []>} : vector<8x256xbf16>, vector<256x128xbf16>, vector<8x128xf32> -> vector<8x128xf32>
    %c0_99 = arith.constant 0 : index
    %c0_100 = arith.constant 0 : index
    %202 = vector.load %arg5[%c0_99, %c0_100] : memref<1x128xf32, #tpu.memory_space<vmem>>, vector<1x128xf32>
    %203 = vector.broadcast %202 : vector<1x128xf32> to vector<8x128xf32>
    %204 = arith.addf %201, %203 : vector<8x128xf32>
    %cst_101 = arith.constant dense<0xFF800000> : vector<8xf32>
    %205 = vector.multi_reduction <maximumf>, %204, %cst_101 [1] : vector<8x128xf32> to vector<8xf32>
    %206 = vector.shape_cast %205 : vector<8xf32> to vector<8x1xf32>
    %207 = vector.broadcast %206 : vector<8x1xf32> to vector<8x128xf32>
    %208 = arith.subf %204, %207 : vector<8x128xf32>
    %209 = math.exp %208 : vector<8x128xf32>
    %cst_102 = arith.constant dense<0.000000e+00> : vector<8xf32>
    %210 = vector.multi_reduction <add>, %209, %cst_102 [1] : vector<8x128xf32> to vector<8xf32>
    %211 = vector.shape_cast %210 : vector<8xf32> to vector<8x1xf32>
    %212 = math.log %211 : vector<8x1xf32>
    %213 = vector.broadcast %212 : vector<8x1xf32> to vector<8x128xf32>
    %214 = arith.subf %208, %213 : vector<8x128xf32>
    %215 = arith.index_cast %c6_i32 : i32 to index
    %c0_103 = arith.constant 0 : index
    %c0_104 = arith.constant 0 : index
    %216 = vector.load %arg6[%215, %c0_103, %c0_104] : memref<8x8x128xf32, #tpu.memory_space<vmem>>, vector<1x8x128xf32>
    %217 = vector.shape_cast %216 : vector<1x8x128xf32> to vector<8x128xf32>
    %218 = vector.shape_cast %214 : vector<8x128xf32> to vector<1x8x128xf32>
    tpu.vector_store %arg6[%215, %c0_103, %c0_104], %218 {strides = array<i32>} : memref<8x8x128xf32, #tpu.memory_space<vmem>>, vector<1x8x128xf32>,
    %219 = arith.addi %3, %c6_i32 : i32
    %c10_i32_105 = arith.constant 10 : i32
    %220 = arith.cmpi slt, %219, %c10_i32_105 : i32
    %221 = arith.select %220, %198, %190 : vector<8x128xf32>
    %c7_i32 = arith.constant 7 : i32
    %222 = arith.index_cast %c7_i32 : i32 to index
    %c0_106 = arith.constant 0 : index
    %c0_107 = arith.constant 0 : index
    %223 = vector.load %arg1[%222, %c0_106, %c0_107] : memref<8x8x256xf32, #tpu.memory_space<vmem>>, vector<1x8x256xf32>
    %224 = vector.shape_cast %223 : vector<1x8x256xf32> to vector<8x256xf32>
    %225 = arith.truncf %221 : vector<8x128xf32> to vector<8x128xbf16>
    %c0_108 = arith.constant 0 : index
    %c0_109 = arith.constant 0 : index
    %226 = vector.load %arg3[%c0_108, %c0_109] : memref<128x256xbf16, #tpu.memory_space<vmem>>, vector<128x256xbf16>
    %cst_110 = arith.constant dense<0.000000e+00> : vector<8x256xf32>
    %227 = tpu.matmul %225, %226, %cst_110 {dimension_numbers = #tpu.dot_dimension_numbers<[1], [0], [0], [1], [0, 0, 1, 1], [], []>} : vector<8x128xbf16>, vector<128x256xbf16>, vector<8x256xf32> -> vector<8x256xf32>
    %228 = arith.addf %224, %227 : vector<8x256xf32>
    %229 = vector.extract_strided_slice %228 {offsets = [0, 0], sizes = [8, 128], strides = [1, 1]} : vector<8x256xf32> to vector<8x128xf32>
    %230 = arith.truncf %228 : vector<8x256xf32> to vector<8x256xbf16>
    %c0_111 = arith.constant 0 : index
    %c0_112 = arith.constant 0 : index
    %231 = vector.load %arg4[%c0_111, %c0_112] : memref<256x128xbf16, #tpu.memory_space<vmem>>, vector<256x128xbf16>
    %cst_113 = arith.constant dense<0.000000e+00> : vector<8x128xf32>
    %232 = tpu.matmul %230, %231, %cst_113 {dimension_numbers = #tpu.dot_dimension_numbers<[1], [0], [0], [1], [0, 0, 1, 1], [], []>} : vector<8x256xbf16>, vector<256x128xbf16>, vector<8x128xf32> -> vector<8x128xf32>
    %c0_114 = arith.constant 0 : index
    %c0_115 = arith.constant 0 : index
    %233 = vector.load %arg5[%c0_114, %c0_115] : memref<1x128xf32, #tpu.memory_space<vmem>>, vector<1x128xf32>
    %234 = vector.broadcast %233 : vector<1x128xf32> to vector<8x128xf32>
    %235 = arith.addf %232, %234 : vector<8x128xf32>
    %cst_116 = arith.constant dense<0xFF800000> : vector<8xf32>
    %236 = vector.multi_reduction <maximumf>, %235, %cst_116 [1] : vector<8x128xf32> to vector<8xf32>
    %237 = vector.shape_cast %236 : vector<8xf32> to vector<8x1xf32>
    %238 = vector.broadcast %237 : vector<8x1xf32> to vector<8x128xf32>
    %239 = arith.subf %235, %238 : vector<8x128xf32>
    %240 = math.exp %239 : vector<8x128xf32>
    %cst_117 = arith.constant dense<0.000000e+00> : vector<8xf32>
    %241 = vector.multi_reduction <add>, %240, %cst_117 [1] : vector<8x128xf32> to vector<8xf32>
    %242 = vector.shape_cast %241 : vector<8xf32> to vector<8x1xf32>
    %243 = math.log %242 : vector<8x1xf32>
    %244 = vector.broadcast %243 : vector<8x1xf32> to vector<8x128xf32>
    %245 = arith.subf %239, %244 : vector<8x128xf32>
    %246 = arith.index_cast %c7_i32 : i32 to index
    %c0_118 = arith.constant 0 : index
    %c0_119 = arith.constant 0 : index
    %247 = vector.load %arg6[%246, %c0_118, %c0_119] : memref<8x8x128xf32, #tpu.memory_space<vmem>>, vector<1x8x128xf32>
    %248 = vector.shape_cast %247 : vector<1x8x128xf32> to vector<8x128xf32>
    %249 = vector.shape_cast %245 : vector<8x128xf32> to vector<1x8x128xf32>
    tpu.vector_store %arg6[%246, %c0_118, %c0_119], %249 {strides = array<i32>} : memref<8x8x128xf32, #tpu.memory_space<vmem>>, vector<1x8x128xf32>,
    %250 = arith.addi %3, %c7_i32 : i32
    %c10_i32_120 = arith.constant 10 : i32
    %251 = arith.cmpi slt, %250, %c10_i32_120 : i32
    %252 = arith.select %251, %229, %221 : vector<8x128xf32>
    %c8_i32_121 = arith.constant 8 : i32
    %c0_122 = arith.constant 0 : index
    %c0_123 = arith.constant 0 : index
    %253 = vector.load %arg8[%c0_122, %c0_123] : memref<8x128xf32, #tpu.memory_space<vmem>>, vector<8x128xf32>
    tpu.vector_store %arg8[%c0_122, %c0_123], %252 {strides = array<i32>} : memref<8x128xf32, #tpu.memory_space<vmem>>, vector<8x128xf32>,
    %c1_i32_124 = arith.constant 1 : i32
    %254 = arith.cmpi eq, %arg0, %c1_i32_124 : i32
    %255 = arith.extui %254 : i1 to i32
    %c0_i32_125 = arith.constant 0 : i32
    %256 = arith.cmpi ne, %255, %c0_i32_125 : i32
    scf.if %256 {
      %c0_126 = arith.constant 0 : index
      %c0_127 = arith.constant 0 : index
      %257 = vector.load %arg7[%c0_126, %c0_127] : memref<8x128xf32, #tpu.memory_space<vmem>>, vector<8x128xf32>
      tpu.vector_store %arg7[%c0_126, %c0_127], %252 {strides = array<i32>} : memref<8x128xf32, #tpu.memory_space<vmem>>, vector<8x128xf32>,
    } else {
    }
    return
  }
  func.func @transform_0(%arg0: i32) -> (i32, i32, i32) {
    %c0_i32 = arith.constant 0 : i32
    %c0_i32_0 = arith.constant 0 : i32
    %c0_i32_1 = arith.constant 0 : i32
    return %arg0, %c0_i32, %c0_i32_0 : i32, i32, i32
  }
  func.func @transform_1(%arg0: i32) -> (i32, i32) {
    %c0_i32 = arith.constant 0 : i32
    %c0_i32_0 = arith.constant 0 : i32
    %c0_i32_1 = arith.constant 0 : i32
    return %c0_i32, %c0_i32_0 : i32, i32
  }
  func.func @transform_2(%arg0: i32) -> (i32, i32) {
    %c0_i32 = arith.constant 0 : i32
    %c0_i32_0 = arith.constant 0 : i32
    %c0_i32_1 = arith.constant 0 : i32
    return %c0_i32, %c0_i32_0 : i32, i32
  }
  func.func @transform_3(%arg0: i32) -> (i32, i32) {
    %c0_i32 = arith.constant 0 : i32
    %c0_i32_0 = arith.constant 0 : i32
    %c0_i32_1 = arith.constant 0 : i32
    return %c0_i32, %c0_i32_0 : i32, i32
  }
  func.func @transform_4(%arg0: i32) -> (i32, i32) {
    %c0_i32 = arith.constant 0 : i32
    %c0_i32_0 = arith.constant 0 : i32
    %c0_i32_1 = arith.constant 0 : i32
    return %c0_i32, %c0_i32_0 : i32, i32
  }
  func.func @transform_5(%arg0: i32) -> (i32, i32, i32) {
    %c0_i32 = arith.constant 0 : i32
    %c0_i32_0 = arith.constant 0 : i32
    %c0_i32_1 = arith.constant 0 : i32
    return %arg0, %c0_i32, %c0_i32_0 : i32, i32, i32
  }
  func.func @transform_6(%arg0: i32) -> (i32, i32) {
    %c0_i32 = arith.constant 0 : i32
    %c0_i32_0 = arith.constant 0 : i32
    %c0_i32_1 = arith.constant 0 : i32
    return %c0_i32, %c0_i32_0 : i32, i32
  }
}

</mosaic_0001>

<llo_original>
// kernel: tpu_custom_call.1
$region0: #{tpu_custom_call.1}
  #allocation0 [shape = 'u32[]', space=smem, size = 0x4, offset = 0x4, fixed_abs, tag = 'smem constant byte address 0x4 - core index']
  #allocation1 [shape = 'u32[144,128]{1,0:T(1,128)}', space=vmem, size = 0x12000, scoped, tag = 'internal scratch']
  #allocation2 [shape = 'f32[8,128]{1,0:T(8,128)}', space=vmem, size = 0x1000, scoped, tag = 'scratch operand']
  %s0 = inlined_call_operand.hbm [shape: f32[16,8,256], index: 0, kind: input, shape index: {}]
  %s1 = inlined_call_operand.hbm [shape: f32[8,128], index: 1, kind: input, shape index: {}]
  %s2 = inlined_call_operand.hbm [shape: bf16[128,256], index: 2, kind: input, shape index: {}]
  %s3 = inlined_call_operand.hbm [shape: bf16[256,128], index: 3, kind: input, shape index: {}]
  %s4 = inlined_call_operand.vmem [shape: f32[1,128], index: 4, kind: input, shape index: {}]
  %s5 = inlined_call_operand.hbm [shape: f32[16,8,128], index: 5, kind: output, shape index: {0}]
  %s6 = inlined_call_operand.hbm [shape: f32[8,128], index: 6, kind: output, shape index: {1}]
  %7 = xla_tuple %s5, %s6
  %s8 = sld [smem:[#allocation0]]
  $region85: #{tpu_custom_call.1} parent=0
    _
  %s10 = ssub.s32 1, %s8
  %s11 = scalar_select 0, %s10, %s8
  $region1: #{tpu_custom_call.1} parent=0
    #allocation3 [shape = 'u8[131072]{0}', space=vmem, size = 0x20000, scoped, tag = 'input window, operand 0']
    #allocation4 [shape = 's32[2]{0}', space=sflag, size = 0x8, scoped, tag = 'scoped memory for tpu_custom_call.1']
    #allocation5 [shape = 's32[2]{0}', space=sflag, size = 0x8, scoped, tag = 'scoped memory for tpu_custom_call.1']
    #allocation6 [shape = 'u8[4096]{0}', space=vmem, size = 0x1000, scoped, tag = 'input window, operand 1, single buffered']
    #allocation7 [shape = 's32[1]{0}', space=sflag, size = 0x4, scoped, tag = 'scoped memory for tpu_custom_call.1']
    #allocation8 [shape = 'u8[65536]{0}', space=vmem, size = 0x10000, scoped, tag = 'input window, operand 2, single buffered']
    #allocation9 [shape = 'u8[65536]{0}', space=vmem, size = 0x10000, scoped, tag = 'input window, operand 3, single buffered']
    #allocation10 [shape = 's32[1]{0}', space=sflag, size = 0x4, scoped, tag = 'scoped memory for tpu_custom_call.1']
    #allocation11 [shape = 'u8[65536]{0}', space=vmem, size = 0x10000, scoped, tag = 'output window, operand 0']
    #allocation12 [shape = 'u8[4096]{0}', space=vmem, size = 0x1000, scoped, tag = 'output window, operand 1, single buffered']
    #allocation13 [shape = 's32[1]{0}', space=sflag, size = 0x4, scoped, tag = 'scoped memory for tpu_custom_call.1']
    %12 = vsyncpa [#allocation4], 0
    %s13 = scalar_lea.sflag [#allocation4], 1
    %14 = vsyncpa %s13, 0
    %15 = vsyncpa [#allocation7], 0
    %16 = vsyncpa [#allocation10], 0
    %17 = vsyncpa [#allocation5], 0
    %s18 = scalar_lea.sflag [#allocation5], 1
    %19 = vsyncpa %s18, 0
    %20 = vsyncpa [#allocation13], 0
    loop: start=0, step=1, limit=4
    $region2: #{tpu_custom_call.1} parent=1 // loop_pre_header
      _
    $region3: #{tpu_custom_call.1} parent=1 // loop_header
      %s22 = sphi 0, %s26
      %p23 = scmp.ge.s32.totalorder %s22, 4
      %s32 = sphi 0, %s34
      %s35 = sphi 0, %s32
      %s36 = sphi 0, %s35
      %s52 = sphi 0, %s36
      %s56 = sphi 0, %s56
      %s58 = sphi 0, %s56
      %s59 = sphi 0, %s58
      %s73 = sphi 0, %s59
      %s77 = sphi 0, %s77
      %s79 = sphi 0, %s77
      %s80 = sphi 0, %s79
      %s94 = sphi 0, %s80
      %s98 = sphi 0, %s98
      %s100 = sphi 0, %s98
      %s101 = sphi 0, %s100
      %s115 = sphi 0, %s101
      %s119 = sphi 0, %s119
      %s121 = sphi 0, %s119
      %s122 = sphi 0, %s121
      %s136 = sphi 0, %s122
      %s142 = sphi 0, %s144
      %s145 = sphi 0, %s142
      %s146 = sphi 0, %s145
      %s162 = sphi 0, %s146
      %s166 = sphi 0, %s166
      %s168 = sphi 0, %s166
      %s169 = sphi 0, %s168
      %s183 = sphi 0, %s169
    $region4: #{tpu_custom_call.1} parent=1 // loop_header_branch
      %25 = sbr.rel (%p23) target = $region8
    $region5: #{tpu_custom_call.1} parent=1 // loop_body
      %s27 = ssub.s32 %s22, 1
      %s28 = ssub.s32 %s22, 2
      %s29 = sadd.s32 %s22, 1
      %s30 = ssub.s32 %s22, %s29
      %p31 = scmp.eq.s32.totalorder %s30, 0
      %s33 = sadd.s32 %s32, 1
      %s34 = scalar_select %p31, %s32, %s33
      %p37 = pneg %p31
      %p38 = scmp.eq.s32.totalorder %s22, 1
      %p39 = por %p37, %p38
      %p40 = scmp.ne.s32.totalorder %s32, %s35
      %p41 = scmp.eq.s32.totalorder %s22, 0
      %p42 = por %p40, %p41
      %p43 = scmp.ne.s32.totalorder %s32, %s35
      %p44 = scmp.eq.s32.totalorder %s27, 1
      %p45 = por %p43, %p44
      %p46 = scmp.ne.s32.totalorder %s35, %s36
      %p47 = scmp.eq.s32.totalorder %s27, 0
      %p48 = por %p46, %p47
      %p49 = scmp.ne.s32.totalorder %s35, %s36
      %p50 = scmp.eq.s32.totalorder %s28, 1
      %p51 = por %p49, %p50
      %p53 = scmp.ne.s32.totalorder %s36, %s52
      %p54 = scmp.eq.s32.totalorder %s28, 0
      %p55 = por %p53, %p54
      %s57 = sadd.s32 %s56, 1
      %p60 = scmp.eq.s32.totalorder %s22, 1
      %p61 = scmp.ne.s32.totalorder %s56, %s58
      %p62 = scmp.eq.s32.totalorder %s22, 0
      %p63 = por %p61, %p62
      %p64 = scmp.ne.s32.totalorder %s56, %s58
      %p65 = scmp.eq.s32.totalorder %s27, 1
      %p66 = por %p64, %p65
      %p67 = scmp.ne.s32.totalorder %s58, %s59
      %p68 = scmp.eq.s32.totalorder %s27, 0
      %p69 = por %p67, %p68
      %p70 = scmp.ne.s32.totalorder %s58, %s59
      %p71 = scmp.eq.s32.totalorder %s28, 1
      %p72 = por %p70, %p71
      %p74 = scmp.ne.s32.totalorder %s59, %s73
      %p75 = scmp.eq.s32.totalorder %s28, 0
      %p76 = por %p74, %p75
      %s78 = sadd.s32 %s77, 1
      %p81 = scmp.eq.s32.totalorder %s22, 1
      %p82 = scmp.ne.s32.totalorder %s77, %s79
      %p83 = scmp.eq.s32.totalorder %s22, 0
      %p84 = por %p82, %p83
      %p85 = scmp.ne.s32.totalorder %s77, %s79
      %p86 = scmp.eq.s32.totalorder %s27, 1
      %p87 = por %p85, %p86
      %p88 = scmp.ne.s32.totalorder %s79, %s80
      %p89 = scmp.eq.s32.totalorder %s27, 0
      %p90 = por %p88, %p89
      %p91 = scmp.ne.s32.totalorder %s79, %s80
      %p92 = scmp.eq.s32.totalorder %s28, 1
      %p93 = por %p91, %p92
      %p95 = scmp.ne.s32.totalorder %s80, %s94
      %p96 = scmp.eq.s32.totalorder %s28, 0
      %p97 = por %p95, %p96
      %s99 = sadd.s32 %s98, 1
      %p102 = scmp.eq.s32.totalorder %s22, 1
      %p103 = scmp.ne.s32.totalorder %s98, %s100
      %p104 = scmp.eq.s32.totalorder %s22, 0
      %p105 = por %p103, %p104
      %p106 = scmp.ne.s32.totalorder %s98, %s100
      %p107 = scmp.eq.s32.totalorder %s27, 1
      %p108 = por %p106, %p107
      %p109 = scmp.ne.s32.totalorder %s100, %s101
      %p110 = scmp.eq.s32.totalorder %s27, 0
      %p111 = por %p109, %p110
      %p112 = scmp.ne.s32.totalorder %s100, %s101
      %p113 = scmp.eq.s32.totalorder %s28, 1
      %p114 = por %p112, %p113
      %p116 = scmp.ne.s32.totalorder %s101, %s115
      %p117 = scmp.eq.s32.totalorder %s28, 0
      %p118 = por %p116, %p117
      %s120 = sadd.s32 %s119, 1
      %p123 = scmp.eq.s32.totalorder %s22, 1
      %p124 = scmp.ne.s32.totalorder %s119, %s121
      %p125 = scmp.eq.s32.totalorder %s22, 0
      %p126 = por %p124, %p125
      %p127 = scmp.ne.s32.totalorder %s119, %s121
      %p128 = scmp.eq.s32.totalorder %s27, 1
      %p129 = por %p127, %p128
      %p130 = scmp.ne.s32.totalorder %s121, %s122
      %p131 = scmp.eq.s32.totalorder %s27, 0
      %p132 = por %p130, %p131
      %p133 = scmp.ne.s32.totalorder %s121, %s122
      %p134 = scmp.eq.s32.totalorder %s28, 1
      %p135 = por %p133, %p134
      %p137 = scmp.ne.s32.totalorder %s122, %s136
      %p138 = scmp.eq.s32.totalorder %s28, 0
      %p139 = por %p137, %p138
      %s140 = ssub.s32 %s22, %s29
      %p141 = scmp.eq.s32.totalorder %s140, 0
      %s143 = sadd.s32 %s142, 1
      %s144 = scalar_select %p141, %s142, %s143
      %p147 = pneg %p141
      %p148 = scmp.eq.s32.totalorder %s22, 1
      %p149 = por %p147, %p148
      %p150 = scmp.ne.s32.totalorder %s142, %s145
      %p151 = scmp.eq.s32.totalorder %s22, 0
      %p152 = por %p150, %p151
      %p153 = scmp.ne.s32.totalorder %s142, %s145
      %p154 = scmp.eq.s32.totalorder %s27, 1
      %p155 = por %p153, %p154
      %p156 = scmp.ne.s32.totalorder %s145, %s146
      %p157 = scmp.eq.s32.totalorder %s27, 0
      %p158 = por %p156, %p157
      %p159 = scmp.ne.s32.totalorder %s145, %s146
      %p160 = scmp.eq.s32.totalorder %s28, 1
      %p161 = por %p159, %p160
      %p163 = scmp.ne.s32.totalorder %s146, %s162
      %p164 = scmp.eq.s32.totalorder %s28, 0
      %p165 = por %p163, %p164
      %s167 = sadd.s32 %s166, 1
      %p170 = scmp.eq.s32.totalorder %s22, 1
      %p171 = scmp.ne.s32.totalorder %s166, %s168
      %p172 = scmp.eq.s32.totalorder %s22, 0
      %p173 = por %p171, %p172
      %p174 = scmp.ne.s32.totalorder %s166, %s168
      %p175 = scmp.eq.s32.totalorder %s27, 1
      %p176 = por %p174, %p175
      %p177 = scmp.ne.s32.totalorder %s168, %s169
      %p178 = scmp.eq.s32.totalorder %s27, 0
      %p179 = por %p177, %p178
      %p180 = scmp.ne.s32.totalorder %s168, %s169
      %p181 = scmp.eq.s32.totalorder %s28, 1
      %p182 = por %p180, %p181
      %p184 = scmp.ne.s32.totalorder %s169, %s183
      %p185 = scmp.eq.s32.totalorder %s28, 0
      %p186 = por %p184, %p185
      %p187 = scmp.le.s32.totalorder 1, %s22
      %p188 = scmp.lt.s32.totalorder %s22, 3
      %p189 = pnand %p187, %p188
      %p190 = pneg %p189
      // Predicated region
      $region9: #{tpu_custom_call.1} parent=5 // pred_check
        _
      $region10: #{tpu_custom_call.1} parent=5 // pred_check_branch
        %192 = sbr.rel (%p189) target = $region12
      $region11: #{tpu_custom_call.1} parent=5 // pred_region
        %s193 = ssub.s32 %s22, 1
        // Predicated region
        $region13: #{tpu_custom_call.1} parent=11 // pred_check
          %p194 = pneg %p69
        $region14: #{tpu_custom_call.1} parent=11 // pred_check_branch
          %196 = sbr.rel (%p194) target = $region16
        $region15: #{tpu_custom_call.1} parent=11 // pred_region
          %s198 = ssub.s32 128, 128
          %199 = vsyncadd [#allocation7], %s198
          %s201 = sshll.u32 [#allocation6], 4
          %s202 = int_to_ptr.vmem [resolvable:$true] %s201
          %204 = dma.hbm_to_vmem [thread:$0]  %s1, 128, %s202, [#allocation7]
        $region16: #{tpu_custom_call.1} parent=11 // pred_fallthru
          _
        // Predicated region
        $region17: #{tpu_custom_call.1} parent=11 // pred_check
          %p205 = pneg %p90
        $region18: #{tpu_custom_call.1} parent=11 // pred_check_branch
          %207 = sbr.rel (%p205) target = $region20
        $region19: #{tpu_custom_call.1} parent=11 // pred_region
          %s209 = ssub.s32 2048, 2048
          %210 = vsyncadd [#allocation7], %s209
          %s211 = sshll.u32 [#allocation8], 4
          %s212 = int_to_ptr.vmem [resolvable:$true] %s211
          %217 = dma.hbm_to_vmem [thread:$0]  %s2, 2048, %s212, [#allocation7], 128, 128, 8
        $region20: #{tpu_custom_call.1} parent=11 // pred_fallthru
          _
        // Predicated region
        $region21: #{tpu_custom_call.1} parent=11 // pred_check
          %p218 = pneg %p111
        $region22: #{tpu_custom_call.1} parent=11 // pred_check_branch
          %220 = sbr.rel (%p218) target = $region24
        $region23: #{tpu_custom_call.1} parent=11 // pred_region
          %s222 = ssub.s32 2048, 2048
          %223 = vsyncadd [#allocation10], %s222
          %s224 = sshll.u32 [#allocation9], 4
          %s225 = int_to_ptr.vmem [resolvable:$true] %s224
          %230 = dma.hbm_to_vmem [thread:$0]  %s3, 2048, %s225, [#allocation10], 64, 64, 4
        $region24: #{tpu_custom_call.1} parent=11 // pred_fallthru
          _
        // Predicated region
        $region25: #{tpu_custom_call.1} parent=11 // pred_check
          %p231 = pneg %p132
        $region26: #{tpu_custom_call.1} parent=11 // pred_check_branch
          %233 = sbr.rel (%p231) target = $region28
        $region27: #{tpu_custom_call.1} parent=11 // pred_region
          _
        $region28: #{tpu_custom_call.1} parent=11 // pred_fallthru
          _
      $region12: #{tpu_custom_call.1} parent=5 // pred_fallthru
        _
      %p234 = scmp.lt.s32.totalorder %s22, 2
      // Predicated region
      $region29: #{tpu_custom_call.1} parent=5 // pred_check
        %p235 = pneg %p234
      $region30: #{tpu_custom_call.1} parent=5 // pred_check_branch
        %237 = sbr.rel (%p235) target = $region32
      $region31: #{tpu_custom_call.1} parent=5 // pred_region
        // Predicated region
        $region33: #{tpu_custom_call.1} parent=31 // pred_check
          %p238 = pneg %p42
        $region34: #{tpu_custom_call.1} parent=31 // pred_check_branch
          %240 = sbr.rel (%p238) target = $region36
        $region35: #{tpu_custom_call.1} parent=31 // pred_region
          %s241 = sand.u32 %s32, 1
          %s242 = scalar_lea.sflag [#allocation4], %s241
          %s243 = sand.u32 %s32, 1
          %s244 = smul.addr %s243, 128
          %s245 = scalar_lea.vmem [#allocation3], %s244
          %s246 = smul.u32 8, %s22
          %s248 = ssub.s32 2048, 2048
          %249 = vsyncadd %s242, %s248
          %s250 = smul.addr %s246, 2
          %s251 = smul.addr %s250, 128
          %s252 = scalar_lea.hbm %s0, %s251
          %s253 = sshll.u32 %s245, 4
          %s254 = int_to_ptr.vmem [resolvable:$true] %s253
          %259 = dma.hbm_to_vmem [thread:$0]  %s252, 2048, %s254, %s242, 256, 256, 16
        $region36: #{tpu_custom_call.1} parent=31 // pred_fallthru
          _
      $region32: #{tpu_custom_call.1} parent=5 // pred_fallthru
        _
      %p260 = scmp.le.s32.totalorder 1, %s22
      %p261 = scmp.lt.s32.totalorder %s22, 3
      %p262 = pnand %p260, %p261
      %p263 = pneg %p262
      // Predicated region
      $region37: #{tpu_custom_call.1} parent=5 // pred_check
        _
      $region38: #{tpu_custom_call.1} parent=5 // pred_check_branch
        %265 = sbr.rel (%p262) target = $region40
      $region39: #{tpu_custom_call.1} parent=5 // pred_region
        %s266 = ssub.s32 %s22, 1
        %s267 = sand.u32 %s35, 1
        %s268 = scalar_lea.sflag [#allocation4], %s267
        %s269 = sand.u32 %s35, 1
        %s270 = smul.addr %s269, 128
        %s271 = scalar_lea.vmem [#allocation3], %s270
        // Predicated region
        $region41: #{tpu_custom_call.1} parent=39 // pred_check
          %p272 = pneg %p48
        $region42: #{tpu_custom_call.1} parent=39 // pred_check_branch
          %274 = sbr.rel (%p272) target = $region44
        $region43: #{tpu_custom_call.1} parent=39 // pred_region
          %275 = dma.done %s268, 2048
        $region44: #{tpu_custom_call.1} parent=39 // pred_fallthru
          _
        // Predicated region
        $region45: #{tpu_custom_call.1} parent=39 // pred_check
          %p276 = pneg %p69
        $region46: #{tpu_custom_call.1} parent=39 // pred_check_branch
          %278 = sbr.rel (%p276) target = $region48
        $region47: #{tpu_custom_call.1} parent=39 // pred_region
          %279 = dma.done [#allocation7], 128
        $region48: #{tpu_custom_call.1} parent=39 // pred_fallthru
          _
        // Predicated region
        $region49: #{tpu_custom_call.1} parent=39 // pred_check
          %p280 = pneg %p90
        $region50: #{tpu_custom_call.1} parent=39 // pred_check_branch
          %282 = sbr.rel (%p280) target = $region52
        $region51: #{tpu_custom_call.1} parent=39 // pred_region
          %283 = dma.done [#allocation7], 2048
        $region52: #{tpu_custom_call.1} parent=39 // pred_fallthru
          _
        // Predicated region
        $region53: #{tpu_custom_call.1} parent=39 // pred_check
          %p284 = pneg %p111
        $region54: #{tpu_custom_call.1} parent=39 // pred_check_branch
          %286 = sbr.rel (%p284) target = $region56
        $region55: #{tpu_custom_call.1} parent=39 // pred_region
          %287 = dma.done [#allocation10], 2048
        $region56: #{tpu_custom_call.1} parent=39 // pred_fallthru
          _
        %s288 = sand.u32 %s35, 1
        %s289 = scalar_lea.sflag [#allocation4], %s288
        %s290 = sand.u32 %s35, 1
        %s291 = smul.addr %s290, 128
        %s292 = scalar_lea.vmem [#allocation3], %s291
        %p293 = pneg %p48
        %p294 = pneg %p45
        %p295 = pneg %p69
        %p296 = pneg %p66
        %p297 = pneg %p90
        %p298 = pneg %p87
        %p299 = pneg %p111
        %p300 = pneg %p108
        %p301 = pneg %p132
        %p302 = pneg %p129
        %p303 = pneg %p158
        %p304 = pneg %p155
        %s305 = sand.u32 %s145, 1
        %s306 = scalar_lea.sflag [#allocation5], %s305
        %s307 = sand.u32 %s145, 1
        %s308 = smul.addr %s307, 64
        %s309 = scalar_lea.vmem [#allocation11], %s308
        %p310 = pneg %p179
        %p311 = pneg %p176
        %s312 = smul.u32 8, %s27
        %s313 = smul.u32 8, %s27
        %p315 = scmp.eq.s32.totalorder %s27, 0
        // Predicated region
        $region57: #{tpu_custom_call.1} parent=39 // pred_check
          %p316 = pneg %p315
        $region58: #{tpu_custom_call.1} parent=39 // pred_check_branch
          %318 = sbr.rel (%p316) target = $region60
        $region59: #{tpu_custom_call.1} parent=39 // pred_region
          %v319 = vld [vmem:[#allocation6] sm:$0xff]
          %320 = vst [vmem:[#allocation2] sm:$0xff] %v319
        $region60: #{tpu_custom_call.1} parent=39 // pred_fallthru
          _
        %s321 = smul.u32 %s27, 8
        %v322 = vld [vmem:[#allocation2] sm:$0xff]
        %v323 = vld [vmem:[%s271] sm:$0xff]
        %v324 = vld [vmem:[%s271 + $0x8] sm:$0xff]
        %v325 = vpack.c.bf16 %v322, %v322
        %v326 = vld [vmem:[#allocation8] sm:$0xff]
        %v327 = vld [vmem:[#allocation8 + $0x8] sm:$0xff]
        %v328 = vld [vmem:[#allocation8 + $0x10] sm:$0xff]
        %v329 = vld [vmem:[#allocation8 + $0x18] sm:$0xff]
        %v330 = vld [vmem:[#allocation8 + $0x20] sm:$0xff]
        %v331 = vld [vmem:[#allocation8 + $0x28] sm:$0xff]
        %v332 = vld [vmem:[#allocation8 + $0x30] sm:$0xff]
        %v333 = vld [vmem:[#allocation8 + $0x38] sm:$0xff]
        %v334 = vld [vmem:[#allocation8 + $0x40] sm:$0xff]
        %v335 = vld [vmem:[#allocation8 + $0x48] sm:$0xff]
        %v336 = vld [vmem:[#allocation8 + $0x50] sm:$0xff]
        %v337 = vld [vmem:[#allocation8 + $0x58] sm:$0xff]
        %v338 = vld [vmem:[#allocation8 + $0x60] sm:$0xff]
        %v339 = vld [vmem:[#allocation8 + $0x68] sm:$0xff]
        %v340 = vld [vmem:[#allocation8 + $0x70] sm:$0xff]
        %v341 = vld [vmem:[#allocation8 + $0x78] sm:$0xff]
        %v358 = vunpack.c.l.b16 %v326
        %v359 = vunpack.c.h.b16 %v326
        %v360 = vunpack.c.l.b16 %v327
        %v361 = vunpack.c.h.b16 %v327
        %v362 = vunpack.c.l.b16 %v328
        %v363 = vunpack.c.h.b16 %v328
        %v364 = vunpack.c.l.b16 %v329
        %v365 = vunpack.c.h.b16 %v329
        %v366 = vunpack.c.l.b16 %v330
        %v367 = vunpack.c.h.b16 %v330
        %v368 = vunpack.c.l.b16 %v331
        %v369 = vunpack.c.h.b16 %v331
        %v370 = vunpack.c.l.b16 %v332
        %v371 = vunpack.c.h.b16 %v332
        %v372 = vunpack.c.l.b16 %v333
        %v373 = vunpack.c.h.b16 %v333
        %v374 = vunpack.c.l.b16 %v334
        %v375 = vunpack.c.h.b16 %v334
        %v376 = vunpack.c.l.b16 %v335
        %v377 = vunpack.c.h.b16 %v335
        %v378 = vunpack.c.l.b16 %v336
        %v379 = vunpack.c.h.b16 %v336
        %v380 = vunpack.c.l.b16 %v337
        %v381 = vunpack.c.h.b16 %v337
        %v382 = vunpack.c.l.b16 %v338
        %v383 = vunpack.c.h.b16 %v338
        %v384 = vunpack.c.l.b16 %v339
        %v385 = vunpack.c.h.b16 %v339
        %v386 = vunpack.c.l.b16 %v340
        %v387 = vunpack.c.h.b16 %v340
        %v388 = vunpack.c.l.b16 %v341
        %v389 = vunpack.c.h.b16 %v341
        %v390 = vpack.c.b16 %v360, %v358
        %v391 = vpack.c.b16 %v361, %v359
        %v392 = vpack.c.b16 %v364, %v362
        %v393 = vpack.c.b16 %v365, %v363
        %v394 = vpack.c.b16 %v368, %v366
        %v395 = vpack.c.b16 %v369, %v367
        %v396 = vpack.c.b16 %v372, %v370
        %v397 = vpack.c.b16 %v373, %v371
        %v398 = vpack.c.b16 %v376, %v374
        %v399 = vpack.c.b16 %v377, %v375
        %v400 = vpack.c.b16 %v380, %v378
        %v401 = vpack.c.b16 %v381, %v379
        %v402 = vpack.c.b16 %v384, %v382
        %v403 = vpack.c.b16 %v385, %v383
        %v404 = vpack.c.b16 %v388, %v386
        %v405 = vpack.c.b16 %v389, %v387
        %422 = vmatprep.subr.bf16.mxu0 %v391
        %423 = vmatpush1.bf16.msra.mxu0 %v390
        %424 = vmatprep.subr.bf16.mxu0 %v393
        %425 = vmatpush1.bf16.msra.mxu0 %v392
        %426 = vmatprep.subr.bf16.mxu0 %v395
        %427 = vmatpush1.bf16.msra.mxu0 %v394
        %428 = vmatprep.subr.bf16.mxu0 %v397
        %429 = vmatpush1.bf16.msra.mxu0 %v396
        %430 = vmatprep.subr.bf16.mxu0 %v399
        %431 = vmatpush1.bf16.msra.mxu0 %v398
        %432 = vmatprep.subr.bf16.mxu0 %v401
        %433 = vmatpush1.bf16.msra.mxu0 %v400
        %434 = vmatprep.subr.bf16.mxu0 %v403
        %435 = vmatpush1.bf16.msra.mxu0 %v402
        %436 = vmatprep.subr.bf16.mxu0 %v405
        %437 = vmatpush1.bf16.msra.mxu0 %v404
        %438 = vmatprep.subr.bf16.mxu0 0
        %439 = vmatpush1.bf16.msra.mxu0 0
        %440 = vmatprep.subr.bf16.mxu0 0
        %441 = vmatpush1.bf16.msra.mxu0 0
        %442 = vmatprep.subr.bf16.mxu0 0
        %443 = vmatpush1.bf16.msra.mxu0 0
        %444 = vmatprep.subr.bf16.mxu0 0
        %445 = vmatpush1.bf16.msra.mxu0 0
        %446 = vmatprep.subr.bf16.mxu0 0
        %447 = vmatpush1.bf16.msra.mxu0 0
        %448 = vmatprep.subr.bf16.mxu0 0
        %449 = vmatpush1.bf16.msra.mxu0 0
        %450 = vmatprep.subr.bf16.mxu0 0
        %451 = vmatpush1.bf16.msra.mxu0 0
        %452 = vmatprep.subr.bf16.mxu0 0
        %453 = vmatpush1.bf16.msra.mxu0 0
        %454 = vmatprep.mubr.bf16.mxu0 0
        %455 = vmatmul.mubr.bf16.gmra.mrb[0].mxu0 %v325
        %v456 = vpop.f32.mrb[0].mxu0
        %v457 = vadd.f32 0.0, %v456
        %v458 = vpop.f32.mrb[0].mxu0
        %v459 = vadd.f32 0.0, %v458
        %v460 = vpop.f32.mrb[0].mxu0
        %v461 = vpop.f32.mrb[0].mxu0
        %462 = vdwg.mxu0
        %v463 = vadd.f32 %v323, %v457
        %v464 = vadd.f32 %v324, %v459
        %v465 = vpack.c.bf16 %v463, %v463
        %v466 = vpack.c.bf16 %v464, %v464
        %v467 = vld [vmem:[#allocation9] sm:$0xf]
        %v468 = vld [vmem:[#allocation9 + $0x4] sm:$0xf]
        %v469 = vld [vmem:[#allocation9 + $0x8] sm:$0xf]
        %v470 = vld [vmem:[#allocation9 + $0xc] sm:$0xf]
        %v471 = vld [vmem:[#allocation9 + $0x10] sm:$0xf]
        %v472 = vld [vmem:[#allocation9 + $0x14] sm:$0xf]
        %v473 = vld [vmem:[#allocation9 + $0x18] sm:$0xf]
        %v474 = vld [vmem:[#allocation9 + $0x1c] sm:$0xf]
        %v475 = vld [vmem:[#allocation9 + $0x20] sm:$0xf]
        %v476 = vld [vmem:[#allocation9 + $0x24] sm:$0xf]
        %v477 = vld [vmem:[#allocation9 + $0x28] sm:$0xf]
        %v478 = vld [vmem:[#allocation9 + $0x2c] sm:$0xf]
        %v479 = vld [vmem:[#allocation9 + $0x30] sm:$0xf]
        %v480 = vld [vmem:[#allocation9 + $0x34] sm:$0xf]
        %v481 = vld [vmem:[#allocation9 + $0x38] sm:$0xf]
        %v482 = vld [vmem:[#allocation9 + $0x3c] sm:$0xf]
        %v483 = vld [vmem:[#allocation9 + $0x40] sm:$0xf]
        %v484 = vld [vmem:[#allocation9 + $0x44] sm:$0xf]
        %v485 = vld [vmem:[#allocation9 + $0x48] sm:$0xf]
        %v486 = vld [vmem:[#allocation9 + $0x4c] sm:$0xf]
        %v487 = vld [vmem:[#allocation9 + $0x50] sm:$0xf]
        %v488 = vld [vmem:[#allocation9 + $0x54] sm:$0xf]
        %v489 = vld [vmem:[#allocation9 + $0x58] sm:$0xf]
        %v490 = vld [vmem:[#allocation9 + $0x5c] sm:$0xf]
        %v491 = vld [vmem:[#allocation9 + $0x60] sm:$0xf]
        %v492 = vld [vmem:[#allocation9 + $0x64] sm:$0xf]
        %v493 = vld [vmem:[#allocation9 + $0x68] sm:$0xf]
        %v494 = vld [vmem:[#allocation9 + $0x6c] sm:$0xf]
        %v495 = vld [vmem:[#allocation9 + $0x70] sm:$0xf]
        %v496 = vld [vmem:[#allocation9 + $0x74] sm:$0xf]
        %v497 = vld [vmem:[#allocation9 + $0x78] sm:$0xf]
        %v498 = vld [vmem:[#allocation9 + $0x7c] sm:$0xf]
        %v499 = vld [vmem:[%s4] sm:$0x1]
        %v501 = vlaneseq
        %v502 = vshrl.u32 %v501, 7
        %v503 = vsub.s32 0, %v502
        %v504 = vrot.slane %v499, %v503
        %v538 = vunpack.c.l.b16 %v467
        %v539 = vunpack.c.l.b16 %v468
        %v540 = vunpack.c.l.b16 %v469
        %v541 = vunpack.c.l.b16 %v470
        %v542 = vunpack.c.l.b16 %v471
        %v543 = vunpack.c.l.b16 %v472
        %v544 = vunpack.c.l.b16 %v473
        %v545 = vunpack.c.l.b16 %v474
        %v546 = vunpack.c.l.b16 %v475
        %v547 = vunpack.c.l.b16 %v476
        %v548 = vunpack.c.l.b16 %v477
        %v549 = vunpack.c.l.b16 %v478
        %v550 = vunpack.c.l.b16 %v479
        %v551 = vunpack.c.l.b16 %v480
        %v552 = vunpack.c.l.b16 %v481
        %v553 = vunpack.c.l.b16 %v482
        %v554 = vunpack.c.l.b16 %v483
        %v555 = vunpack.c.l.b16 %v484
        %v556 = vunpack.c.l.b16 %v485
        %v557 = vunpack.c.l.b16 %v486
        %v558 = vunpack.c.l.b16 %v487
        %v559 = vunpack.c.l.b16 %v488
        %v560 = vunpack.c.l.b16 %v489
        %v561 = vunpack.c.l.b16 %v490
        %v562 = vunpack.c.l.b16 %v491
        %v563 = vunpack.c.l.b16 %v492
        %v564 = vunpack.c.l.b16 %v493
        %v565 = vunpack.c.l.b16 %v494
        %v566 = vunpack.c.l.b16 %v495
        %v567 = vunpack.c.l.b16 %v496
        %v568 = vunpack.c.l.b16 %v497
        %v569 = vunpack.c.l.b16 %v498
        %v570 = vpack.c.b16 %v539, %v538
        %v571 = vpack.c.b16 %v541, %v540
        %v572 = vpack.c.b16 %v543, %v542
        %v573 = vpack.c.b16 %v545, %v544
        %v574 = vpack.c.b16 %v547, %v546
        %v575 = vpack.c.b16 %v549, %v548
        %v576 = vpack.c.b16 %v551, %v550
        %v577 = vpack.c.b16 %v553, %v552
        %v578 = vpack.c.b16 %v555, %v554
        %v579 = vpack.c.b16 %v557, %v556
        %v580 = vpack.c.b16 %v559, %v558
        %v581 = vpack.c.b16 %v561, %v560
        %v582 = vpack.c.b16 %v563, %v562
        %v583 = vpack.c.b16 %v565, %v564
        %v584 = vpack.c.b16 %v567, %v566
        %v585 = vpack.c.b16 %v569, %v568
        %602 = vmatprep.subr.bf16.mxu0 0
        %603 = vmatpush1.bf16.msra.mxu0 %v570
        %604 = vmatprep.subr.bf16.mxu0 0
        %605 = vmatpush1.bf16.msra.mxu0 %v571
        %606 = vmatprep.subr.bf16.mxu0 0
        %607 = vmatpush1.bf16.msra.mxu0 %v572
        %608 = vmatprep.subr.bf16.mxu0 0
        %609 = vmatpush1.bf16.msra.mxu0 %v573
        %610 = vmatprep.subr.bf16.mxu0 0
        %611 = vmatpush1.bf16.msra.mxu0 %v574
        %612 = vmatprep.subr.bf16.mxu0 0
        %613 = vmatpush1.bf16.msra.mxu0 %v575
        %614 = vmatprep.subr.bf16.mxu0 0
        %615 = vmatpush1.bf16.msra.mxu0 %v576
        %616 = vmatprep.subr.bf16.mxu0 0
        %617 = vmatpush1.bf16.msra.mxu0 %v577
        %618 = vmatprep.subr.bf16.mxu0 0
        %619 = vmatpush1.bf16.msra.mxu0 %v578
        %620 = vmatprep.subr.bf16.mxu0 0
        %621 = vmatpush1.bf16.msra.mxu0 %v579
        %622 = vmatprep.subr.bf16.mxu0 0
        %623 = vmatpush1.bf16.msra.mxu0 %v580
        %624 = vmatprep.subr.bf16.mxu0 0
        %625 = vmatpush1.bf16.msra.mxu0 %v581
        %626 = vmatprep.subr.bf16.mxu0 0
        %627 = vmatpush1.bf16.msra.mxu0 %v582
        %628 = vmatprep.subr.bf16.mxu0 0
        %629 = vmatpush1.bf16.msra.mxu0 %v583
        %630 = vmatprep.subr.bf16.mxu0 0
        %631 = vmatpush1.bf16.msra.mxu0 %v584
        %632 = vmatprep.subr.bf16.mxu0 0
        %633 = vmatpush1.bf16.msra.mxu0 %v585
        %634 = vmatprep.mubr.bf16.mxu0 %v466
        %635 = vmatmul.mubr.bf16.gmra.mrb[0].mxu0 %v465
        %v636 = vpop.f32.mrb[0].mxu0
        %v637 = vadd.f32 %v504, %v636
        %v638 = vpop.f32.mrb[0].mxu0
        %v639 = vpop.f32.mrb[0].mxu0
        %v640 = vpop.f32.mrb[0].mxu0
        %641 = vdwg.mxu0
        %642 = vmax.xlane.f32.xlu0 %v637
        %v643 = vpop.xlane.xlu0 %642
        %v644 = vsub.f32 %v637, %v643
        %v645 = vmul.f32 %v644, 1.442695
        %v646 = vpow.pop %v645
        %647 = vadd.xlane.f32.xlu0 %v646
        %v648 = vpop.xlane.xlu0 %647
        %v649 = vlog2.pop %v648
        %v650 = vmul.f32 %v649, 0.6931472
        %v651 = vsub.f32 %v644, %v650
        %652 = vst [vmem:[%s309] sm:$0xff] %v651
        %p653 = scmp.lt.s32.totalorder %s321, 10
        %s654 = scalar_select %p653, 1, 0
        %v655 = vstv %s654
        %vm656 = vcmp.eq.s32.totalorder %v655, 1
        %v657 = vsel %vm656, %v463, %v322
        %s658 = scalar_lea.vmem %s271, 16 [#allocation3]
        %v659 = vld [vmem:[%s658] sm:$0xff]
        %v660 = vld [vmem:[%s658 + $0x8] sm:$0xff]
        %v661 = vpack.c.bf16 %v657, %v657
        %v662 = vld [vmem:[#allocation8] sm:$0xff]
        %v663 = vld [vmem:[#allocation8 + $0x8] sm:$0xff]
        %v664 = vld [vmem:[#allocation8 + $0x10] sm:$0xff]
        %v665 = vld [vmem:[#allocation8 + $0x18] sm:$0xff]
        %v666 = vld [vmem:[#allocation8 + $0x20] sm:$0xff]
        %v667 = vld [vmem:[#allocation8 + $0x28] sm:$0xff]
        %v668 = vld [vmem:[#allocation8 + $0x30] sm:$0xff]
        %v669 = vld [vmem:[#allocation8 + $0x38] sm:$0xff]
        %v670 = vld [vmem:[#allocation8 + $0x40] sm:$0xff]
        %v671 = vld [vmem:[#allocation8 + $0x48] sm:$0xff]
        %v672 = vld [vmem:[#allocation8 + $0x50] sm:$0xff]
        %v673 = vld [vmem:[#allocation8 + $0x58] sm:$0xff]
        %v674 = vld [vmem:[#allocation8 + $0x60] sm:$0xff]
        %v675 = vld [vmem:[#allocation8 + $0x68] sm:$0xff]
        %v676 = vld [vmem:[#allocation8 + $0x70] sm:$0xff]
        %v677 = vld [vmem:[#allocation8 + $0x78] sm:$0xff]
        %v694 = vunpack.c.l.b16 %v662
        %v695 = vunpack.c.h.b16 %v662
        %v696 = vunpack.c.l.b16 %v663
        %v697 = vunpack.c.h.b16 %v663
        %v698 = vunpack.c.l.b16 %v664
        %v699 = vunpack.c.h.b16 %v664
        %v700 = vunpack.c.l.b16 %v665
        %v701 = vunpack.c.h.b16 %v665
        %v702 = vunpack.c.l.b16 %v666
        %v703 = vunpack.c.h.b16 %v666
        %v704 = vunpack.c.l.b16 %v667
        %v705 = vunpack.c.h.b16 %v667
        %v706 = vunpack.c.l.b16 %v668
        %v707 = vunpack.c.h.b16 %v668
        %v708 = vunpack.c.l.b16 %v669
        %v709 = vunpack.c.h.b16 %v669
        %v710 = vunpack.c.l.b16 %v670
        %v711 = vunpack.c.h.b16 %v670
        %v712 = vunpack.c.l.b16 %v671
        %v713 = vunpack.c.h.b16 %v671
        %v714 = vunpack.c.l.b16 %v672
        %v715 = vunpack.c.h.b16 %v672
        %v716 = vunpack.c.l.b16 %v673
        %v717 = vunpack.c.h.b16 %v673
        %v718 = vunpack.c.l.b16 %v674
        %v719 = vunpack.c.h.b16 %v674
        %v720 = vunpack.c.l.b16 %v675
        %v721 = vunpack.c.h.b16 %v675
        %v722 = vunpack.c.l.b16 %v676
        %v723 = vunpack.c.h.b16 %v676
        %v724 = vunpack.c.l.b16 %v677
        %v725 = vunpack.c.h.b16 %v677
        %v726 = vpack.c.b16 %v696, %v694
        %v727 = vpack.c.b16 %v697, %v695
        %v728 = vpack.c.b16 %v700, %v698
        %v729 = vpack.c.b16 %v701, %v699
        %v730 = vpack.c.b16 %v704, %v702
        %v731 = vpack.c.b16 %v705, %v703
        %v732 = vpack.c.b16 %v708, %v706
        %v733 = vpack.c.b16 %v709, %v707
        %v734 = vpack.c.b16 %v712, %v710
        %v735 = vpack.c.b16 %v713, %v711
        %v736 = vpack.c.b16 %v716, %v714
        %v737 = vpack.c.b16 %v717, %v715
        %v738 = vpack.c.b16 %v720, %v718
        %v739 = vpack.c.b16 %v721, %v719
        %v740 = vpack.c.b16 %v724, %v722
        %v741 = vpack.c.b16 %v725, %v723
        %758 = vmatprep.subr.bf16.mxu0 %v727
        %759 = vmatpush1.bf16.msra.mxu0 %v726
        %760 = vmatprep.subr.bf16.mxu0 %v729
        %761 = vmatpush1.bf16.msra.mxu0 %v728
        %762 = vmatprep.subr.bf16.mxu0 %v731
        %763 = vmatpush1.bf16.msra.mxu0 %v730
        %764 = vmatprep.subr.bf16.mxu0 %v733
        %765 = vmatpush1.bf16.msra.mxu0 %v732
        %766 = vmatprep.subr.bf16.mxu0 %v735
        %767 = vmatpush1.bf16.msra.mxu0 %v734
        %768 = vmatprep.subr.bf16.mxu0 %v737
        %769 = vmatpush1.bf16.msra.mxu0 %v736
        %770 = vmatprep.subr.bf16.mxu0 %v739
        %771 = vmatpush1.bf16.msra.mxu0 %v738
        %772 = vmatprep.subr.bf16.mxu0 %v741
        %773 = vmatpush1.bf16.msra.mxu0 %v740
        %774 = vmatprep.subr.bf16.mxu0 0
        %775 = vmatpush1.bf16.msra.mxu0 0
        %776 = vmatprep.subr.bf16.mxu0 0
        %777 = vmatpush1.bf16.msra.mxu0 0
        %778 = vmatprep.subr.bf16.mxu0 0
        %779 = vmatpush1.bf16.msra.mxu0 0
        %780 = vmatprep.subr.bf16.mxu0 0
        %781 = vmatpush1.bf16.msra.mxu0 0
        %782 = vmatprep.subr.bf16.mxu0 0
        %783 = vmatpush1.bf16.msra.mxu0 0
        %784 = vmatprep.subr.bf16.mxu0 0
        %785 = vmatpush1.bf16.msra.mxu0 0
        %786 = vmatprep.subr.bf16.mxu0 0
        %787 = vmatpush1.bf16.msra.mxu0 0
        %788 = vmatprep.subr.bf16.mxu0 0
        %789 = vmatpush1.bf16.msra.mxu0 0
        %790 = vmatprep.mubr.bf16.mxu0 0
        %791 = vmatmul.mubr.bf16.gmra.mrb[0].mxu0 %v661
        %v792 = vpop.f32.mrb[0].mxu0
        %v793 = vadd.f32 0.0, %v792
        %v794 = vpop.f32.mrb[0].mxu0
        %v795 = vadd.f32 0.0, %v794
        %v796 = vpop.f32.mrb[0].mxu0
        %v797 = vpop.f32.mrb[0].mxu0
        %798 = vdwg.mxu0
        %v799 = vadd.f32 %v659, %v793
        %v800 = vadd.f32 %v660, %v795
        %v801 = vpack.c.bf16 %v799, %v799
        %v802 = vpack.c.bf16 %v800, %v800
        %v803 = vld [vmem:[#allocation9] sm:$0xf]
        %v804 = vld [vmem:[#allocation9 + $0x4] sm:$0xf]
        %v805 = vld [vmem:[#allocation9 + $0x8] sm:$0xf]
        %v806 = vld [vmem:[#allocation9 + $0xc] sm:$0xf]
        %v807 = vld [vmem:[#allocation9 + $0x10] sm:$0xf]
        %v808 = vld [vmem:[#allocation9 + $0x14] sm:$0xf]
        %v809 = vld [vmem:[#allocation9 + $0x18] sm:$0xf]
        %v810 = vld [vmem:[#allocation9 + $0x1c] sm:$0xf]
        %v811 = vld [vmem:[#allocation9 + $0x20] sm:$0xf]
        %v812 = vld [vmem:[#allocation9 + $0x24] sm:$0xf]
        %v813 = vld [vmem:[#allocation9 + $0x28] sm:$0xf]
        %v814 = vld [vmem:[#allocation9 + $0x2c] sm:$0xf]
        %v815 = vld [vmem:[#allocation9 + $0x30] sm:$0xf]
        %v816 = vld [vmem:[#allocation9 + $0x34] sm:$0xf]
        %v817 = vld [vmem:[#allocation9 + $0x38] sm:$0xf]
        %v818 = vld [vmem:[#allocation9 + $0x3c] sm:$0xf]
        %v819 = vld [vmem:[#allocation9 + $0x40] sm:$0xf]
        %v820 = vld [vmem:[#allocation9 + $0x44] sm:$0xf]
        %v821 = vld [vmem:[#allocation9 + $0x48] sm:$0xf]
        %v822 = vld [vmem:[#allocation9 + $0x4c] sm:$0xf]
        %v823 = vld [vmem:[#allocation9 + $0x50] sm:$0xf]
        %v824 = vld [vmem:[#allocation9 + $0x54] sm:$0xf]
        %v825 = vld [vmem:[#allocation9 + $0x58] sm:$0xf]
        %v826 = vld [vmem:[#allocation9 + $0x5c] sm:$0xf]
        %v827 = vld [vmem:[#allocation9 + $0x60] sm:$0xf]
        %v828 = vld [vmem:[#allocation9 + $0x64] sm:$0xf]
        %v829 = vld [vmem:[#allocation9 + $0x68] sm:$0xf]
        %v830 = vld [vmem:[#allocation9 + $0x6c] sm:$0xf]
        %v831 = vld [vmem:[#allocation9 + $0x70] sm:$0xf]
        %v832 = vld [vmem:[#allocation9 + $0x74] sm:$0xf]
        %v833 = vld [vmem:[#allocation9 + $0x78] sm:$0xf]
        %v834 = vld [vmem:[#allocation9 + $0x7c] sm:$0xf]
        %v835 = vld [vmem:[%s4] sm:$0x1]
        %v837 = vlaneseq
        %v838 = vshrl.u32 %v837, 7
        %v839 = vsub.s32 0, %v838
        %v840 = vrot.slane %v835, %v839
        %v874 = vunpack.c.l.b16 %v803
        %v875 = vunpack.c.l.b16 %v804
        %v876 = vunpack.c.l.b16 %v805
        %v877 = vunpack.c.l.b16 %v806
        %v878 = vunpack.c.l.b16 %v807
        %v879 = vunpack.c.l.b16 %v808
        %v880 = vunpack.c.l.b16 %v809
        %v881 = vunpack.c.l.b16 %v810
        %v882 = vunpack.c.l.b16 %v811
        %v883 = vunpack.c.l.b16 %v812
        %v884 = vunpack.c.l.b16 %v813
        %v885 = vunpack.c.l.b16 %v814
        %v886 = vunpack.c.l.b16 %v815
        %v887 = vunpack.c.l.b16 %v816
        %v888 = vunpack.c.l.b16 %v817
        %v889 = vunpack.c.l.b16 %v818
        %v890 = vunpack.c.l.b16 %v819
        %v891 = vunpack.c.l.b16 %v820
        %v892 = vunpack.c.l.b16 %v821
        %v893 = vunpack.c.l.b16 %v822
        %v894 = vunpack.c.l.b16 %v823
        %v895 = vunpack.c.l.b16 %v824
        %v896 = vunpack.c.l.b16 %v825
        %v897 = vunpack.c.l.b16 %v826
        %v898 = vunpack.c.l.b16 %v827
        %v899 = vunpack.c.l.b16 %v828
        %v900 = vunpack.c.l.b16 %v829
        %v901 = vunpack.c.l.b16 %v830
        %v902 = vunpack.c.l.b16 %v831
        %v903 = vunpack.c.l.b16 %v832
        %v904 = vunpack.c.l.b16 %v833
        %v905 = vunpack.c.l.b16 %v834
        %v906 = vpack.c.b16 %v875, %v874
        %v907 = vpack.c.b16 %v877, %v876
        %v908 = vpack.c.b16 %v879, %v878
        %v909 = vpack.c.b16 %v881, %v880
        %v910 = vpack.c.b16 %v883, %v882
        %v911 = vpack.c.b16 %v885, %v884
        %v912 = vpack.c.b16 %v887, %v886
        %v913 = vpack.c.b16 %v889, %v888
        %v914 = vpack.c.b16 %v891, %v890
        %v915 = vpack.c.b16 %v893, %v892
        %v916 = vpack.c.b16 %v895, %v894
        %v917 = vpack.c.b16 %v897, %v896
        %v918 = vpack.c.b16 %v899, %v898
        %v919 = vpack.c.b16 %v901, %v900
        %v920 = vpack.c.b16 %v903, %v902
        %v921 = vpack.c.b16 %v905, %v904
        %938 = vmatprep.subr.bf16.mxu0 0
        %939 = vmatpush1.bf16.msra.mxu0 %v906
        %940 = vmatprep.subr.bf16.mxu0 0
        %941 = vmatpush1.bf16.msra.mxu0 %v907
        %942 = vmatprep.subr.bf16.mxu0 0
        %943 = vmatpush1.bf16.msra.mxu0 %v908
        %944 = vmatprep.subr.bf16.mxu0 0
        %945 = vmatpush1.bf16.msra.mxu0 %v909
        %946 = vmatprep.subr.bf16.mxu0 0
        %947 = vmatpush1.bf16.msra.mxu0 %v910
        %948 = vmatprep.subr.bf16.mxu0 0
        %949 = vmatpush1.bf16.msra.mxu0 %v911
        %950 = vmatprep.subr.bf16.mxu0 0
        %951 = vmatpush1.bf16.msra.mxu0 %v912
        %952 = vmatprep.subr.bf16.mxu0 0
        %953 = vmatpush1.bf16.msra.mxu0 %v913
        %954 = vmatprep.subr.bf16.mxu0 0
        %955 = vmatpush1.bf16.msra.mxu0 %v914
        %956 = vmatprep.subr.bf16.mxu0 0
        %957 = vmatpush1.bf16.msra.mxu0 %v915
        %958 = vmatprep.subr.bf16.mxu0 0
        %959 = vmatpush1.bf16.msra.mxu0 %v916
        %960 = vmatprep.subr.bf16.mxu0 0
        %961 = vmatpush1.bf16.msra.mxu0 %v917
        %962 = vmatprep.subr.bf16.mxu0 0
        %963 = vmatpush1.bf16.msra.mxu0 %v918
        %964 = vmatprep.subr.bf16.mxu0 0
        %965 = vmatpush1.bf16.msra.mxu0 %v919
        %966 = vmatprep.subr.bf16.mxu0 0
        %967 = vmatpush1.bf16.msra.mxu0 %v920
        %968 = vmatprep.subr.bf16.mxu0 0
        %969 = vmatpush1.bf16.msra.mxu0 %v921
        %970 = vmatprep.mubr.bf16.mxu0 %v802
        %971 = vmatmul.mubr.bf16.gmra.mrb[0].mxu0 %v801
        %v972 = vpop.f32.mrb[0].mxu0
        %v973 = vadd.f32 %v840, %v972
        %v974 = vpop.f32.mrb[0].mxu0
        %v975 = vpop.f32.mrb[0].mxu0
        %v976 = vpop.f32.mrb[0].mxu0
        %977 = vdwg.mxu0
        %978 = vmax.xlane.f32.xlu0 %v973
        %v979 = vpop.xlane.xlu0 %978
        %v980 = vsub.f32 %v973, %v979
        %v981 = vmul.f32 %v980, 1.442695
        %v982 = vpow.pop %v981
        %983 = vadd.xlane.f32.xlu0 %v982
        %v984 = vpop.xlane.xlu0 %983
        %v985 = vlog2.pop %v984
        %v986 = vmul.f32 %v985, 0.6931472
        %v987 = vsub.f32 %v980, %v986
        %s988 = scalar_lea.vmem %s309, 8 [#allocation11]
        %989 = vst [vmem:[%s988] sm:$0xff] %v987
        %s990 = sadd.s32 %s321, 1
        %p991 = scmp.lt.s32.totalorder %s990, 10
        %s992 = scalar_select %p991, 1, 0
        %v993 = vstv %s992
        %vm994 = vcmp.eq.s32.totalorder %v993, 1
        %v995 = vsel %vm994, %v799, %v657
        %s996 = scalar_lea.vmem %s271, 32 [#allocation3]
        %v997 = vld [vmem:[%s996] sm:$0xff]
        %v998 = vld [vmem:[%s996 + $0x8] sm:$0xff]
        %v999 = vpack.c.bf16 %v995, %v995
        %v1000 = vld [vmem:[#allocation8] sm:$0xff]
        %v1001 = vld [vmem:[#allocation8 + $0x8] sm:$0xff]
        %v1002 = vld [vmem:[#allocation8 + $0x10] sm:$0xff]
        %v1003 = vld [vmem:[#allocation8 + $0x18] sm:$0xff]
        %v1004 = vld [vmem:[#allocation8 + $0x20] sm:$0xff]
        %v1005 = vld [vmem:[#allocation8 + $0x28] sm:$0xff]
        %v1006 = vld [vmem:[#allocation8 + $0x30] sm:$0xff]
        %v1007 = vld [vmem:[#allocation8 + $0x38] sm:$0xff]
        %v1008 = vld [vmem:[#allocation8 + $0x40] sm:$0xff]
        %v1009 = vld [vmem:[#allocation8 + $0x48] sm:$0xff]
        %v1010 = vld [vmem:[#allocation8 + $0x50] sm:$0xff]
        %v1011 = vld [vmem:[#allocation8 + $0x58] sm:$0xff]
        %v1012 = vld [vmem:[#allocation8 + $0x60] sm:$0xff]
        %v1013 = vld [vmem:[#allocation8 + $0x68] sm:$0xff]
        %v1014 = vld [vmem:[#allocation8 + $0x70] sm:$0xff]
        %v1015 = vld [vmem:[#allocation8 + $0x78] sm:$0xff]
        %v1032 = vunpack.c.l.b16 %v1000
        %v1033 = vunpack.c.h.b16 %v1000
        %v1034 = vunpack.c.l.b16 %v1001
        %v1035 = vunpack.c.h.b16 %v1001
        %v1036 = vunpack.c.l.b16 %v1002
        %v1037 = vunpack.c.h.b16 %v1002
        %v1038 = vunpack.c.l.b16 %v1003
        %v1039 = vunpack.c.h.b16 %v1003
        %v1040 = vunpack.c.l.b16 %v1004
        %v1041 = vunpack.c.h.b16 %v1004
        %v1042 = vunpack.c.l.b16 %v1005
        %v1043 = vunpack.c.h.b16 %v1005
        %v1044 = vunpack.c.l.b16 %v1006
        %v1045 = vunpack.c.h.b16 %v1006
        %v1046 = vunpack.c.l.b16 %v1007
        %v1047 = vunpack.c.h.b16 %v1007
        %v1048 = vunpack.c.l.b16 %v1008
        %v1049 = vunpack.c.h.b16 %v1008
        %v1050 = vunpack.c.l.b16 %v1009
        %v1051 = vunpack.c.h.b16 %v1009
        %v1052 = vunpack.c.l.b16 %v1010
        %v1053 = vunpack.c.h.b16 %v1010
        %v1054 = vunpack.c.l.b16 %v1011
        %v1055 = vunpack.c.h.b16 %v1011
        %v1056 = vunpack.c.l.b16 %v1012
        %v1057 = vunpack.c.h.b16 %v1012
        %v1058 = vunpack.c.l.b16 %v1013
        %v1059 = vunpack.c.h.b16 %v1013
        %v1060 = vunpack.c.l.b16 %v1014
        %v1061 = vunpack.c.h.b16 %v1014
        %v1062 = vunpack.c.l.b16 %v1015
        %v1063 = vunpack.c.h.b16 %v1015
        %v1064 = vpack.c.b16 %v1034, %v1032
        %v1065 = vpack.c.b16 %v1035, %v1033
        %v1066 = vpack.c.b16 %v1038, %v1036
        %v1067 = vpack.c.b16 %v1039, %v1037
        %v1068 = vpack.c.b16 %v1042, %v1040
        %v1069 = vpack.c.b16 %v1043, %v1041
        %v1070 = vpack.c.b16 %v1046, %v1044
        %v1071 = vpack.c.b16 %v1047, %v1045
        %v1072 = vpack.c.b16 %v1050, %v1048
        %v1073 = vpack.c.b16 %v1051, %v1049
        %v1074 = vpack.c.b16 %v1054, %v1052
        %v1075 = vpack.c.b16 %v1055, %v1053
        %v1076 = vpack.c.b16 %v1058, %v1056
        %v1077 = vpack.c.b16 %v1059, %v1057
        %v1078 = vpack.c.b16 %v1062, %v1060
        %v1079 = vpack.c.b16 %v1063, %v1061
        %1096 = vmatprep.subr.bf16.mxu0 %v1065
        %1097 = vmatpush1.bf16.msra.mxu0 %v1064
        %1098 = vmatprep.subr.bf16.mxu0 %v1067
        %1099 = vmatpush1.bf16.msra.mxu0 %v1066
        %1100 = vmatprep.subr.bf16.mxu0 %v1069
        %1101 = vmatpush1.bf16.msra.mxu0 %v1068
        %1102 = vmatprep.subr.bf16.mxu0 %v1071
        %1103 = vmatpush1.bf16.msra.mxu0 %v1070
        %1104 = vmatprep.subr.bf16.mxu0 %v1073
        %1105 = vmatpush1.bf16.msra.mxu0 %v1072
        %1106 = vmatprep.subr.bf16.mxu0 %v1075
        %1107 = vmatpush1.bf16.msra.mxu0 %v1074
        %1108 = vmatprep.subr.bf16.mxu0 %v1077
        %1109 = vmatpush1.bf16.msra.mxu0 %v1076
        %1110 = vmatprep.subr.bf16.mxu0 %v1079
        %1111 = vmatpush1.bf16.msra.mxu0 %v1078
        %1112 = vmatprep.subr.bf16.mxu0 0
        %1113 = vmatpush1.bf16.msra.mxu0 0
        %1114 = vmatprep.subr.bf16.mxu0 0
        %1115 = vmatpush1.bf16.msra.mxu0 0
        %1116 = vmatprep.subr.bf16.mxu0 0
        %1117 = vmatpush1.bf16.msra.mxu0 0
        %1118 = vmatprep.subr.bf16.mxu0 0
        %1119 = vmatpush1.bf16.msra.mxu0 0
        %1120 = vmatprep.subr.bf16.mxu0 0
        %1121 = vmatpush1.bf16.msra.mxu0 0
        %1122 = vmatprep.subr.bf16.mxu0 0
        %1123 = vmatpush1.bf16.msra.mxu0 0
        %1124 = vmatprep.subr.bf16.mxu0 0
        %1125 = vmatpush1.bf16.msra.mxu0 0
        %1126 = vmatprep.subr.bf16.mxu0 0
        %1127 = vmatpush1.bf16.msra.mxu0 0
        %1128 = vmatprep.mubr.bf16.mxu0 0
        %1129 = vmatmul.mubr.bf16.gmra.mrb[0].mxu0 %v999
        %v1130 = vpop.f32.mrb[0].mxu0
        %v1131 = vadd.f32 0.0, %v1130
        %v1132 = vpop.f32.mrb[0].mxu0
        %v1133 = vadd.f32 0.0, %v1132
        %v1134 = vpop.f32.mrb[0].mxu0
        %v1135 = vpop.f32.mrb[0].mxu0
        %1136 = vdwg.mxu0
        %v1137 = vadd.f32 %v997, %v1131
        %v1138 = vadd.f32 %v998, %v1133
        %v1139 = vpack.c.bf16 %v1137, %v1137
        %v1140 = vpack.c.bf16 %v1138, %v1138
        %v1141 = vld [vmem:[#allocation9] sm:$0xf]
        %v1142 = vld [vmem:[#allocation9 + $0x4] sm:$0xf]
        %v1143 = vld [vmem:[#allocation9 + $0x8] sm:$0xf]
        %v1144 = vld [vmem:[#allocation9 + $0xc] sm:$0xf]
        %v1145 = vld [vmem:[#allocation9 + $0x10] sm:$0xf]
        %v1146 = vld [vmem:[#allocation9 + $0x14] sm:$0xf]
        %v1147 = vld [vmem:[#allocation9 + $0x18] sm:$0xf]
        %v1148 = vld [vmem:[#allocation9 + $0x1c] sm:$0xf]
        %v1149 = vld [vmem:[#allocation9 + $0x20] sm:$0xf]
        %v1150 = vld [vmem:[#allocation9 + $0x24] sm:$0xf]
        %v1151 = vld [vmem:[#allocation9 + $0x28] sm:$0xf]
        %v1152 = vld [vmem:[#allocation9 + $0x2c] sm:$0xf]
        %v1153 = vld [vmem:[#allocation9 + $0x30] sm:$0xf]
        %v1154 = vld [vmem:[#allocation9 + $0x34] sm:$0xf]
        %v1155 = vld [vmem:[#allocation9 + $0x38] sm:$0xf]
        %v1156 = vld [vmem:[#allocation9 + $0x3c] sm:$0xf]
        %v1157 = vld [vmem:[#allocation9 + $0x40] sm:$0xf]
        %v1158 = vld [vmem:[#allocation9 + $0x44] sm:$0xf]
        %v1159 = vld [vmem:[#allocation9 + $0x48] sm:$0xf]
        %v1160 = vld [vmem:[#allocation9 + $0x4c] sm:$0xf]
        %v1161 = vld [vmem:[#allocation9 + $0x50] sm:$0xf]
        %v1162 = vld [vmem:[#allocation9 + $0x54] sm:$0xf]
        %v1163 = vld [vmem:[#allocation9 + $0x58] sm:$0xf]
        %v1164 = vld [vmem:[#allocation9 + $0x5c] sm:$0xf]
        %v1165 = vld [vmem:[#allocation9 + $0x60] sm:$0xf]
        %v1166 = vld [vmem:[#allocation9 + $0x64] sm:$0xf]
        %v1167 = vld [vmem:[#allocation9 + $0x68] sm:$0xf]
        %v1168 = vld [vmem:[#allocation9 + $0x6c] sm:$0xf]
        %v1169 = vld [vmem:[#allocation9 + $0x70] sm:$0xf]
        %v1170 = vld [vmem:[#allocation9 + $0x74] sm:$0xf]
        %v1171 = vld [vmem:[#allocation9 + $0x78] sm:$0xf]
        %v1172 = vld [vmem:[#allocation9 + $0x7c] sm:$0xf]
        %v1173 = vld [vmem:[%s4] sm:$0x1]
        %v1175 = vlaneseq
        %v1176 = vshrl.u32 %v1175, 7
        %v1177 = vsub.s32 0, %v1176
        %v1178 = vrot.slane %v1173, %v1177
        %v1212 = vunpack.c.l.b16 %v1141
        %v1213 = vunpack.c.l.b16 %v1142
        %v1214 = vunpack.c.l.b16 %v1143
        %v1215 = vunpack.c.l.b16 %v1144
        %v1216 = vunpack.c.l.b16 %v1145
        %v1217 = vunpack.c.l.b16 %v1146
        %v1218 = vunpack.c.l.b16 %v1147
        %v1219 = vunpack.c.l.b16 %v1148
        %v1220 = vunpack.c.l.b16 %v1149
        %v1221 = vunpack.c.l.b16 %v1150
        %v1222 = vunpack.c.l.b16 %v1151
        %v1223 = vunpack.c.l.b16 %v1152
        %v1224 = vunpack.c.l.b16 %v1153
        %v1225 = vunpack.c.l.b16 %v1154
        %v1226 = vunpack.c.l.b16 %v1155
        %v1227 = vunpack.c.l.b16 %v1156
        %v1228 = vunpack.c.l.b16 %v1157
        %v1229 = vunpack.c.l.b16 %v1158
        %v1230 = vunpack.c.l.b16 %v1159
        %v1231 = vunpack.c.l.b16 %v1160
        %v1232 = vunpack.c.l.b16 %v1161
        %v1233 = vunpack.c.l.b16 %v1162
        %v1234 = vunpack.c.l.b16 %v1163
        %v1235 = vunpack.c.l.b16 %v1164
        %v1236 = vunpack.c.l.b16 %v1165
        %v1237 = vunpack.c.l.b16 %v1166
        %v1238 = vunpack.c.l.b16 %v1167
        %v1239 = vunpack.c.l.b16 %v1168
        %v1240 = vunpack.c.l.b16 %v1169
        %v1241 = vunpack.c.l.b16 %v1170
        %v1242 = vunpack.c.l.b16 %v1171
        %v1243 = vunpack.c.l.b16 %v1172
        %v1244 = vpack.c.b16 %v1213, %v1212
        %v1245 = vpack.c.b16 %v1215, %v1214
        %v1246 = vpack.c.b16 %v1217, %v1216
        %v1247 = vpack.c.b16 %v1219, %v1218
        %v1248 = vpack.c.b16 %v1221, %v1220
        %v1249 = vpack.c.b16 %v1223, %v1222
        %v1250 = vpack.c.b16 %v1225, %v1224
        %v1251 = vpack.c.b16 %v1227, %v1226
        %v1252 = vpack.c.b16 %v1229, %v1228
        %v1253 = vpack.c.b16 %v1231, %v1230
        %v1254 = vpack.c.b16 %v1233, %v1232
        %v1255 = vpack.c.b16 %v1235, %v1234
        %v1256 = vpack.c.b16 %v1237, %v1236
        %v1257 = vpack.c.b16 %v1239, %v1238
        %v1258 = vpack.c.b16 %v1241, %v1240
        %v1259 = vpack.c.b16 %v1243, %v1242
        %1276 = vmatprep.subr.bf16.mxu0 0
        %1277 = vmatpush1.bf16.msra.mxu0 %v1244
        %1278 = vmatprep.subr.bf16.mxu0 0
        %1279 = vmatpush1.bf16.msra.mxu0 %v1245
        %1280 = vmatprep.subr.bf16.mxu0 0
        %1281 = vmatpush1.bf16.msra.mxu0 %v1246
        %1282 = vmatprep.subr.bf16.mxu0 0
        %1283 = vmatpush1.bf16.msra.mxu0 %v1247
        %1284 = vmatprep.subr.bf16.mxu0 0
        %1285 = vmatpush1.bf16.msra.mxu0 %v1248
        %1286 = vmatprep.subr.bf16.mxu0 0
        %1287 = vmatpush1.bf16.msra.mxu0 %v1249
        %1288 = vmatprep.subr.bf16.mxu0 0
        %1289 = vmatpush1.bf16.msra.mxu0 %v1250
        %1290 = vmatprep.subr.bf16.mxu0 0
        %1291 = vmatpush1.bf16.msra.mxu0 %v1251
        %1292 = vmatprep.subr.bf16.mxu0 0
        %1293 = vmatpush1.bf16.msra.mxu0 %v1252
        %1294 = vmatprep.subr.bf16.mxu0 0
        %1295 = vmatpush1.bf16.msra.mxu0 %v1253
        %1296 = vmatprep.subr.bf16.mxu0 0
        %1297 = vmatpush1.bf16.msra.mxu0 %v1254
        %1298 = vmatprep.subr.bf16.mxu0 0
        %1299 = vmatpush1.bf16.msra.mxu0 %v1255
        %1300 = vmatprep.subr.bf16.mxu0 0
        %1301 = vmatpush1.bf16.msra.mxu0 %v1256
        %1302 = vmatprep.subr.bf16.mxu0 0
        %1303 = vmatpush1.bf16.msra.mxu0 %v1257
        %1304 = vmatprep.subr.bf16.mxu0 0
        %1305 = vmatpush1.bf16.msra.mxu0 %v1258
        %1306 = vmatprep.subr.bf16.mxu0 0
        %1307 = vmatpush1.bf16.msra.mxu0 %v1259
        %1308 = vmatprep.mubr.bf16.mxu0 %v1140
        %1309 = vmatmul.mubr.bf16.gmra.mrb[0].mxu0 %v1139
        %v1310 = vpop.f32.mrb[0].mxu0
        %v1311 = vadd.f32 %v1178, %v1310
        %v1312 = vpop.f32.mrb[0].mxu0
        %v1313 = vpop.f32.mrb[0].mxu0
        %v1314 = vpop.f32.mrb[0].mxu0
        %1315 = vdwg.mxu0
        %1316 = vmax.xlane.f32.xlu0 %v1311
        %v1317 = vpop.xlane.xlu0 %1316
        %v1318 = vsub.f32 %v1311, %v1317
        %v1319 = vmul.f32 %v1318, 1.442695
        %v1320 = vpow.pop %v1319
        %1321 = vadd.xlane.f32.xlu0 %v1320
        %v1322 = vpop.xlane.xlu0 %1321
        %v1323 = vlog2.pop %v1322
        %v1324 = vmul.f32 %v1323, 0.6931472
        %v1325 = vsub.f32 %v1318, %v1324
        %s1326 = scalar_lea.vmem %s309, 16 [#allocation11]
        %1327 = vst [vmem:[%s1326] sm:$0xff] %v1325
        %s1328 = sadd.s32 %s321, 2
        %p1329 = scmp.lt.s32.totalorder %s1328, 10
        %s1330 = scalar_select %p1329, 1, 0
        %v1331 = vstv %s1330
        %vm1332 = vcmp.eq.s32.totalorder %v1331, 1
        %v1333 = vsel %vm1332, %v1137, %v995
        %s1334 = scalar_lea.vmem %s271, 48 [#allocation3]
        %v1335 = vld [vmem:[%s1334] sm:$0xff]
        %v1336 = vld [vmem:[%s1334 + $0x8] sm:$0xff]
        %v1337 = vpack.c.bf16 %v1333, %v1333
        %v1338 = vld [vmem:[#allocation8] sm:$0xff]
        %v1339 = vld [vmem:[#allocation8 + $0x8] sm:$0xff]
        %v1340 = vld [vmem:[#allocation8 + $0x10] sm:$0xff]
        %v1341 = vld [vmem:[#allocation8 + $0x18] sm:$0xff]
        %v1342 = vld [vmem:[#allocation8 + $0x20] sm:$0xff]
        %v1343 = vld [vmem:[#allocation8 + $0x28] sm:$0xff]
        %v1344 = vld [vmem:[#allocation8 + $0x30] sm:$0xff]
        %v1345 = vld [vmem:[#allocation8 + $0x38] sm:$0xff]
        %v1346 = vld [vmem:[#allocation8 + $0x40] sm:$0xff]
        %v1347 = vld [vmem:[#allocation8 + $0x48] sm:$0xff]
        %v1348 = vld [vmem:[#allocation8 + $0x50] sm:$0xff]
        %v1349 = vld [vmem:[#allocation8 + $0x58] sm:$0xff]
        %v1350 = vld [vmem:[#allocation8 + $0x60] sm:$0xff]
        %v1351 = vld [vmem:[#allocation8 + $0x68] sm:$0xff]
        %v1352 = vld [vmem:[#allocation8 + $0x70] sm:$0xff]
        %v1353 = vld [vmem:[#allocation8 + $0x78] sm:$0xff]
        %v1370 = vunpack.c.l.b16 %v1338
        %v1371 = vunpack.c.h.b16 %v1338
        %v1372 = vunpack.c.l.b16 %v1339
        %v1373 = vunpack.c.h.b16 %v1339
        %v1374 = vunpack.c.l.b16 %v1340
        %v1375 = vunpack.c.h.b16 %v1340
        %v1376 = vunpack.c.l.b16 %v1341
        %v1377 = vunpack.c.h.b16 %v1341
        %v1378 = vunpack.c.l.b16 %v1342
        %v1379 = vunpack.c.h.b16 %v1342
        %v1380 = vunpack.c.l.b16 %v1343
        %v1381 = vunpack.c.h.b16 %v1343
        %v1382 = vunpack.c.l.b16 %v1344
        %v1383 = vunpack.c.h.b16 %v1344
        %v1384 = vunpack.c.l.b16 %v1345
        %v1385 = vunpack.c.h.b16 %v1345
        %v1386 = vunpack.c.l.b16 %v1346
        %v1387 = vunpack.c.h.b16 %v1346
        %v1388 = vunpack.c.l.b16 %v1347
        %v1389 = vunpack.c.h.b16 %v1347
        %v1390 = vunpack.c.l.b16 %v1348
        %v1391 = vunpack.c.h.b16 %v1348
        %v1392 = vunpack.c.l.b16 %v1349
        %v1393 = vunpack.c.h.b16 %v1349
        %v1394 = vunpack.c.l.b16 %v1350
        %v1395 = vunpack.c.h.b16 %v1350
        %v1396 = vunpack.c.l.b16 %v1351
        %v1397 = vunpack.c.h.b16 %v1351
        %v1398 = vunpack.c.l.b16 %v1352
        %v1399 = vunpack.c.h.b16 %v1352
        %v1400 = vunpack.c.l.b16 %v1353
        %v1401 = vunpack.c.h.b16 %v1353
        %v1402 = vpack.c.b16 %v1372, %v1370
        %v1403 = vpack.c.b16 %v1373, %v1371
        %v1404 = vpack.c.b16 %v1376, %v1374
        %v1405 = vpack.c.b16 %v1377, %v1375
        %v1406 = vpack.c.b16 %v1380, %v1378
        %v1407 = vpack.c.b16 %v1381, %v1379
        %v1408 = vpack.c.b16 %v1384, %v1382
        %v1409 = vpack.c.b16 %v1385, %v1383
        %v1410 = vpack.c.b16 %v1388, %v1386
        %v1411 = vpack.c.b16 %v1389, %v1387
        %v1412 = vpack.c.b16 %v1392, %v1390
        %v1413 = vpack.c.b16 %v1393, %v1391
        %v1414 = vpack.c.b16 %v1396, %v1394
        %v1415 = vpack.c.b16 %v1397, %v1395
        %v1416 = vpack.c.b16 %v1400, %v1398
        %v1417 = vpack.c.b16 %v1401, %v1399
        %1434 = vmatprep.subr.bf16.mxu0 %v1403
        %1435 = vmatpush1.bf16.msra.mxu0 %v1402
        %1436 = vmatprep.subr.bf16.mxu0 %v1405
        %1437 = vmatpush1.bf16.msra.mxu0 %v1404
        %1438 = vmatprep.subr.bf16.mxu0 %v1407
        %1439 = vmatpush1.bf16.msra.mxu0 %v1406
        %1440 = vmatprep.subr.bf16.mxu0 %v1409
        %1441 = vmatpush1.bf16.msra.mxu0 %v1408
        %1442 = vmatprep.subr.bf16.mxu0 %v1411
        %1443 = vmatpush1.bf16.msra.mxu0 %v1410
        %1444 = vmatprep.subr.bf16.mxu0 %v1413
        %1445 = vmatpush1.bf16.msra.mxu0 %v1412
        %1446 = vmatprep.subr.bf16.mxu0 %v1415
        %1447 = vmatpush1.bf16.msra.mxu0 %v1414
        %1448 = vmatprep.subr.bf16.mxu0 %v1417
        %1449 = vmatpush1.bf16.msra.mxu0 %v1416
        %1450 = vmatprep.subr.bf16.mxu0 0
        %1451 = vmatpush1.bf16.msra.mxu0 0
        %1452 = vmatprep.subr.bf16.mxu0 0
        %1453 = vmatpush1.bf16.msra.mxu0 0
        %1454 = vmatprep.subr.bf16.mxu0 0
        %1455 = vmatpush1.bf16.msra.mxu0 0
        %1456 = vmatprep.subr.bf16.mxu0 0
        %1457 = vmatpush1.bf16.msra.mxu0 0
        %1458 = vmatprep.subr.bf16.mxu0 0
        %1459 = vmatpush1.bf16.msra.mxu0 0
        %1460 = vmatprep.subr.bf16.mxu0 0
        %1461 = vmatpush1.bf16.msra.mxu0 0
        %1462 = vmatprep.subr.bf16.mxu0 0
        %1463 = vmatpush1.bf16.msra.mxu0 0
        %1464 = vmatprep.subr.bf16.mxu0 0
        %1465 = vmatpush1.bf16.msra.mxu0 0
        %1466 = vmatprep.mubr.bf16.mxu0 0
        %1467 = vmatmul.mubr.bf16.gmra.mrb[0].mxu0 %v1337
        %v1468 = vpop.f32.mrb[0].mxu0
        %v1469 = vadd.f32 0.0, %v1468
        %v1470 = vpop.f32.mrb[0].mxu0
        %v1471 = vadd.f32 0.0, %v1470
        %v1472 = vpop.f32.mrb[0].mxu0
        %v1473 = vpop.f32.mrb[0].mxu0
        %1474 = vdwg.mxu0
        %v1475 = vadd.f32 %v1335, %v1469
        %v1476 = vadd.f32 %v1336, %v1471
        %v1477 = vpack.c.bf16 %v1475, %v1475
        %v1478 = vpack.c.bf16 %v1476, %v1476
        %v1479 = vld [vmem:[#allocation9] sm:$0xf]
        %v1480 = vld [vmem:[#allocation9 + $0x4] sm:$0xf]
        %v1481 = vld [vmem:[#allocation9 + $0x8] sm:$0xf]
        %v1482 = vld [vmem:[#allocation9 + $0xc] sm:$0xf]
        %v1483 = vld [vmem:[#allocation9 + $0x10] sm:$0xf]
        %v1484 = vld [vmem:[#allocation9 + $0x14] sm:$0xf]
        %v1485 = vld [vmem:[#allocation9 + $0x18] sm:$0xf]
        %v1486 = vld [vmem:[#allocation9 + $0x1c] sm:$0xf]
        %v1487 = vld [vmem:[#allocation9 + $0x20] sm:$0xf]
        %v1488 = vld [vmem:[#allocation9 + $0x24] sm:$0xf]
        %v1489 = vld [vmem:[#allocation9 + $0x28] sm:$0xf]
        %v1490 = vld [vmem:[#allocation9 + $0x2c] sm:$0xf]
        %v1491 = vld [vmem:[#allocation9 + $0x30] sm:$0xf]
        %v1492 = vld [vmem:[#allocation9 + $0x34] sm:$0xf]
        %v1493 = vld [vmem:[#allocation9 + $0x38] sm:$0xf]
        %v1494 = vld [vmem:[#allocation9 + $0x3c] sm:$0xf]
        %v1495 = vld [vmem:[#allocation9 + $0x40] sm:$0xf]
        %v1496 = vld [vmem:[#allocation9 + $0x44] sm:$0xf]
        %v1497 = vld [vmem:[#allocation9 + $0x48] sm:$0xf]
        %v1498 = vld [vmem:[#allocation9 + $0x4c] sm:$0xf]
        %v1499 = vld [vmem:[#allocation9 + $0x50] sm:$0xf]
        %v1500 = vld [vmem:[#allocation9 + $0x54] sm:$0xf]
        %v1501 = vld [vmem:[#allocation9 + $0x58] sm:$0xf]
        %v1502 = vld [vmem:[#allocation9 + $0x5c] sm:$0xf]
        %v1503 = vld [vmem:[#allocation9 + $0x60] sm:$0xf]
        %v1504 = vld [vmem:[#allocation9 + $0x64] sm:$0xf]
        %v1505 = vld [vmem:[#allocation9 + $0x68] sm:$0xf]
        %v1506 = vld [vmem:[#allocation9 + $0x6c] sm:$0xf]
        %v1507 = vld [vmem:[#allocation9 + $0x70] sm:$0xf]
        %v1508 = vld [vmem:[#allocation9 + $0x74] sm:$0xf]
        %v1509 = vld [vmem:[#allocation9 + $0x78] sm:$0xf]
        %v1510 = vld [vmem:[#allocation9 + $0x7c] sm:$0xf]
        %v1511 = vld [vmem:[%s4] sm:$0x1]
        %v1513 = vlaneseq
        %v1514 = vshrl.u32 %v1513, 7
        %v1515 = vsub.s32 0, %v1514
        %v1516 = vrot.slane %v1511, %v1515
        %v1550 = vunpack.c.l.b16 %v1479
        %v1551 = vunpack.c.l.b16 %v1480
        %v1552 = vunpack.c.l.b16 %v1481
        %v1553 = vunpack.c.l.b16 %v1482
        %v1554 = vunpack.c.l.b16 %v1483
        %v1555 = vunpack.c.l.b16 %v1484
        %v1556 = vunpack.c.l.b16 %v1485
        %v1557 = vunpack.c.l.b16 %v1486
        %v1558 = vunpack.c.l.b16 %v1487
        %v1559 = vunpack.c.l.b16 %v1488
        %v1560 = vunpack.c.l.b16 %v1489
        %v1561 = vunpack.c.l.b16 %v1490
        %v1562 = vunpack.c.l.b16 %v1491
        %v1563 = vunpack.c.l.b16 %v1492
        %v1564 = vunpack.c.l.b16 %v1493
        %v1565 = vunpack.c.l.b16 %v1494
        %v1566 = vunpack.c.l.b16 %v1495
        %v1567 = vunpack.c.l.b16 %v1496
        %v1568 = vunpack.c.l.b16 %v1497
        %v1569 = vunpack.c.l.b16 %v1498
        %v1570 = vunpack.c.l.b16 %v1499
        %v1571 = vunpack.c.l.b16 %v1500
        %v1572 = vunpack.c.l.b16 %v1501
        %v1573 = vunpack.c.l.b16 %v1502
        %v1574 = vunpack.c.l.b16 %v1503
        %v1575 = vunpack.c.l.b16 %v1504
        %v1576 = vunpack.c.l.b16 %v1505
        %v1577 = vunpack.c.l.b16 %v1506
        %v1578 = vunpack.c.l.b16 %v1507
        %v1579 = vunpack.c.l.b16 %v1508
        %v1580 = vunpack.c.l.b16 %v1509
        %v1581 = vunpack.c.l.b16 %v1510
        %v1582 = vpack.c.b16 %v1551, %v1550
        %v1583 = vpack.c.b16 %v1553, %v1552
        %v1584 = vpack.c.b16 %v1555, %v1554
        %v1585 = vpack.c.b16 %v1557, %v1556
        %v1586 = vpack.c.b16 %v1559, %v1558
        %v1587 = vpack.c.b16 %v1561, %v1560
        %v1588 = vpack.c.b16 %v1563, %v1562
        %v1589 = vpack.c.b16 %v1565, %v1564
        %v1590 = vpack.c.b16 %v1567, %v1566
        %v1591 = vpack.c.b16 %v1569, %v1568
        %v1592 = vpack.c.b16 %v1571, %v1570
        %v1593 = vpack.c.b16 %v1573, %v1572
        %v1594 = vpack.c.b16 %v1575, %v1574
        %v1595 = vpack.c.b16 %v1577, %v1576
        %v1596 = vpack.c.b16 %v1579, %v1578
        %v1597 = vpack.c.b16 %v1581, %v1580
        %1614 = vmatprep.subr.bf16.mxu0 0
        %1615 = vmatpush1.bf16.msra.mxu0 %v1582
        %1616 = vmatprep.subr.bf16.mxu0 0
        %1617 = vmatpush1.bf16.msra.mxu0 %v1583
        %1618 = vmatprep.subr.bf16.mxu0 0
        %1619 = vmatpush1.bf16.msra.mxu0 %v1584
        %1620 = vmatprep.subr.bf16.mxu0 0
        %1621 = vmatpush1.bf16.msra.mxu0 %v1585
        %1622 = vmatprep.subr.bf16.mxu0 0
        %1623 = vmatpush1.bf16.msra.mxu0 %v1586
        %1624 = vmatprep.subr.bf16.mxu0 0
        %1625 = vmatpush1.bf16.msra.mxu0 %v1587
        %1626 = vmatprep.subr.bf16.mxu0 0
        %1627 = vmatpush1.bf16.msra.mxu0 %v1588
        %1628 = vmatprep.subr.bf16.mxu0 0
        %1629 = vmatpush1.bf16.msra.mxu0 %v1589
        %1630 = vmatprep.subr.bf16.mxu0 0
        %1631 = vmatpush1.bf16.msra.mxu0 %v1590
        %1632 = vmatprep.subr.bf16.mxu0 0
        %1633 = vmatpush1.bf16.msra.mxu0 %v1591
        %1634 = vmatprep.subr.bf16.mxu0 0
        %1635 = vmatpush1.bf16.msra.mxu0 %v1592
        %1636 = vmatprep.subr.bf16.mxu0 0
        %1637 = vmatpush1.bf16.msra.mxu0 %v1593
        %1638 = vmatprep.subr.bf16.mxu0 0
        %1639 = vmatpush1.bf16.msra.mxu0 %v1594
        %1640 = vmatprep.subr.bf16.mxu0 0
        %1641 = vmatpush1.bf16.msra.mxu0 %v1595
        %1642 = vmatprep.subr.bf16.mxu0 0
        %1643 = vmatpush1.bf16.msra.mxu0 %v1596
        %1644 = vmatprep.subr.bf16.mxu0 0
        %1645 = vmatpush1.bf16.msra.mxu0 %v1597
        %1646 = vmatprep.mubr.bf16.mxu0 %v1478
        %1647 = vmatmul.mubr.bf16.gmra.mrb[0].mxu0 %v1477
        %v1648 = vpop.f32.mrb[0].mxu0
        %v1649 = vadd.f32 %v1516, %v1648
        %v1650 = vpop.f32.mrb[0].mxu0
        %v1651 = vpop.f32.mrb[0].mxu0
        %v1652 = vpop.f32.mrb[0].mxu0
        %1653 = vdwg.mxu0
        %1654 = vmax.xlane.f32.xlu0 %v1649
        %v1655 = vpop.xlane.xlu0 %1654
        %v1656 = vsub.f32 %v1649, %v1655
        %v1657 = vmul.f32 %v1656, 1.442695
        %v1658 = vpow.pop %v1657
        %1659 = vadd.xlane.f32.xlu0 %v1658
        %v1660 = vpop.xlane.xlu0 %1659
        %v1661 = vlog2.pop %v1660
        %v1662 = vmul.f32 %v1661, 0.6931472
        %v1663 = vsub.f32 %v1656, %v1662
        %s1664 = scalar_lea.vmem %s309, 24 [#allocation11]
        %1665 = vst [vmem:[%s1664] sm:$0xff] %v1663
        %s1666 = sadd.s32 %s321, 3
        %p1667 = scmp.lt.s32.totalorder %s1666, 10
        %s1668 = scalar_select %p1667, 1, 0
        %v1669 = vstv %s1668
        %vm1670 = vcmp.eq.s32.totalorder %v1669, 1
        %v1671 = vsel %vm1670, %v1475, %v1333
        %s1672 = scalar_lea.vmem %s271, 64 [#allocation3]
        %v1673 = vld [vmem:[%s1672] sm:$0xff]
        %v1674 = vld [vmem:[%s1672 + $0x8] sm:$0xff]
        %v1675 = vpack.c.bf16 %v1671, %v1671
        %v1676 = vld [vmem:[#allocation8] sm:$0xff]
        %v1677 = vld [vmem:[#allocation8 + $0x8] sm:$0xff]
        %v1678 = vld [vmem:[#allocation8 + $0x10] sm:$0xff]
        %v1679 = vld [vmem:[#allocation8 + $0x18] sm:$0xff]
        %v1680 = vld [vmem:[#allocation8 + $0x20] sm:$0xff]
        %v1681 = vld [vmem:[#allocation8 + $0x28] sm:$0xff]
        %v1682 = vld [vmem:[#allocation8 + $0x30] sm:$0xff]
        %v1683 = vld [vmem:[#allocation8 + $0x38] sm:$0xff]
        %v1684 = vld [vmem:[#allocation8 + $0x40] sm:$0xff]
        %v1685 = vld [vmem:[#allocation8 + $0x48] sm:$0xff]
        %v1686 = vld [vmem:[#allocation8 + $0x50] sm:$0xff]
        %v1687 = vld [vmem:[#allocation8 + $0x58] sm:$0xff]
        %v1688 = vld [vmem:[#allocation8 + $0x60] sm:$0xff]
        %v1689 = vld [vmem:[#allocation8 + $0x68] sm:$0xff]
        %v1690 = vld [vmem:[#allocation8 + $0x70] sm:$0xff]
        %v1691 = vld [vmem:[#allocation8 + $0x78] sm:$0xff]
        %v1708 = vunpack.c.l.b16 %v1676
        %v1709 = vunpack.c.h.b16 %v1676
        %v1710 = vunpack.c.l.b16 %v1677
        %v1711 = vunpack.c.h.b16 %v1677
        %v1712 = vunpack.c.l.b16 %v1678
        %v1713 = vunpack.c.h.b16 %v1678
        %v1714 = vunpack.c.l.b16 %v1679
        %v1715 = vunpack.c.h.b16 %v1679
        %v1716 = vunpack.c.l.b16 %v1680
        %v1717 = vunpack.c.h.b16 %v1680
        %v1718 = vunpack.c.l.b16 %v1681
        %v1719 = vunpack.c.h.b16 %v1681
        %v1720 = vunpack.c.l.b16 %v1682
        %v1721 = vunpack.c.h.b16 %v1682
        %v1722 = vunpack.c.l.b16 %v1683
        %v1723 = vunpack.c.h.b16 %v1683
        %v1724 = vunpack.c.l.b16 %v1684
        %v1725 = vunpack.c.h.b16 %v1684
        %v1726 = vunpack.c.l.b16 %v1685
        %v1727 = vunpack.c.h.b16 %v1685
        %v1728 = vunpack.c.l.b16 %v1686
        %v1729 = vunpack.c.h.b16 %v1686
        %v1730 = vunpack.c.l.b16 %v1687
        %v1731 = vunpack.c.h.b16 %v1687
        %v1732 = vunpack.c.l.b16 %v1688
        %v1733 = vunpack.c.h.b16 %v1688
        %v1734 = vunpack.c.l.b16 %v1689
        %v1735 = vunpack.c.h.b16 %v1689
        %v1736 = vunpack.c.l.b16 %v1690
        %v1737 = vunpack.c.h.b16 %v1690
        %v1738 = vunpack.c.l.b16 %v1691
        %v1739 = vunpack.c.h.b16 %v1691
        %v1740 = vpack.c.b16 %v1710, %v1708
        %v1741 = vpack.c.b16 %v1711, %v1709
        %v1742 = vpack.c.b16 %v1714, %v1712
        %v1743 = vpack.c.b16 %v1715, %v1713
        %v1744 = vpack.c.b16 %v1718, %v1716
        %v1745 = vpack.c.b16 %v1719, %v1717
        %v1746 = vpack.c.b16 %v1722, %v1720
        %v1747 = vpack.c.b16 %v1723, %v1721
        %v1748 = vpack.c.b16 %v1726, %v1724
        %v1749 = vpack.c.b16 %v1727, %v1725
        %v1750 = vpack.c.b16 %v1730, %v1728
        %v1751 = vpack.c.b16 %v1731, %v1729
        %v1752 = vpack.c.b16 %v1734, %v1732
        %v1753 = vpack.c.b16 %v1735, %v1733
        %v1754 = vpack.c.b16 %v1738, %v1736
        %v1755 = vpack.c.b16 %v1739, %v1737
        %1772 = vmatprep.subr.bf16.mxu0 %v1741
        %1773 = vmatpush1.bf16.msra.mxu0 %v1740
        %1774 = vmatprep.subr.bf16.mxu0 %v1743
        %1775 = vmatpush1.bf16.msra.mxu0 %v1742
        %1776 = vmatprep.subr.bf16.mxu0 %v1745
        %1777 = vmatpush1.bf16.msra.mxu0 %v1744
        %1778 = vmatprep.subr.bf16.mxu0 %v1747
        %1779 = vmatpush1.bf16.msra.mxu0 %v1746
        %1780 = vmatprep.subr.bf16.mxu0 %v1749
        %1781 = vmatpush1.bf16.msra.mxu0 %v1748
        %1782 = vmatprep.subr.bf16.mxu0 %v1751
        %1783 = vmatpush1.bf16.msra.mxu0 %v1750
        %1784 = vmatprep.subr.bf16.mxu0 %v1753
        %1785 = vmatpush1.bf16.msra.mxu0 %v1752
        %1786 = vmatprep.subr.bf16.mxu0 %v1755
        %1787 = vmatpush1.bf16.msra.mxu0 %v1754
        %1788 = vmatprep.subr.bf16.mxu0 0
        %1789 = vmatpush1.bf16.msra.mxu0 0
        %1790 = vmatprep.subr.bf16.mxu0 0
        %1791 = vmatpush1.bf16.msra.mxu0 0
        %1792 = vmatprep.subr.bf16.mxu0 0
        %1793 = vmatpush1.bf16.msra.mxu0 0
        %1794 = vmatprep.subr.bf16.mxu0 0
        %1795 = vmatpush1.bf16.msra.mxu0 0
        %1796 = vmatprep.subr.bf16.mxu0 0
        %1797 = vmatpush1.bf16.msra.mxu0 0
        %1798 = vmatprep.subr.bf16.mxu0 0
        %1799 = vmatpush1.bf16.msra.mxu0 0
        %1800 = vmatprep.subr.bf16.mxu0 0
        %1801 = vmatpush1.bf16.msra.mxu0 0
        %1802 = vmatprep.subr.bf16.mxu0 0
        %1803 = vmatpush1.bf16.msra.mxu0 0
        %1804 = vmatprep.mubr.bf16.mxu0 0
        %1805 = vmatmul.mubr.bf16.gmra.mrb[0].mxu0 %v1675
        %v1806 = vpop.f32.mrb[0].mxu0
        %v1807 = vadd.f32 0.0, %v1806
        %v1808 = vpop.f32.mrb[0].mxu0
        %v1809 = vadd.f32 0.0, %v1808
        %v1810 = vpop.f32.mrb[0].mxu0
        %v1811 = vpop.f32.mrb[0].mxu0
        %1812 = vdwg.mxu0
        %v1813 = vadd.f32 %v1673, %v1807
        %v1814 = vadd.f32 %v1674, %v1809
        %v1815 = vpack.c.bf16 %v1813, %v1813
        %v1816 = vpack.c.bf16 %v1814, %v1814
        %v1817 = vld [vmem:[#allocation9] sm:$0xf]
        %v1818 = vld [vmem:[#allocation9 + $0x4] sm:$0xf]
        %v1819 = vld [vmem:[#allocation9 + $0x8] sm:$0xf]
        %v1820 = vld [vmem:[#allocation9 + $0xc] sm:$0xf]
        %v1821 = vld [vmem:[#allocation9 + $0x10] sm:$0xf]
        %v1822 = vld [vmem:[#allocation9 + $0x14] sm:$0xf]
        %v1823 = vld [vmem:[#allocation9 + $0x18] sm:$0xf]
        %v1824 = vld [vmem:[#allocation9 + $0x1c] sm:$0xf]
        %v1825 = vld [vmem:[#allocation9 + $0x20] sm:$0xf]
        %v1826 = vld [vmem:[#allocation9 + $0x24] sm:$0xf]
        %v1827 = vld [vmem:[#allocation9 + $0x28] sm:$0xf]
        %v1828 = vld [vmem:[#allocation9 + $0x2c] sm:$0xf]
        %v1829 = vld [vmem:[#allocation9 + $0x30] sm:$0xf]
        %v1830 = vld [vmem:[#allocation9 + $0x34] sm:$0xf]
        %v1831 = vld [vmem:[#allocation9 + $0x38] sm:$0xf]
        %v1832 = vld [vmem:[#allocation9 + $0x3c] sm:$0xf]
        %v1833 = vld [vmem:[#allocation9 + $0x40] sm:$0xf]
        %v1834 = vld [vmem:[#allocation9 + $0x44] sm:$0xf]
        %v1835 = vld [vmem:[#allocation9 + $0x48] sm:$0xf]
        %v1836 = vld [vmem:[#allocation9 + $0x4c] sm:$0xf]
        %v1837 = vld [vmem:[#allocation9 + $0x50] sm:$0xf]
        %v1838 = vld [vmem:[#allocation9 + $0x54] sm:$0xf]
        %v1839 = vld [vmem:[#allocation9 + $0x58] sm:$0xf]
        %v1840 = vld [vmem:[#allocation9 + $0x5c] sm:$0xf]
        %v1841 = vld [vmem:[#allocation9 + $0x60] sm:$0xf]
        %v1842 = vld [vmem:[#allocation9 + $0x64] sm:$0xf]
        %v1843 = vld [vmem:[#allocation9 + $0x68] sm:$0xf]
        %v1844 = vld [vmem:[#allocation9 + $0x6c] sm:$0xf]
        %v1845 = vld [vmem:[#allocation9 + $0x70] sm:$0xf]
        %v1846 = vld [vmem:[#allocation9 + $0x74] sm:$0xf]
        %v1847 = vld [vmem:[#allocation9 + $0x78] sm:$0xf]
        %v1848 = vld [vmem:[#allocation9 + $0x7c] sm:$0xf]
        %v1849 = vld [vmem:[%s4] sm:$0x1]
        %v1851 = vlaneseq
        %v1852 = vshrl.u32 %v1851, 7
        %v1853 = vsub.s32 0, %v1852
        %v1854 = vrot.slane %v1849, %v1853
        %v1888 = vunpack.c.l.b16 %v1817
        %v1889 = vunpack.c.l.b16 %v1818
        %v1890 = vunpack.c.l.b16 %v1819
        %v1891 = vunpack.c.l.b16 %v1820
        %v1892 = vunpack.c.l.b16 %v1821
        %v1893 = vunpack.c.l.b16 %v1822
        %v1894 = vunpack.c.l.b16 %v1823
        %v1895 = vunpack.c.l.b16 %v1824
        %v1896 = vunpack.c.l.b16 %v1825
        %v1897 = vunpack.c.l.b16 %v1826
        %v1898 = vunpack.c.l.b16 %v1827
        %v1899 = vunpack.c.l.b16 %v1828
        %v1900 = vunpack.c.l.b16 %v1829
        %v1901 = vunpack.c.l.b16 %v1830
        %v1902 = vunpack.c.l.b16 %v1831
        %v1903 = vunpack.c.l.b16 %v1832
        %v1904 = vunpack.c.l.b16 %v1833
        %v1905 = vunpack.c.l.b16 %v1834
        %v1906 = vunpack.c.l.b16 %v1835
        %v1907 = vunpack.c.l.b16 %v1836
        %v1908 = vunpack.c.l.b16 %v1837
        %v1909 = vunpack.c.l.b16 %v1838
        %v1910 = vunpack.c.l.b16 %v1839
        %v1911 = vunpack.c.l.b16 %v1840
        %v1912 = vunpack.c.l.b16 %v1841
        %v1913 = vunpack.c.l.b16 %v1842
        %v1914 = vunpack.c.l.b16 %v1843
        %v1915 = vunpack.c.l.b16 %v1844
        %v1916 = vunpack.c.l.b16 %v1845
        %v1917 = vunpack.c.l.b16 %v1846
        %v1918 = vunpack.c.l.b16 %v1847
        %v1919 = vunpack.c.l.b16 %v1848
        %v1920 = vpack.c.b16 %v1889, %v1888
        %v1921 = vpack.c.b16 %v1891, %v1890
        %v1922 = vpack.c.b16 %v1893, %v1892
        %v1923 = vpack.c.b16 %v1895, %v1894
        %v1924 = vpack.c.b16 %v1897, %v1896
        %v1925 = vpack.c.b16 %v1899, %v1898
        %v1926 = vpack.c.b16 %v1901, %v1900
        %v1927 = vpack.c.b16 %v1903, %v1902
        %v1928 = vpack.c.b16 %v1905, %v1904
        %v1929 = vpack.c.b16 %v1907, %v1906
        %v1930 = vpack.c.b16 %v1909, %v1908
        %v1931 = vpack.c.b16 %v1911, %v1910
        %v1932 = vpack.c.b16 %v1913, %v1912
        %v1933 = vpack.c.b16 %v1915, %v1914
        %v1934 = vpack.c.b16 %v1917, %v1916
        %v1935 = vpack.c.b16 %v1919, %v1918
        %1952 = vmatprep.subr.bf16.mxu0 0
        %1953 = vmatpush1.bf16.msra.mxu0 %v1920
        %1954 = vmatprep.subr.bf16.mxu0 0
        %1955 = vmatpush1.bf16.msra.mxu0 %v1921
        %1956 = vmatprep.subr.bf16.mxu0 0
        %1957 = vmatpush1.bf16.msra.mxu0 %v1922
        %1958 = vmatprep.subr.bf16.mxu0 0
        %1959 = vmatpush1.bf16.msra.mxu0 %v1923
        %1960 = vmatprep.subr.bf16.mxu0 0
        %1961 = vmatpush1.bf16.msra.mxu0 %v1924
        %1962 = vmatprep.subr.bf16.mxu0 0
        %1963 = vmatpush1.bf16.msra.mxu0 %v1925
        %1964 = vmatprep.subr.bf16.mxu0 0
        %1965 = vmatpush1.bf16.msra.mxu0 %v1926
        %1966 = vmatprep.subr.bf16.mxu0 0
        %1967 = vmatpush1.bf16.msra.mxu0 %v1927
        %1968 = vmatprep.subr.bf16.mxu0 0
        %1969 = vmatpush1.bf16.msra.mxu0 %v1928
        %1970 = vmatprep.subr.bf16.mxu0 0
        %1971 = vmatpush1.bf16.msra.mxu0 %v1929
        %1972 = vmatprep.subr.bf16.mxu0 0
        %1973 = vmatpush1.bf16.msra.mxu0 %v1930
        %1974 = vmatprep.subr.bf16.mxu0 0
        %1975 = vmatpush1.bf16.msra.mxu0 %v1931
        %1976 = vmatprep.subr.bf16.mxu0 0
        %1977 = vmatpush1.bf16.msra.mxu0 %v1932
        %1978 = vmatprep.subr.bf16.mxu0 0
        %1979 = vmatpush1.bf16.msra.mxu0 %v1933
        %1980 = vmatprep.subr.bf16.mxu0 0
        %1981 = vmatpush1.bf16.msra.mxu0 %v1934
        %1982 = vmatprep.subr.bf16.mxu0 0
        %1983 = vmatpush1.bf16.msra.mxu0 %v1935
        %1984 = vmatprep.mubr.bf16.mxu0 %v1816
        %1985 = vmatmul.mubr.bf16.gmra.mrb[0].mxu0 %v1815
        %v1986 = vpop.f32.mrb[0].mxu0
        %v1987 = vadd.f32 %v1854, %v1986
        %v1988 = vpop.f32.mrb[0].mxu0
        %v1989 = vpop.f32.mrb[0].mxu0
        %v1990 = vpop.f32.mrb[0].mxu0
        %1991 = vdwg.mxu0
        %1992 = vmax.xlane.f32.xlu0 %v1987
        %v1993 = vpop.xlane.xlu0 %1992
        %v1994 = vsub.f32 %v1987, %v1993
        %v1995 = vmul.f32 %v1994, 1.442695
        %v1996 = vpow.pop %v1995
        %1997 = vadd.xlane.f32.xlu0 %v1996
        %v1998 = vpop.xlane.xlu0 %1997
        %v1999 = vlog2.pop %v1998
        %v2000 = vmul.f32 %v1999, 0.6931472
        %v2001 = vsub.f32 %v1994, %v2000
        %s2002 = scalar_lea.vmem %s309, 32 [#allocation11]
        %2003 = vst [vmem:[%s2002] sm:$0xff] %v2001
        %s2004 = sadd.s32 %s321, 4
        %p2005 = scmp.lt.s32.totalorder %s2004, 10
        %s2006 = scalar_select %p2005, 1, 0
        %v2007 = vstv %s2006
        %vm2008 = vcmp.eq.s32.totalorder %v2007, 1
        %v2009 = vsel %vm2008, %v1813, %v1671
        %s2010 = scalar_lea.vmem %s271, 80 [#allocation3]
        %v2011 = vld [vmem:[%s2010] sm:$0xff]
        %v2012 = vld [vmem:[%s2010 + $0x8] sm:$0xff]
        %v2013 = vpack.c.bf16 %v2009, %v2009
        %v2014 = vld [vmem:[#allocation8] sm:$0xff]
        %v2015 = vld [vmem:[#allocation8 + $0x8] sm:$0xff]
        %v2016 = vld [vmem:[#allocation8 + $0x10] sm:$0xff]
        %v2017 = vld [vmem:[#allocation8 + $0x18] sm:$0xff]
        %v2018 = vld [vmem:[#allocation8 + $0x20] sm:$0xff]
        %v2019 = vld [vmem:[#allocation8 + $0x28] sm:$0xff]
        %v2020 = vld [vmem:[#allocation8 + $0x30] sm:$0xff]
        %v2021 = vld [vmem:[#allocation8 + $0x38] sm:$0xff]
        %v2022 = vld [vmem:[#allocation8 + $0x40] sm:$0xff]
        %v2023 = vld [vmem:[#allocation8 + $0x48] sm:$0xff]
        %v2024 = vld [vmem:[#allocation8 + $0x50] sm:$0xff]
        %v2025 = vld [vmem:[#allocation8 + $0x58] sm:$0xff]
        %v2026 = vld [vmem:[#allocation8 + $0x60] sm:$0xff]
        %v2027 = vld [vmem:[#allocation8 + $0x68] sm:$0xff]
        %v2028 = vld [vmem:[#allocation8 + $0x70] sm:$0xff]
        %v2029 = vld [vmem:[#allocation8 + $0x78] sm:$0xff]
        %v2046 = vunpack.c.l.b16 %v2014
        %v2047 = vunpack.c.h.b16 %v2014
        %v2048 = vunpack.c.l.b16 %v2015
        %v2049 = vunpack.c.h.b16 %v2015
        %v2050 = vunpack.c.l.b16 %v2016
        %v2051 = vunpack.c.h.b16 %v2016
        %v2052 = vunpack.c.l.b16 %v2017
        %v2053 = vunpack.c.h.b16 %v2017
        %v2054 = vunpack.c.l.b16 %v2018
        %v2055 = vunpack.c.h.b16 %v2018
        %v2056 = vunpack.c.l.b16 %v2019
        %v2057 = vunpack.c.h.b16 %v2019
        %v2058 = vunpack.c.l.b16 %v2020
        %v2059 = vunpack.c.h.b16 %v2020
        %v2060 = vunpack.c.l.b16 %v2021
        %v2061 = vunpack.c.h.b16 %v2021
        %v2062 = vunpack.c.l.b16 %v2022
        %v2063 = vunpack.c.h.b16 %v2022
        %v2064 = vunpack.c.l.b16 %v2023
        %v2065 = vunpack.c.h.b16 %v2023
        %v2066 = vunpack.c.l.b16 %v2024
        %v2067 = vunpack.c.h.b16 %v2024
        %v2068 = vunpack.c.l.b16 %v2025
        %v2069 = vunpack.c.h.b16 %v2025
        %v2070 = vunpack.c.l.b16 %v2026
        %v2071 = vunpack.c.h.b16 %v2026
        %v2072 = vunpack.c.l.b16 %v2027
        %v2073 = vunpack.c.h.b16 %v2027
        %v2074 = vunpack.c.l.b16 %v2028
        %v2075 = vunpack.c.h.b16 %v2028
        %v2076 = vunpack.c.l.b16 %v2029
        %v2077 = vunpack.c.h.b16 %v2029
        %v2078 = vpack.c.b16 %v2048, %v2046
        %v2079 = vpack.c.b16 %v2049, %v2047
        %v2080 = vpack.c.b16 %v2052, %v2050
        %v2081 = vpack.c.b16 %v2053, %v2051
        %v2082 = vpack.c.b16 %v2056, %v2054
        %v2083 = vpack.c.b16 %v2057, %v2055
        %v2084 = vpack.c.b16 %v2060, %v2058
        %v2085 = vpack.c.b16 %v2061, %v2059
        %v2086 = vpack.c.b16 %v2064, %v2062
        %v2087 = vpack.c.b16 %v2065, %v2063
        %v2088 = vpack.c.b16 %v2068, %v2066
        %v2089 = vpack.c.b16 %v2069, %v2067
        %v2090 = vpack.c.b16 %v2072, %v2070
        %v2091 = vpack.c.b16 %v2073, %v2071
        %v2092 = vpack.c.b16 %v2076, %v2074
        %v2093 = vpack.c.b16 %v2077, %v2075
        %2110 = vmatprep.subr.bf16.mxu0 %v2079
        %2111 = vmatpush1.bf16.msra.mxu0 %v2078
        %2112 = vmatprep.subr.bf16.mxu0 %v2081
        %2113 = vmatpush1.bf16.msra.mxu0 %v2080
        %2114 = vmatprep.subr.bf16.mxu0 %v2083
        %2115 = vmatpush1.bf16.msra.mxu0 %v2082
        %2116 = vmatprep.subr.bf16.mxu0 %v2085
        %2117 = vmatpush1.bf16.msra.mxu0 %v2084
        %2118 = vmatprep.subr.bf16.mxu0 %v2087
        %2119 = vmatpush1.bf16.msra.mxu0 %v2086
        %2120 = vmatprep.subr.bf16.mxu0 %v2089
        %2121 = vmatpush1.bf16.msra.mxu0 %v2088
        %2122 = vmatprep.subr.bf16.mxu0 %v2091
        %2123 = vmatpush1.bf16.msra.mxu0 %v2090
        %2124 = vmatprep.subr.bf16.mxu0 %v2093
        %2125 = vmatpush1.bf16.msra.mxu0 %v2092
        %2126 = vmatprep.subr.bf16.mxu0 0
        %2127 = vmatpush1.bf16.msra.mxu0 0
        %2128 = vmatprep.subr.bf16.mxu0 0
        %2129 = vmatpush1.bf16.msra.mxu0 0
        %2130 = vmatprep.subr.bf16.mxu0 0
        %2131 = vmatpush1.bf16.msra.mxu0 0
        %2132 = vmatprep.subr.bf16.mxu0 0
        %2133 = vmatpush1.bf16.msra.mxu0 0
        %2134 = vmatprep.subr.bf16.mxu0 0
        %2135 = vmatpush1.bf16.msra.mxu0 0
        %2136 = vmatprep.subr.bf16.mxu0 0
        %2137 = vmatpush1.bf16.msra.mxu0 0
        %2138 = vmatprep.subr.bf16.mxu0 0
        %2139 = vmatpush1.bf16.msra.mxu0 0
        %2140 = vmatprep.subr.bf16.mxu0 0
        %2141 = vmatpush1.bf16.msra.mxu0 0
        %2142 = vmatprep.mubr.bf16.mxu0 0
        %2143 = vmatmul.mubr.bf16.gmra.mrb[0].mxu0 %v2013
        %v2144 = vpop.f32.mrb[0].mxu0
        %v2145 = vadd.f32 0.0, %v2144
        %v2146 = vpop.f32.mrb[0].mxu0
        %v2147 = vadd.f32 0.0, %v2146
        %v2148 = vpop.f32.mrb[0].mxu0
        %v2149 = vpop.f32.mrb[0].mxu0
        %2150 = vdwg.mxu0
        %v2151 = vadd.f32 %v2011, %v2145
        %v2152 = vadd.f32 %v2012, %v2147
        %v2153 = vpack.c.bf16 %v2151, %v2151
        %v2154 = vpack.c.bf16 %v2152, %v2152
        %v2155 = vld [vmem:[#allocation9] sm:$0xf]
        %v2156 = vld [vmem:[#allocation9 + $0x4] sm:$0xf]
        %v2157 = vld [vmem:[#allocation9 + $0x8] sm:$0xf]
        %v2158 = vld [vmem:[#allocation9 + $0xc] sm:$0xf]
        %v2159 = vld [vmem:[#allocation9 + $0x10] sm:$0xf]
        %v2160 = vld [vmem:[#allocation9 + $0x14] sm:$0xf]
        %v2161 = vld [vmem:[#allocation9 + $0x18] sm:$0xf]
        %v2162 = vld [vmem:[#allocation9 + $0x1c] sm:$0xf]
        %v2163 = vld [vmem:[#allocation9 + $0x20] sm:$0xf]
        %v2164 = vld [vmem:[#allocation9 + $0x24] sm:$0xf]
        %v2165 = vld [vmem:[#allocation9 + $0x28] sm:$0xf]
        %v2166 = vld [vmem:[#allocation9 + $0x2c] sm:$0xf]
        %v2167 = vld [vmem:[#allocation9 + $0x30] sm:$0xf]
        %v2168 = vld [vmem:[#allocation9 + $0x34] sm:$0xf]
        %v2169 = vld [vmem:[#allocation9 + $0x38] sm:$0xf]
        %v2170 = vld [vmem:[#allocation9 + $0x3c] sm:$0xf]
        %v2171 = vld [vmem:[#allocation9 + $0x40] sm:$0xf]
        %v2172 = vld [vmem:[#allocation9 + $0x44] sm:$0xf]
        %v2173 = vld [vmem:[#allocation9 + $0x48] sm:$0xf]
        %v2174 = vld [vmem:[#allocation9 + $0x4c] sm:$0xf]
        %v2175 = vld [vmem:[#allocation9 + $0x50] sm:$0xf]
        %v2176 = vld [vmem:[#allocation9 + $0x54] sm:$0xf]
        %v2177 = vld [vmem:[#allocation9 + $0x58] sm:$0xf]
        %v2178 = vld [vmem:[#allocation9 + $0x5c] sm:$0xf]
        %v2179 = vld [vmem:[#allocation9 + $0x60] sm:$0xf]
        %v2180 = vld [vmem:[#allocation9 + $0x64] sm:$0xf]
        %v2181 = vld [vmem:[#allocation9 + $0x68] sm:$0xf]
        %v2182 = vld [vmem:[#allocation9 + $0x6c] sm:$0xf]
        %v2183 = vld [vmem:[#allocation9 + $0x70] sm:$0xf]
        %v2184 = vld [vmem:[#allocation9 + $0x74] sm:$0xf]
        %v2185 = vld [vmem:[#allocation9 + $0x78] sm:$0xf]
        %v2186 = vld [vmem:[#allocation9 + $0x7c] sm:$0xf]
        %v2187 = vld [vmem:[%s4] sm:$0x1]
        %v2189 = vlaneseq
        %v2190 = vshrl.u32 %v2189, 7
        %v2191 = vsub.s32 0, %v2190
        %v2192 = vrot.slane %v2187, %v2191
        %v2226 = vunpack.c.l.b16 %v2155
        %v2227 = vunpack.c.l.b16 %v2156
        %v2228 = vunpack.c.l.b16 %v2157
        %v2229 = vunpack.c.l.b16 %v2158
        %v2230 = vunpack.c.l.b16 %v2159
        %v2231 = vunpack.c.l.b16 %v2160
        %v2232 = vunpack.c.l.b16 %v2161
        %v2233 = vunpack.c.l.b16 %v2162
        %v2234 = vunpack.c.l.b16 %v2163
        %v2235 = vunpack.c.l.b16 %v2164
        %v2236 = vunpack.c.l.b16 %v2165
        %v2237 = vunpack.c.l.b16 %v2166
        %v2238 = vunpack.c.l.b16 %v2167
        %v2239 = vunpack.c.l.b16 %v2168
        %v2240 = vunpack.c.l.b16 %v2169
        %v2241 = vunpack.c.l.b16 %v2170
        %v2242 = vunpack.c.l.b16 %v2171
        %v2243 = vunpack.c.l.b16 %v2172
        %v2244 = vunpack.c.l.b16 %v2173
        %v2245 = vunpack.c.l.b16 %v2174
        %v2246 = vunpack.c.l.b16 %v2175
        %v2247 = vunpack.c.l.b16 %v2176
        %v2248 = vunpack.c.l.b16 %v2177
        %v2249 = vunpack.c.l.b16 %v2178
        %v2250 = vunpack.c.l.b16 %v2179
        %v2251 = vunpack.c.l.b16 %v2180
        %v2252 = vunpack.c.l.b16 %v2181
        %v2253 = vunpack.c.l.b16 %v2182
        %v2254 = vunpack.c.l.b16 %v2183
        %v2255 = vunpack.c.l.b16 %v2184
        %v2256 = vunpack.c.l.b16 %v2185
        %v2257 = vunpack.c.l.b16 %v2186
        %v2258 = vpack.c.b16 %v2227, %v2226
        %v2259 = vpack.c.b16 %v2229, %v2228
        %v2260 = vpack.c.b16 %v2231, %v2230
        %v2261 = vpack.c.b16 %v2233, %v2232
        %v2262 = vpack.c.b16 %v2235, %v2234
        %v2263 = vpack.c.b16 %v2237, %v2236
        %v2264 = vpack.c.b16 %v2239, %v2238
        %v2265 = vpack.c.b16 %v2241, %v2240
        %v2266 = vpack.c.b16 %v2243, %v2242
        %v2267 = vpack.c.b16 %v2245, %v2244
        %v2268 = vpack.c.b16 %v2247, %v2246
        %v2269 = vpack.c.b16 %v2249, %v2248
        %v2270 = vpack.c.b16 %v2251, %v2250
        %v2271 = vpack.c.b16 %v2253, %v2252
        %v2272 = vpack.c.b16 %v2255, %v2254
        %v2273 = vpack.c.b16 %v2257, %v2256
        %2290 = vmatprep.subr.bf16.mxu0 0
        %2291 = vmatpush1.bf16.msra.mxu0 %v2258
        %2292 = vmatprep.subr.bf16.mxu0 0
        %2293 = vmatpush1.bf16.msra.mxu0 %v2259
        %2294 = vmatprep.subr.bf16.mxu0 0
        %2295 = vmatpush1.bf16.msra.mxu0 %v2260
        %2296 = vmatprep.subr.bf16.mxu0 0
        %2297 = vmatpush1.bf16.msra.mxu0 %v2261
        %2298 = vmatprep.subr.bf16.mxu0 0
        %2299 = vmatpush1.bf16.msra.mxu0 %v2262
        %2300 = vmatprep.subr.bf16.mxu0 0
        %2301 = vmatpush1.bf16.msra.mxu0 %v2263
        %2302 = vmatprep.subr.bf16.mxu0 0
        %2303 = vmatpush1.bf16.msra.mxu0 %v2264
        %2304 = vmatprep.subr.bf16.mxu0 0
        %2305 = vmatpush1.bf16.msra.mxu0 %v2265
        %2306 = vmatprep.subr.bf16.mxu0 0
        %2307 = vmatpush1.bf16.msra.mxu0 %v2266
        %2308 = vmatprep.subr.bf16.mxu0 0
        %2309 = vmatpush1.bf16.msra.mxu0 %v2267
        %2310 = vmatprep.subr.bf16.mxu0 0
        %2311 = vmatpush1.bf16.msra.mxu0 %v2268
        %2312 = vmatprep.subr.bf16.mxu0 0
        %2313 = vmatpush1.bf16.msra.mxu0 %v2269
        %2314 = vmatprep.subr.bf16.mxu0 0
        %2315 = vmatpush1.bf16.msra.mxu0 %v2270
        %2316 = vmatprep.subr.bf16.mxu0 0
        %2317 = vmatpush1.bf16.msra.mxu0 %v2271
        %2318 = vmatprep.subr.bf16.mxu0 0
        %2319 = vmatpush1.bf16.msra.mxu0 %v2272
        %2320 = vmatprep.subr.bf16.mxu0 0
        %2321 = vmatpush1.bf16.msra.mxu0 %v2273
        %2322 = vmatprep.mubr.bf16.mxu0 %v2154
        %2323 = vmatmul.mubr.bf16.gmra.mrb[0].mxu0 %v2153
        %v2324 = vpop.f32.mrb[0].mxu0
        %v2325 = vadd.f32 %v2192, %v2324
        %v2326 = vpop.f32.mrb[0].mxu0
        %v2327 = vpop.f32.mrb[0].mxu0
        %v2328 = vpop.f32.mrb[0].mxu0
        %2329 = vdwg.mxu0
        %2330 = vmax.xlane.f32.xlu0 %v2325
        %v2331 = vpop.xlane.xlu0 %2330
        %v2332 = vsub.f32 %v2325, %v2331
        %v2333 = vmul.f32 %v2332, 1.442695
        %v2334 = vpow.pop %v2333
        %2335 = vadd.xlane.f32.xlu0 %v2334
        %v2336 = vpop.xlane.xlu0 %2335
        %v2337 = vlog2.pop %v2336
        %v2338 = vmul.f32 %v2337, 0.6931472
        %v2339 = vsub.f32 %v2332, %v2338
        %s2340 = scalar_lea.vmem %s309, 40 [#allocation11]
        %2341 = vst [vmem:[%s2340] sm:$0xff] %v2339
        %s2342 = sadd.s32 %s321, 5
        %p2343 = scmp.lt.s32.totalorder %s2342, 10
        %s2344 = scalar_select %p2343, 1, 0
        %v2345 = vstv %s2344
        %vm2346 = vcmp.eq.s32.totalorder %v2345, 1
        %v2347 = vsel %vm2346, %v2151, %v2009
        %s2348 = scalar_lea.vmem %s271, 96 [#allocation3]
        %v2349 = vld [vmem:[%s2348] sm:$0xff]
        %v2350 = vld [vmem:[%s2348 + $0x8] sm:$0xff]
        %v2351 = vpack.c.bf16 %v2347, %v2347
        %v2352 = vld [vmem:[#allocation8] sm:$0xff]
        %v2353 = vld [vmem:[#allocation8 + $0x8] sm:$0xff]
        %v2354 = vld [vmem:[#allocation8 + $0x10] sm:$0xff]
        %v2355 = vld [vmem:[#allocation8 + $0x18] sm:$0xff]
        %v2356 = vld [vmem:[#allocation8 + $0x20] sm:$0xff]
        %v2357 = vld [vmem:[#allocation8 + $0x28] sm:$0xff]
        %v2358 = vld [vmem:[#allocation8 + $0x30] sm:$0xff]
        %v2359 = vld [vmem:[#allocation8 + $0x38] sm:$0xff]
        %v2360 = vld [vmem:[#allocation8 + $0x40] sm:$0xff]
        %v2361 = vld [vmem:[#allocation8 + $0x48] sm:$0xff]
        %v2362 = vld [vmem:[#allocation8 + $0x50] sm:$0xff]
        %v2363 = vld [vmem:[#allocation8 + $0x58] sm:$0xff]
        %v2364 = vld [vmem:[#allocation8 + $0x60] sm:$0xff]
        %v2365 = vld [vmem:[#allocation8 + $0x68] sm:$0xff]
        %v2366 = vld [vmem:[#allocation8 + $0x70] sm:$0xff]
        %v2367 = vld [vmem:[#allocation8 + $0x78] sm:$0xff]
        %v2384 = vunpack.c.l.b16 %v2352
        %v2385 = vunpack.c.h.b16 %v2352
        %v2386 = vunpack.c.l.b16 %v2353
        %v2387 = vunpack.c.h.b16 %v2353
        %v2388 = vunpack.c.l.b16 %v2354
        %v2389 = vunpack.c.h.b16 %v2354
        %v2390 = vunpack.c.l.b16 %v2355
        %v2391 = vunpack.c.h.b16 %v2355
        %v2392 = vunpack.c.l.b16 %v2356
        %v2393 = vunpack.c.h.b16 %v2356
        %v2394 = vunpack.c.l.b16 %v2357
        %v2395 = vunpack.c.h.b16 %v2357
        %v2396 = vunpack.c.l.b16 %v2358
        %v2397 = vunpack.c.h.b16 %v2358
        %v2398 = vunpack.c.l.b16 %v2359
        %v2399 = vunpack.c.h.b16 %v2359
        %v2400 = vunpack.c.l.b16 %v2360
        %v2401 = vunpack.c.h.b16 %v2360
        %v2402 = vunpack.c.l.b16 %v2361
        %v2403 = vunpack.c.h.b16 %v2361
        %v2404 = vunpack.c.l.b16 %v2362
        %v2405 = vunpack.c.h.b16 %v2362
        %v2406 = vunpack.c.l.b16 %v2363
        %v2407 = vunpack.c.h.b16 %v2363
        %v2408 = vunpack.c.l.b16 %v2364
        %v2409 = vunpack.c.h.b16 %v2364
        %v2410 = vunpack.c.l.b16 %v2365
        %v2411 = vunpack.c.h.b16 %v2365
        %v2412 = vunpack.c.l.b16 %v2366
        %v2413 = vunpack.c.h.b16 %v2366
        %v2414 = vunpack.c.l.b16 %v2367
        %v2415 = vunpack.c.h.b16 %v2367
        %v2416 = vpack.c.b16 %v2386, %v2384
        %v2417 = vpack.c.b16 %v2387, %v2385
        %v2418 = vpack.c.b16 %v2390, %v2388
        %v2419 = vpack.c.b16 %v2391, %v2389
        %v2420 = vpack.c.b16 %v2394, %v2392
        %v2421 = vpack.c.b16 %v2395, %v2393
        %v2422 = vpack.c.b16 %v2398, %v2396
        %v2423 = vpack.c.b16 %v2399, %v2397
        %v2424 = vpack.c.b16 %v2402, %v2400
        %v2425 = vpack.c.b16 %v2403, %v2401
        %v2426 = vpack.c.b16 %v2406, %v2404
        %v2427 = vpack.c.b16 %v2407, %v2405
        %v2428 = vpack.c.b16 %v2410, %v2408
        %v2429 = vpack.c.b16 %v2411, %v2409
        %v2430 = vpack.c.b16 %v2414, %v2412
        %v2431 = vpack.c.b16 %v2415, %v2413
        %2448 = vmatprep.subr.bf16.mxu0 %v2417
        %2449 = vmatpush1.bf16.msra.mxu0 %v2416
        %2450 = vmatprep.subr.bf16.mxu0 %v2419
        %2451 = vmatpush1.bf16.msra.mxu0 %v2418
        %2452 = vmatprep.subr.bf16.mxu0 %v2421
        %2453 = vmatpush1.bf16.msra.mxu0 %v2420
        %2454 = vmatprep.subr.bf16.mxu0 %v2423
        %2455 = vmatpush1.bf16.msra.mxu0 %v2422
        %2456 = vmatprep.subr.bf16.mxu0 %v2425
        %2457 = vmatpush1.bf16.msra.mxu0 %v2424
        %2458 = vmatprep.subr.bf16.mxu0 %v2427
        %2459 = vmatpush1.bf16.msra.mxu0 %v2426
        %2460 = vmatprep.subr.bf16.mxu0 %v2429
        %2461 = vmatpush1.bf16.msra.mxu0 %v2428
        %2462 = vmatprep.subr.bf16.mxu0 %v2431
        %2463 = vmatpush1.bf16.msra.mxu0 %v2430
        %2464 = vmatprep.subr.bf16.mxu0 0
        %2465 = vmatpush1.bf16.msra.mxu0 0
        %2466 = vmatprep.subr.bf16.mxu0 0
        %2467 = vmatpush1.bf16.msra.mxu0 0
        %2468 = vmatprep.subr.bf16.mxu0 0
        %2469 = vmatpush1.bf16.msra.mxu0 0
        %2470 = vmatprep.subr.bf16.mxu0 0
        %2471 = vmatpush1.bf16.msra.mxu0 0
        %2472 = vmatprep.subr.bf16.mxu0 0
        %2473 = vmatpush1.bf16.msra.mxu0 0
        %2474 = vmatprep.subr.bf16.mxu0 0
        %2475 = vmatpush1.bf16.msra.mxu0 0
        %2476 = vmatprep.subr.bf16.mxu0 0
        %2477 = vmatpush1.bf16.msra.mxu0 0
        %2478 = vmatprep.subr.bf16.mxu0 0
        %2479 = vmatpush1.bf16.msra.mxu0 0
        %2480 = vmatprep.mubr.bf16.mxu0 0
        %2481 = vmatmul.mubr.bf16.gmra.mrb[0].mxu0 %v2351
        %v2482 = vpop.f32.mrb[0].mxu0
        %v2483 = vadd.f32 0.0, %v2482
        %v2484 = vpop.f32.mrb[0].mxu0
        %v2485 = vadd.f32 0.0, %v2484
        %v2486 = vpop.f32.mrb[0].mxu0
        %v2487 = vpop.f32.mrb[0].mxu0
        %2488 = vdwg.mxu0
        %v2489 = vadd.f32 %v2349, %v2483
        %v2490 = vadd.f32 %v2350, %v2485
        %v2491 = vpack.c.bf16 %v2489, %v2489
        %v2492 = vpack.c.bf16 %v2490, %v2490
        %v2493 = vld [vmem:[#allocation9] sm:$0xf]
        %v2494 = vld [vmem:[#allocation9 + $0x4] sm:$0xf]
        %v2495 = vld [vmem:[#allocation9 + $0x8] sm:$0xf]
        %v2496 = vld [vmem:[#allocation9 + $0xc] sm:$0xf]
        %v2497 = vld [vmem:[#allocation9 + $0x10] sm:$0xf]
        %v2498 = vld [vmem:[#allocation9 + $0x14] sm:$0xf]
        %v2499 = vld [vmem:[#allocation9 + $0x18] sm:$0xf]
        %v2500 = vld [vmem:[#allocation9 + $0x1c] sm:$0xf]
        %v2501 = vld [vmem:[#allocation9 + $0x20] sm:$0xf]
        %v2502 = vld [vmem:[#allocation9 + $0x24] sm:$0xf]
        %v2503 = vld [vmem:[#allocation9 + $0x28] sm:$0xf]
        %v2504 = vld [vmem:[#allocation9 + $0x2c] sm:$0xf]
        %v2505 = vld [vmem:[#allocation9 + $0x30] sm:$0xf]
        %v2506 = vld [vmem:[#allocation9 + $0x34] sm:$0xf]
        %v2507 = vld [vmem:[#allocation9 + $0x38] sm:$0xf]
        %v2508 = vld [vmem:[#allocation9 + $0x3c] sm:$0xf]
        %v2509 = vld [vmem:[#allocation9 + $0x40] sm:$0xf]
        %v2510 = vld [vmem:[#allocation9 + $0x44] sm:$0xf]
        %v2511 = vld [vmem:[#allocation9 + $0x48] sm:$0xf]
        %v2512 = vld [vmem:[#allocation9 + $0x4c] sm:$0xf]
        %v2513 = vld [vmem:[#allocation9 + $0x50] sm:$0xf]
        %v2514 = vld [vmem:[#allocation9 + $0x54] sm:$0xf]
        %v2515 = vld [vmem:[#allocation9 + $0x58] sm:$0xf]
        %v2516 = vld [vmem:[#allocation9 + $0x5c] sm:$0xf]
        %v2517 = vld [vmem:[#allocation9 + $0x60] sm:$0xf]
        %v2518 = vld [vmem:[#allocation9 + $0x64] sm:$0xf]
        %v2519 = vld [vmem:[#allocation9 + $0x68] sm:$0xf]
        %v2520 = vld [vmem:[#allocation9 + $0x6c] sm:$0xf]
        %v2521 = vld [vmem:[#allocation9 + $0x70] sm:$0xf]
        %v2522 = vld [vmem:[#allocation9 + $0x74] sm:$0xf]
        %v2523 = vld [vmem:[#allocation9 + $0x78] sm:$0xf]
        %v2524 = vld [vmem:[#allocation9 + $0x7c] sm:$0xf]
        %v2525 = vld [vmem:[%s4] sm:$0x1]
        %v2527 = vlaneseq
        %v2528 = vshrl.u32 %v2527, 7
        %v2529 = vsub.s32 0, %v2528
        %v2530 = vrot.slane %v2525, %v2529
        %v2564 = vunpack.c.l.b16 %v2493
        %v2565 = vunpack.c.l.b16 %v2494
        %v2566 = vunpack.c.l.b16 %v2495
        %v2567 = vunpack.c.l.b16 %v2496
        %v2568 = vunpack.c.l.b16 %v2497
        %v2569 = vunpack.c.l.b16 %v2498
        %v2570 = vunpack.c.l.b16 %v2499
        %v2571 = vunpack.c.l.b16 %v2500
        %v2572 = vunpack.c.l.b16 %v2501
        %v2573 = vunpack.c.l.b16 %v2502
        %v2574 = vunpack.c.l.b16 %v2503
        %v2575 = vunpack.c.l.b16 %v2504
        %v2576 = vunpack.c.l.b16 %v2505
        %v2577 = vunpack.c.l.b16 %v2506
        %v2578 = vunpack.c.l.b16 %v2507
        %v2579 = vunpack.c.l.b16 %v2508
        %v2580 = vunpack.c.l.b16 %v2509
        %v2581 = vunpack.c.l.b16 %v2510
        %v2582 = vunpack.c.l.b16 %v2511
        %v2583 = vunpack.c.l.b16 %v2512
        %v2584 = vunpack.c.l.b16 %v2513
        %v2585 = vunpack.c.l.b16 %v2514
        %v2586 = vunpack.c.l.b16 %v2515
        %v2587 = vunpack.c.l.b16 %v2516
        %v2588 = vunpack.c.l.b16 %v2517
        %v2589 = vunpack.c.l.b16 %v2518
        %v2590 = vunpack.c.l.b16 %v2519
        %v2591 = vunpack.c.l.b16 %v2520
        %v2592 = vunpack.c.l.b16 %v2521
        %v2593 = vunpack.c.l.b16 %v2522
        %v2594 = vunpack.c.l.b16 %v2523
        %v2595 = vunpack.c.l.b16 %v2524
        %v2596 = vpack.c.b16 %v2565, %v2564
        %v2597 = vpack.c.b16 %v2567, %v2566
        %v2598 = vpack.c.b16 %v2569, %v2568
        %v2599 = vpack.c.b16 %v2571, %v2570
        %v2600 = vpack.c.b16 %v2573, %v2572
        %v2601 = vpack.c.b16 %v2575, %v2574
        %v2602 = vpack.c.b16 %v2577, %v2576
        %v2603 = vpack.c.b16 %v2579, %v2578
        %v2604 = vpack.c.b16 %v2581, %v2580
        %v2605 = vpack.c.b16 %v2583, %v2582
        %v2606 = vpack.c.b16 %v2585, %v2584
        %v2607 = vpack.c.b16 %v2587, %v2586
        %v2608 = vpack.c.b16 %v2589, %v2588
        %v2609 = vpack.c.b16 %v2591, %v2590
        %v2610 = vpack.c.b16 %v2593, %v2592
        %v2611 = vpack.c.b16 %v2595, %v2594
        %2628 = vmatprep.subr.bf16.mxu0 0
        %2629 = vmatpush1.bf16.msra.mxu0 %v2596
        %2630 = vmatprep.subr.bf16.mxu0 0
        %2631 = vmatpush1.bf16.msra.mxu0 %v2597
        %2632 = vmatprep.subr.bf16.mxu0 0
        %2633 = vmatpush1.bf16.msra.mxu0 %v2598
        %2634 = vmatprep.subr.bf16.mxu0 0
        %2635 = vmatpush1.bf16.msra.mxu0 %v2599
        %2636 = vmatprep.subr.bf16.mxu0 0
        %2637 = vmatpush1.bf16.msra.mxu0 %v2600
        %2638 = vmatprep.subr.bf16.mxu0 0
        %2639 = vmatpush1.bf16.msra.mxu0 %v2601
        %2640 = vmatprep.subr.bf16.mxu0 0
        %2641 = vmatpush1.bf16.msra.mxu0 %v2602
        %2642 = vmatprep.subr.bf16.mxu0 0
        %2643 = vmatpush1.bf16.msra.mxu0 %v2603
        %2644 = vmatprep.subr.bf16.mxu0 0
        %2645 = vmatpush1.bf16.msra.mxu0 %v2604
        %2646 = vmatprep.subr.bf16.mxu0 0
        %2647 = vmatpush1.bf16.msra.mxu0 %v2605
        %2648 = vmatprep.subr.bf16.mxu0 0
        %2649 = vmatpush1.bf16.msra.mxu0 %v2606
        %2650 = vmatprep.subr.bf16.mxu0 0
        %2651 = vmatpush1.bf16.msra.mxu0 %v2607
        %2652 = vmatprep.subr.bf16.mxu0 0
        %2653 = vmatpush1.bf16.msra.mxu0 %v2608
        %2654 = vmatprep.subr.bf16.mxu0 0
        %2655 = vmatpush1.bf16.msra.mxu0 %v2609
        %2656 = vmatprep.subr.bf16.mxu0 0
        %2657 = vmatpush1.bf16.msra.mxu0 %v2610
        %2658 = vmatprep.subr.bf16.mxu0 0
        %2659 = vmatpush1.bf16.msra.mxu0 %v2611
        %2660 = vmatprep.mubr.bf16.mxu0 %v2492
        %2661 = vmatmul.mubr.bf16.gmra.mrb[0].mxu0 %v2491
        %v2662 = vpop.f32.mrb[0].mxu0
        %v2663 = vadd.f32 %v2530, %v2662
        %v2664 = vpop.f32.mrb[0].mxu0
        %v2665 = vpop.f32.mrb[0].mxu0
        %v2666 = vpop.f32.mrb[0].mxu0
        %2667 = vdwg.mxu0
        %2668 = vmax.xlane.f32.xlu0 %v2663
        %v2669 = vpop.xlane.xlu0 %2668
        %v2670 = vsub.f32 %v2663, %v2669
        %v2671 = vmul.f32 %v2670, 1.442695
        %v2672 = vpow.pop %v2671
        %2673 = vadd.xlane.f32.xlu0 %v2672
        %v2674 = vpop.xlane.xlu0 %2673
        %v2675 = vlog2.pop %v2674
        %v2676 = vmul.f32 %v2675, 0.6931472
        %v2677 = vsub.f32 %v2670, %v2676
        %s2678 = scalar_lea.vmem %s309, 48 [#allocation11]
        %2679 = vst [vmem:[%s2678] sm:$0xff] %v2677
        %s2680 = sadd.s32 %s321, 6
        %p2681 = scmp.lt.s32.totalorder %s2680, 10
        %s2682 = scalar_select %p2681, 1, 0
        %v2683 = vstv %s2682
        %vm2684 = vcmp.eq.s32.totalorder %v2683, 1
        %v2685 = vsel %vm2684, %v2489, %v2347
        %s2686 = scalar_lea.vmem %s271, 112 [#allocation3]
        %v2687 = vld [vmem:[%s2686] sm:$0xff]
        %v2688 = vld [vmem:[%s2686 + $0x8] sm:$0xff]
        %v2689 = vpack.c.bf16 %v2685, %v2685
        %v2690 = vld [vmem:[#allocation8] sm:$0xff]
        %v2691 = vld [vmem:[#allocation8 + $0x8] sm:$0xff]
        %v2692 = vld [vmem:[#allocation8 + $0x10] sm:$0xff]
        %v2693 = vld [vmem:[#allocation8 + $0x18] sm:$0xff]
        %v2694 = vld [vmem:[#allocation8 + $0x20] sm:$0xff]
        %v2695 = vld [vmem:[#allocation8 + $0x28] sm:$0xff]
        %v2696 = vld [vmem:[#allocation8 + $0x30] sm:$0xff]
        %v2697 = vld [vmem:[#allocation8 + $0x38] sm:$0xff]
        %v2698 = vld [vmem:[#allocation8 + $0x40] sm:$0xff]
        %v2699 = vld [vmem:[#allocation8 + $0x48] sm:$0xff]
        %v2700 = vld [vmem:[#allocation8 + $0x50] sm:$0xff]
        %v2701 = vld [vmem:[#allocation8 + $0x58] sm:$0xff]
        %v2702 = vld [vmem:[#allocation8 + $0x60] sm:$0xff]
        %v2703 = vld [vmem:[#allocation8 + $0x68] sm:$0xff]
        %v2704 = vld [vmem:[#allocation8 + $0x70] sm:$0xff]
        %v2705 = vld [vmem:[#allocation8 + $0x78] sm:$0xff]
        %v2722 = vunpack.c.l.b16 %v2690
        %v2723 = vunpack.c.h.b16 %v2690
        %v2724 = vunpack.c.l.b16 %v2691
        %v2725 = vunpack.c.h.b16 %v2691
        %v2726 = vunpack.c.l.b16 %v2692
        %v2727 = vunpack.c.h.b16 %v2692
        %v2728 = vunpack.c.l.b16 %v2693
        %v2729 = vunpack.c.h.b16 %v2693
        %v2730 = vunpack.c.l.b16 %v2694
        %v2731 = vunpack.c.h.b16 %v2694
        %v2732 = vunpack.c.l.b16 %v2695
        %v2733 = vunpack.c.h.b16 %v2695
        %v2734 = vunpack.c.l.b16 %v2696
        %v2735 = vunpack.c.h.b16 %v2696
        %v2736 = vunpack.c.l.b16 %v2697
        %v2737 = vunpack.c.h.b16 %v2697
        %v2738 = vunpack.c.l.b16 %v2698
        %v2739 = vunpack.c.h.b16 %v2698
        %v2740 = vunpack.c.l.b16 %v2699
        %v2741 = vunpack.c.h.b16 %v2699
        %v2742 = vunpack.c.l.b16 %v2700
        %v2743 = vunpack.c.h.b16 %v2700
        %v2744 = vunpack.c.l.b16 %v2701
        %v2745 = vunpack.c.h.b16 %v2701
        %v2746 = vunpack.c.l.b16 %v2702
        %v2747 = vunpack.c.h.b16 %v2702
        %v2748 = vunpack.c.l.b16 %v2703
        %v2749 = vunpack.c.h.b16 %v2703
        %v2750 = vunpack.c.l.b16 %v2704
        %v2751 = vunpack.c.h.b16 %v2704
        %v2752 = vunpack.c.l.b16 %v2705
        %v2753 = vunpack.c.h.b16 %v2705
        %v2754 = vpack.c.b16 %v2724, %v2722
        %v2755 = vpack.c.b16 %v2725, %v2723
        %v2756 = vpack.c.b16 %v2728, %v2726
        %v2757 = vpack.c.b16 %v2729, %v2727
        %v2758 = vpack.c.b16 %v2732, %v2730
        %v2759 = vpack.c.b16 %v2733, %v2731
        %v2760 = vpack.c.b16 %v2736, %v2734
        %v2761 = vpack.c.b16 %v2737, %v2735
        %v2762 = vpack.c.b16 %v2740, %v2738
        %v2763 = vpack.c.b16 %v2741, %v2739
        %v2764 = vpack.c.b16 %v2744, %v2742
        %v2765 = vpack.c.b16 %v2745, %v2743
        %v2766 = vpack.c.b16 %v2748, %v2746
        %v2767 = vpack.c.b16 %v2749, %v2747
        %v2768 = vpack.c.b16 %v2752, %v2750
        %v2769 = vpack.c.b16 %v2753, %v2751
        %2786 = vmatprep.subr.bf16.mxu0 %v2755
        %2787 = vmatpush1.bf16.msra.mxu0 %v2754
        %2788 = vmatprep.subr.bf16.mxu0 %v2757
        %2789 = vmatpush1.bf16.msra.mxu0 %v2756
        %2790 = vmatprep.subr.bf16.mxu0 %v2759
        %2791 = vmatpush1.bf16.msra.mxu0 %v2758
        %2792 = vmatprep.subr.bf16.mxu0 %v2761
        %2793 = vmatpush1.bf16.msra.mxu0 %v2760
        %2794 = vmatprep.subr.bf16.mxu0 %v2763
        %2795 = vmatpush1.bf16.msra.mxu0 %v2762
        %2796 = vmatprep.subr.bf16.mxu0 %v2765
        %2797 = vmatpush1.bf16.msra.mxu0 %v2764
        %2798 = vmatprep.subr.bf16.mxu0 %v2767
        %2799 = vmatpush1.bf16.msra.mxu0 %v2766
        %2800 = vmatprep.subr.bf16.mxu0 %v2769
        %2801 = vmatpush1.bf16.msra.mxu0 %v2768
        %2802 = vmatprep.subr.bf16.mxu0 0
        %2803 = vmatpush1.bf16.msra.mxu0 0
        %2804 = vmatprep.subr.bf16.mxu0 0
        %2805 = vmatpush1.bf16.msra.mxu0 0
        %2806 = vmatprep.subr.bf16.mxu0 0
        %2807 = vmatpush1.bf16.msra.mxu0 0
        %2808 = vmatprep.subr.bf16.mxu0 0
        %2809 = vmatpush1.bf16.msra.mxu0 0
        %2810 = vmatprep.subr.bf16.mxu0 0
        %2811 = vmatpush1.bf16.msra.mxu0 0
        %2812 = vmatprep.subr.bf16.mxu0 0
        %2813 = vmatpush1.bf16.msra.mxu0 0
        %2814 = vmatprep.subr.bf16.mxu0 0
        %2815 = vmatpush1.bf16.msra.mxu0 0
        %2816 = vmatprep.subr.bf16.mxu0 0
        %2817 = vmatpush1.bf16.msra.mxu0 0
        %2818 = vmatprep.mubr.bf16.mxu0 0
        %2819 = vmatmul.mubr.bf16.gmra.mrb[0].mxu0 %v2689
        %v2820 = vpop.f32.mrb[0].mxu0
        %v2821 = vadd.f32 0.0, %v2820
        %v2822 = vpop.f32.mrb[0].mxu0
        %v2823 = vadd.f32 0.0, %v2822
        %v2824 = vpop.f32.mrb[0].mxu0
        %v2825 = vpop.f32.mrb[0].mxu0
        %2826 = vdwg.mxu0
        %v2827 = vadd.f32 %v2687, %v2821
        %v2828 = vadd.f32 %v2688, %v2823
        %v2829 = vpack.c.bf16 %v2827, %v2827
        %v2830 = vpack.c.bf16 %v2828, %v2828
        %v2831 = vld [vmem:[#allocation9] sm:$0xf]
        %v2832 = vld [vmem:[#allocation9 + $0x4] sm:$0xf]
        %v2833 = vld [vmem:[#allocation9 + $0x8] sm:$0xf]
        %v2834 = vld [vmem:[#allocation9 + $0xc] sm:$0xf]
        %v2835 = vld [vmem:[#allocation9 + $0x10] sm:$0xf]
        %v2836 = vld [vmem:[#allocation9 + $0x14] sm:$0xf]
        %v2837 = vld [vmem:[#allocation9 + $0x18] sm:$0xf]
        %v2838 = vld [vmem:[#allocation9 + $0x1c] sm:$0xf]
        %v2839 = vld [vmem:[#allocation9 + $0x20] sm:$0xf]
        %v2840 = vld [vmem:[#allocation9 + $0x24] sm:$0xf]
        %v2841 = vld [vmem:[#allocation9 + $0x28] sm:$0xf]
        %v2842 = vld [vmem:[#allocation9 + $0x2c] sm:$0xf]
        %v2843 = vld [vmem:[#allocation9 + $0x30] sm:$0xf]
        %v2844 = vld [vmem:[#allocation9 + $0x34] sm:$0xf]
        %v2845 = vld [vmem:[#allocation9 + $0x38] sm:$0xf]
        %v2846 = vld [vmem:[#allocation9 + $0x3c] sm:$0xf]
        %v2847 = vld [vmem:[#allocation9 + $0x40] sm:$0xf]
        %v2848 = vld [vmem:[#allocation9 + $0x44] sm:$0xf]
        %v2849 = vld [vmem:[#allocation9 + $0x48] sm:$0xf]
        %v2850 = vld [vmem:[#allocation9 + $0x4c] sm:$0xf]
        %v2851 = vld [vmem:[#allocation9 + $0x50] sm:$0xf]
        %v2852 = vld [vmem:[#allocation9 + $0x54] sm:$0xf]
        %v2853 = vld [vmem:[#allocation9 + $0x58] sm:$0xf]
        %v2854 = vld [vmem:[#allocation9 + $0x5c] sm:$0xf]
        %v2855 = vld [vmem:[#allocation9 + $0x60] sm:$0xf]
        %v2856 = vld [vmem:[#allocation9 + $0x64] sm:$0xf]
        %v2857 = vld [vmem:[#allocation9 + $0x68] sm:$0xf]
        %v2858 = vld [vmem:[#allocation9 + $0x6c] sm:$0xf]
        %v2859 = vld [vmem:[#allocation9 + $0x70] sm:$0xf]
        %v2860 = vld [vmem:[#allocation9 + $0x74] sm:$0xf]
        %v2861 = vld [vmem:[#allocation9 + $0x78] sm:$0xf]
        %v2862 = vld [vmem:[#allocation9 + $0x7c] sm:$0xf]
        %v2863 = vld [vmem:[%s4] sm:$0x1]
        %v2865 = vlaneseq
        %v2866 = vshrl.u32 %v2865, 7
        %v2867 = vsub.s32 0, %v2866
        %v2868 = vrot.slane %v2863, %v2867
        %v2902 = vunpack.c.l.b16 %v2831
        %v2903 = vunpack.c.l.b16 %v2832
        %v2904 = vunpack.c.l.b16 %v2833
        %v2905 = vunpack.c.l.b16 %v2834
        %v2906 = vunpack.c.l.b16 %v2835
        %v2907 = vunpack.c.l.b16 %v2836
        %v2908 = vunpack.c.l.b16 %v2837
        %v2909 = vunpack.c.l.b16 %v2838
        %v2910 = vunpack.c.l.b16 %v2839
        %v2911 = vunpack.c.l.b16 %v2840
        %v2912 = vunpack.c.l.b16 %v2841
        %v2913 = vunpack.c.l.b16 %v2842
        %v2914 = vunpack.c.l.b16 %v2843
        %v2915 = vunpack.c.l.b16 %v2844
        %v2916 = vunpack.c.l.b16 %v2845
        %v2917 = vunpack.c.l.b16 %v2846
        %v2918 = vunpack.c.l.b16 %v2847
        %v2919 = vunpack.c.l.b16 %v2848
        %v2920 = vunpack.c.l.b16 %v2849
        %v2921 = vunpack.c.l.b16 %v2850
        %v2922 = vunpack.c.l.b16 %v2851
        %v2923 = vunpack.c.l.b16 %v2852
        %v2924 = vunpack.c.l.b16 %v2853
        %v2925 = vunpack.c.l.b16 %v2854
        %v2926 = vunpack.c.l.b16 %v2855
        %v2927 = vunpack.c.l.b16 %v2856
        %v2928 = vunpack.c.l.b16 %v2857
        %v2929 = vunpack.c.l.b16 %v2858
        %v2930 = vunpack.c.l.b16 %v2859
        %v2931 = vunpack.c.l.b16 %v2860
        %v2932 = vunpack.c.l.b16 %v2861
        %v2933 = vunpack.c.l.b16 %v2862
        %v2934 = vpack.c.b16 %v2903, %v2902
        %v2935 = vpack.c.b16 %v2905, %v2904
        %v2936 = vpack.c.b16 %v2907, %v2906
        %v2937 = vpack.c.b16 %v2909, %v2908
        %v2938 = vpack.c.b16 %v2911, %v2910
        %v2939 = vpack.c.b16 %v2913, %v2912
        %v2940 = vpack.c.b16 %v2915, %v2914
        %v2941 = vpack.c.b16 %v2917, %v2916
        %v2942 = vpack.c.b16 %v2919, %v2918
        %v2943 = vpack.c.b16 %v2921, %v2920
        %v2944 = vpack.c.b16 %v2923, %v2922
        %v2945 = vpack.c.b16 %v2925, %v2924
        %v2946 = vpack.c.b16 %v2927, %v2926
        %v2947 = vpack.c.b16 %v2929, %v2928
        %v2948 = vpack.c.b16 %v2931, %v2930
        %v2949 = vpack.c.b16 %v2933, %v2932
        %2966 = vmatprep.subr.bf16.mxu0 0
        %2967 = vmatpush1.bf16.msra.mxu0 %v2934
        %2968 = vmatprep.subr.bf16.mxu0 0
        %2969 = vmatpush1.bf16.msra.mxu0 %v2935
        %2970 = vmatprep.subr.bf16.mxu0 0
        %2971 = vmatpush1.bf16.msra.mxu0 %v2936
        %2972 = vmatprep.subr.bf16.mxu0 0
        %2973 = vmatpush1.bf16.msra.mxu0 %v2937
        %2974 = vmatprep.subr.bf16.mxu0 0
        %2975 = vmatpush1.bf16.msra.mxu0 %v2938
        %2976 = vmatprep.subr.bf16.mxu0 0
        %2977 = vmatpush1.bf16.msra.mxu0 %v2939
        %2978 = vmatprep.subr.bf16.mxu0 0
        %2979 = vmatpush1.bf16.msra.mxu0 %v2940
        %2980 = vmatprep.subr.bf16.mxu0 0
        %2981 = vmatpush1.bf16.msra.mxu0 %v2941
        %2982 = vmatprep.subr.bf16.mxu0 0
        %2983 = vmatpush1.bf16.msra.mxu0 %v2942
        %2984 = vmatprep.subr.bf16.mxu0 0
        %2985 = vmatpush1.bf16.msra.mxu0 %v2943
        %2986 = vmatprep.subr.bf16.mxu0 0
        %2987 = vmatpush1.bf16.msra.mxu0 %v2944
        %2988 = vmatprep.subr.bf16.mxu0 0
        %2989 = vmatpush1.bf16.msra.mxu0 %v2945
        %2990 = vmatprep.subr.bf16.mxu0 0
        %2991 = vmatpush1.bf16.msra.mxu0 %v2946
        %2992 = vmatprep.subr.bf16.mxu0 0
        %2993 = vmatpush1.bf16.msra.mxu0 %v2947
        %2994 = vmatprep.subr.bf16.mxu0 0
        %2995 = vmatpush1.bf16.msra.mxu0 %v2948
        %2996 = vmatprep.subr.bf16.mxu0 0
        %2997 = vmatpush1.bf16.msra.mxu0 %v2949
        %2998 = vmatprep.mubr.bf16.mxu0 %v2830
        %2999 = vmatmul.mubr.bf16.gmra.mrb[0].mxu0 %v2829
        %v3000 = vpop.f32.mrb[0].mxu0
        %v3001 = vadd.f32 %v2868, %v3000
        %v3002 = vpop.f32.mrb[0].mxu0
        %v3003 = vpop.f32.mrb[0].mxu0
        %v3004 = vpop.f32.mrb[0].mxu0
        %3005 = vdwg.mxu0
        %3006 = vmax.xlane.f32.xlu0 %v3001
        %v3007 = vpop.xlane.xlu0 %3006
        %v3008 = vsub.f32 %v3001, %v3007
        %v3009 = vmul.f32 %v3008, 1.442695
        %v3010 = vpow.pop %v3009
        %3011 = vadd.xlane.f32.xlu0 %v3010
        %v3012 = vpop.xlane.xlu0 %3011
        %v3013 = vlog2.pop %v3012
        %v3014 = vmul.f32 %v3013, 0.6931472
        %v3015 = vsub.f32 %v3008, %v3014
        %s3016 = scalar_lea.vmem %s309, 56 [#allocation11]
        %3017 = vst [vmem:[%s3016] sm:$0xff] %v3015
        %s3018 = sadd.s32 %s321, 7
        %p3019 = scmp.lt.s32.totalorder %s3018, 10
        %s3020 = scalar_select %p3019, 1, 0
        %v3021 = vstv %s3020
        %vm3022 = vcmp.eq.s32.totalorder %v3021, 1
        %v3023 = vsel %vm3022, %v2827, %v2685
        %3024 = vst [vmem:[#allocation2] sm:$0xff] %v3023
        %p3025 = scmp.eq.s32.totalorder %s27, 1
        // Predicated region
        $region61: #{tpu_custom_call.1} parent=39 // pred_check
          %p3026 = pneg %p3025
        $region62: #{tpu_custom_call.1} parent=39 // pred_check_branch
          %3028 = sbr.rel (%p3026) target = $region64
        $region63: #{tpu_custom_call.1} parent=39 // pred_region
          %3029 = vst [vmem:[#allocation12] sm:$0xff] %v3023
        $region64: #{tpu_custom_call.1} parent=39 // pred_fallthru
          _
        %s3030 = sand.u32 %s145, 1
        %s3031 = scalar_lea.sflag [#allocation5], %s3030
        %s3032 = sand.u32 %s145, 1
        %s3033 = smul.addr %s3032, 64
        %s3034 = scalar_lea.vmem [#allocation11], %s3033
        // Predicated region
        $region65: #{tpu_custom_call.1} parent=39 // pred_check
          %p3035 = pneg %p155
        $region66: #{tpu_custom_call.1} parent=39 // pred_check_branch
          %3037 = sbr.rel (%p3035) target = $region68
        $region67: #{tpu_custom_call.1} parent=39 // pred_region
          %s3038 = smul.u32 8, %s27
          %s3040 = ssub.s32 1024, 1024
          %3041 = vsyncadd %s3031, %s3040
          %s3042 = smul.addr %s3038, 128
          %s3043 = scalar_lea.hbm %s5, %s3042
          %s3044 = sshll.u32 %s3034, 4
          %s3045 = int_to_ptr.vmem [resolvable:$true] %s3044
          %3050 = dma.vmem_to_hbm [thread:$0]  %s3045, 1024, %s3043, %s3031, 128, 128, 8
        $region68: #{tpu_custom_call.1} parent=39 // pred_fallthru
          _
        // Predicated region
        $region69: #{tpu_custom_call.1} parent=39 // pred_check
          %p3051 = pneg %p176
        $region70: #{tpu_custom_call.1} parent=39 // pred_check_branch
          %3053 = sbr.rel (%p3051) target = $region72
        $region71: #{tpu_custom_call.1} parent=39 // pred_region
          %s3055 = ssub.s32 128, 128
          %3056 = vsyncadd [#allocation13], %s3055
          %s3058 = sshll.u32 [#allocation12], 4
          %s3059 = int_to_ptr.vmem [resolvable:$true] %s3058
          %3061 = dma.vmem_to_hbm [thread:$0]  %s3059, 128, %s6, [#allocation13]
        $region72: #{tpu_custom_call.1} parent=39 // pred_fallthru
          _
        // Predicated region
        $region73: #{tpu_custom_call.1} parent=39 // pred_check
          %p3062 = pneg %p176
        $region74: #{tpu_custom_call.1} parent=39 // pred_check_branch
          %3064 = sbr.rel (%p3062) target = $region76
        $region75: #{tpu_custom_call.1} parent=39 // pred_region
          %3065 = dma.done [#allocation13], 128
        $region76: #{tpu_custom_call.1} parent=39 // pred_fallthru
          _
      $region40: #{tpu_custom_call.1} parent=5 // pred_fallthru
        _
      %p3066 = scmp.le.s32.totalorder 2, %s22
      // Predicated region
      $region77: #{tpu_custom_call.1} parent=5 // pred_check
        %p3067 = pneg %p3066
      $region78: #{tpu_custom_call.1} parent=5 // pred_check_branch
        %3069 = sbr.rel (%p3067) target = $region80
      $region79: #{tpu_custom_call.1} parent=5 // pred_region
        %s3070 = ssub.s32 %s22, 2
        // Predicated region
        $region81: #{tpu_custom_call.1} parent=79 // pred_check
          %p3071 = pneg %p161
        $region82: #{tpu_custom_call.1} parent=79 // pred_check_branch
          %3073 = sbr.rel (%p3071) target = $region84
        $region83: #{tpu_custom_call.1} parent=79 // pred_region
          %s3074 = sand.u32 %s146, 1
          %s3075 = scalar_lea.sflag [#allocation5], %s3074
          %s3076 = sand.u32 %s146, 1
          %s3077 = smul.addr %s3076, 64
          %s3078 = scalar_lea.vmem [#allocation11], %s3077
          %3079 = dma.done %s3075, 1024
        $region84: #{tpu_custom_call.1} parent=79 // pred_fallthru
          _
      $region80: #{tpu_custom_call.1} parent=5 // pred_fallthru
        _
    $region6: #{tpu_custom_call.1} parent=1 // loop_footer
      %s26 = sadd.s32 1, %s22
    $region7: #{tpu_custom_call.1} parent=1 // loop_footer_branch
      %21 = sbr.rel target = $region3
    $region8: #{tpu_custom_call.1} parent=1 // loop_exit
      _
    %3080 = vsyncpa [#allocation4], 1
    %s3081 = scalar_lea.sflag [#allocation4], 1
    %3082 = vsyncpa %s3081, 1
    %3083 = vsyncpa [#allocation7], 1
    %3084 = vsyncpa [#allocation10], 1
    %3085 = vsyncpa [#allocation5], 1
    %s3086 = scalar_lea.sflag [#allocation5], 1
    %3087 = vsyncpa %s3086, 1
    %3088 = vsyncpa [#allocation13], 1

</llo_original>
